<compile_context>
chip_gen: v5e
topology: v5e:2x2
jax: 0.10.0
libtpu: 0.0.40
codegen_flags: <defaults>
</compile_context>

<pallas_src>
import functools

import jax
import jax.numpy as jnp
from jax.experimental import pallas as pl
from jax.experimental.pallas import tpu as pltpu


# ------------------------------ small helpers ------------------------------

def _round_up(x, m):
    return ((x + m - 1) // m) * m


def _pad_axis(x, axis, size):
    pad = size - x.shape[axis]
    if pad == 0:
        return x
    widths = [(0, 0)] * x.ndim
    widths[axis] = (0, pad)
    return jnp.pad(x, widths)


def _quick_gelu_f32(y):
    # HF CLIP "quick_gelu": x * sigmoid(1.702 * x), computed in f32.
    return y * jax.nn.sigmoid(1.702 * y)


def _default_vmem_limit():
    # ~48 MiB on v7x (64 MiB / TC), ~100 MiB on v5e / v6e (128 MiB).
    try:
        cap = int(pltpu.get_tpu_info().vmem_capacity_bytes)
        return min(cap * 3 // 4, 100 * 1024 * 1024)
    except Exception:
        return 48 * 1024 * 1024


_VMEM_LIMIT = _default_vmem_limit()
_WEIGHT_BLOCK_BUDGET = 12 * 1024 * 1024   # bf16 bytes for one (K, tn) weight block


def _pick_row_tile(m, max_tile=512):
    """Largest divisor of m that is a multiple of 8 and <= max_tile."""
    if m % 8 != 0:
        return m                         # single full block (small arrays only)
    best = 8
    for cand in range(8, min(m, max_tile) + 1, 8):
        if m % cand == 0:
            best = cand
    return best


def _pick_attn_tile(np_seq, max_tile=128):
    if np_seq % 8 != 0:
        return np_seq
    best = 8
    for cand in range(8, min(np_seq, max_tile) + 1, 8):
        if np_seq % cand == 0:
            best = cand
    return best


def _pick_col_tile(n, k, budget=_WEIGHT_BLOCK_BUDGET):
    """Full-N when the bf16 weight block fits the budget, else a 128-multiple
    divisor of N."""
    if n % 128 != 0 or k * n * 2 <= budget:
        return n
    for t in (4096, 2048, 1024, 512, 256, 128):
        if n % t == 0 and k * t * 2 <= budget:
            return t
    return 128


# ----------------- tiled linear (bias / quick-gelu / residual) --------------
# Full-K single pass (every K in this model fits one tile); bias, quick-gelu
# and residual are fused into the store.

def _linear_kernel(x_ref, w_ref, b_ref, o_ref, *, activation):
    y = jnp.dot(x_ref[...], w_ref[...], preferred_element_type=jnp.float32)
    y = y + b_ref[...]
    if activation == "quick_gelu":
        y = _quick_gelu_f32(y)
    o_ref[...] = y.astype(o_ref.dtype)


def _linear_res_kernel(x_ref, w_ref, b_ref, r_ref, o_ref, *, activation):
    y = jnp.dot(x_ref[...], w_ref[...], preferred_element_type=jnp.float32)
    y = y + b_ref[...]
    if activation == "quick_gelu":
        y = _quick_gelu_f32(y)
    y = y + r_ref[...].astype(jnp.float32)
    o_ref[...] = y.astype(o_ref.dtype)


def pallas_linear(x, w, b, *, residual=None, activation=None,
                  row_tile=None, out_dtype=jnp.bfloat16):
    """y = act(x @ w + b) [+ residual].  x bf16 (M,K), w bf16 (K,N), b f32 (1,N)."""
    M, K = x.shape
    N = w.shape[1]
    rt = row_tile if row_tile is not None else _pick_row_tile(M)
    tn = _pick_col_tile(N, K)
    assert M % rt == 0 and N % tn == 0
    ni, nj = M // rt, N // tn

    # HBM traffic heuristic: weight-resident (j outer) re-reads x nj times,
    # activation-resident (i outer) re-reads w ni times.  Pick the cheaper.
    w_bytes = K * N * 2
    x_bytes = M * K * x.dtype.itemsize
    weight_outer = (w_bytes + x_bytes * nj) <= (x_bytes + w_bytes * ni)

    if weight_outer:
        grid = (nj, ni)
        x_spec = pl.BlockSpec((rt, K), lambda j, i: (i, 0))
        w_spec = pl.BlockSpec((K, tn), lambda j, i: (0, j))
        b_spec = pl.BlockSpec((1, tn), lambda j, i: (0, j))
        o_spec = pl.BlockSpec((rt, tn), lambda j, i: (i, j))
    else:
        grid = (ni, nj)
        x_spec = pl.BlockSpec((rt, K), lambda i, j: (i, 0))
        w_spec = pl.BlockSpec((K, tn), lambda i, j: (0, j))
        b_spec = pl.BlockSpec((1, tn), lambda i, j: (0, j))
        o_spec = pl.BlockSpec((rt, tn), lambda i, j: (i, j))

    if residual is None:
        kernel = functools.partial(_linear_kernel, activation=activation)
        in_specs = [x_spec, w_spec, b_spec]
        args = (x, w, b)
    else:
        kernel = functools.partial(_linear_res_kernel, activation=activation)
        in_specs = [x_spec, w_spec, b_spec, o_spec]
        args = (x, w, b, residual)

    return pl.pallas_call(
        kernel,
        out_shape=jax.ShapeDtypeStruct((M, N), out_dtype),
        grid=grid,
        in_specs=in_specs,
        out_specs=o_spec,
        compiler_params=pltpu.CompilerParams(
            dimension_semantics=("parallel", "parallel"),
            vmem_limit_bytes=_VMEM_LIMIT),
    )(*args)


# ------------- fused LayerNorm + linear (+ quick-gelu), xn cached -----------

def _ln_linear_kernel(x_ref, g_ref, bln_ref, w_ref, b_ref, o_ref, xn_ref, *,
                      eps, activation):
    # Compute LN once per row block (j == 0), cache normalized rows in VMEM.
    @pl.when(pl.program_id(1) == 0)
    def _():
        x = x_ref[...].astype(jnp.float32)
        mu = jnp.mean(x, axis=-1, keepdims=True)
        var = jnp.mean(jnp.square(x - mu), axis=-1, keepdims=True)
        xn = (x - mu) * jax.lax.rsqrt(var + eps) * g_ref[...] + bln_ref[...]
        xn_ref[...] = xn.astype(xn_ref.dtype)

    y = jnp.dot(xn_ref[...], w_ref[...], preferred_element_type=jnp.float32)
    y = y + b_ref[...]
    if activation == "quick_gelu":
        y = _quick_gelu_f32(y)
    o_ref[...] = y.astype(o_ref.dtype)


def pallas_ln_linear(x, gamma, beta, w, b, *, activation=None, eps=1e-5,
                     row_tile=None, out_dtype=jnp.bfloat16):
    """y = act(LayerNorm(x) @ w + b); full K so LN stats are exact."""
    M, K = x.shape
    N = w.shape[1]
    rt = row_tile if row_tile is not None else _pick_row_tile(M)
    tn = _pick_col_tile(N, K)
    assert M % rt == 0 and N % tn == 0

    return pl.pallas_call(
        functools.partial(_ln_linear_kernel, eps=eps, activation=activation),
        out_shape=jax.ShapeDtypeStruct((M, N), out_dtype),
        grid=(M // rt, N // tn),
        in_specs=[
            pl.BlockSpec((rt, K), lambda i, j: (i, 0)),
            pl.BlockSpec((1, K), lambda i, j: (0, 0)),
            pl.BlockSpec((1, K), lambda i, j: (0, 0)),
            pl.BlockSpec((K, tn), lambda i, j: (0, j)),
            pl.BlockSpec((1, tn), lambda i, j: (0, j)),
        ],
        out_specs=pl.BlockSpec((rt, tn), lambda i, j: (i, j)),
        scratch_shapes=[pltpu.VMEM((rt, K), jnp.bfloat16)],
        compiler_params=pltpu.CompilerParams(
            dimension_semantics=("parallel", "arbitrary"),
            vmem_limit_bytes=_VMEM_LIMIT),
    )(x, gamma, beta, w, b)


# -------------- fused LayerNorm + QKV projection (3 outputs) ----------------

def _ln_qkv_kernel(x_ref, g_ref, bln_ref, w_ref, b_ref, q_ref, k_ref, v_ref, *,
                   eps):
    x = x_ref[...].astype(jnp.float32)
    mu = jnp.mean(x, axis=-1, keepdims=True)
    var = jnp.mean(jnp.square(x - mu), axis=-1, keepdims=True)
    xn = ((x - mu) * jax.lax.rsqrt(var + eps) * g_ref[...]
          + bln_ref[...]).astype(jnp.bfloat16)
    y = jnp.dot(xn, w_ref[...], preferred_element_type=jnp.float32) + b_ref[...]
    D = q_ref.shape[-1]
    q_ref[...] = y[:, :D].astype(q_ref.dtype)
    k_ref[...] = y[:, D:2 * D].astype(k_ref.dtype)
    v_ref[...] = y[:, 2 * D:3 * D].astype(v_ref.dtype)


def pallas_ln_qkv(x, gamma, beta, wqkv, bqkv, *, eps=1e-5, row_tile=None,
                  out_dtype=jnp.bfloat16):
    """(q, k, v) = split(LayerNorm(x) @ Wqkv + bqkv); full (D,3D) weight stays
    resident across the whole M sweep, no HBM slicing of a packed qkv buffer."""
    M, K = x.shape
    N3 = wqkv.shape[1]
    D = N3 // 3
    rt = row_tile if row_tile is not None else _pick_row_tile(M)
    assert M % rt == 0 and 3 * D == N3

    sds = jax.ShapeDtypeStruct((M, D), out_dtype)
    out_spec = pl.BlockSpec((rt, D), lambda i: (i, 0))
    q, k, v = pl.pallas_call(
        functools.partial(_ln_qkv_kernel, eps=eps),
        out_shape=(sds, sds, sds),
        grid=(M // rt,),
        in_specs=[
            pl.BlockSpec((rt, K), lambda i: (i, 0)),
            pl.BlockSpec((1, K), lambda i: (0, 0)),
            pl.BlockSpec((1, K), lambda i: (0, 0)),
            pl.BlockSpec((K, N3), lambda i: (0, 0)),
            pl.BlockSpec((1, N3), lambda i: (0, 0)),
        ],
        out_specs=(out_spec, out_spec, out_spec),
        compiler_params=pltpu.CompilerParams(
            dimension_semantics=("parallel",),
            vmem_limit_bytes=_VMEM_LIMIT),
    )(x, gamma, beta, wqkv, bqkv)
    return q, k, v


# -------------------------- standalone LayerNorm ----------------------------

def _layernorm_kernel(x_ref, g_ref, b_ref, o_ref, *, eps):
    x = x_ref[...].astype(jnp.float32)
    mu = jnp.mean(x, axis=-1, keepdims=True)
    var = jnp.mean(jnp.square(x - mu), axis=-1, keepdims=True)
    y = (x - mu) * jax.lax.rsqrt(var + eps) * g_ref[...] + b_ref[...]
    o_ref[...] = y.astype(o_ref.dtype)


def pallas_layernorm(x, gamma, beta, *, eps=1e-5, row_tile=None, out_dtype=None):
    M, D = x.shape
    out_dtype = out_dtype if out_dtype is not None else x.dtype
    rt = row_tile if row_tile is not None else _pick_row_tile(M)
    assert M % rt == 0
    g2 = gamma.astype(jnp.float32).reshape(1, D)
    b2 = beta.astype(jnp.float32).reshape(1, D)
    return pl.pallas_call(
        functools.partial(_layernorm_kernel, eps=eps),
        out_shape=jax.ShapeDtypeStruct((M, D), out_dtype),
        grid=(M // rt,),
        in_specs=[pl.BlockSpec((rt, D), lambda i: (i, 0)),
                  pl.BlockSpec((1, D), lambda i: (0, 0)),
                  pl.BlockSpec((1, D), lambda i: (0, 0))],
        out_specs=pl.BlockSpec((rt, D), lambda i: (i, 0)),
        compiler_params=pltpu.CompilerParams(
            dimension_semantics=("parallel",),
            vmem_limit_bytes=_VMEM_LIMIT),
    )(x, g2, b2)


# ------------------------------- attention ----------------------------------

def _attention_kernel(q_ref, k_ref, v_ref, o_ref, *, scale, seq_len):
    q = q_ref[0]                      # (tq, H, d)  bf16
    k = k_ref[0]                      # (Np, H, d)  bf16
    v = v_ref[0]
    nk = k.shape[0]

    # scores (H, tq, nk): contract over d, batch over heads -- no k.T.
    s = jnp.einsum("qhd,khd->hqk", q, k,
                   preferred_element_type=jnp.float32) * scale
    if seq_len < nk:                  # mask zero-padded kv positions
        kv_idx = jax.lax.broadcasted_iota(jnp.int32, s.shape, 2)
        s = jnp.where(kv_idx < seq_len, s, -1e30)

    s = s - jnp.max(s, axis=-1, keepdims=True)
    p = jnp.exp(s)
    denom = jnp.sum(p, axis=-1, keepdims=True)
    p = (p * pl.reciprocal(denom, approx=True)).astype(v.dtype)

    o = jnp.einsum("hqk,khd->qhd", p, v,
                   preferred_element_type=jnp.float32)    # (tq, H, d)
    tq = o.shape[0]
    # lane-dense store: (tq, H*d) feeds the out-projection directly.
    o_ref[0] = o.reshape(tq, -1).astype(o_ref.dtype)


def pallas_attention(q, k, v, scale, *, seq_len, tq=None):
    """Softmax attention; q/k/v in (B, Np, H, d), output lane-dense (B, Np, D)."""
    B, Np, H, d = q.shape
    D = H * d
    tq = tq if tq is not None else _pick_attn_tile(Np)
    assert Np % tq == 0
    # TODO(synk): for very long sequences on v7x, add a head-group grid axis
    # (or flash-style kv loop) to shrink the (H, tq, Np) f32 intermediates.

    q_spec = pl.BlockSpec((1, tq, H, d), lambda b, i: (b, i, 0, 0))
    kv_spec = pl.BlockSpec((1, Np, H, d), lambda b, i: (b, 0, 0, 0))
    o_spec = pl.BlockSpec((1, tq, D), lambda b, i: (b, i, 0))

    return pl.pallas_call(
        functools.partial(_attention_kernel, scale=scale, seq_len=seq_len),
        out_shape=jax.ShapeDtypeStruct((B, Np, D), q.dtype),
        grid=(B, Np // tq),
        in_specs=[q_spec, kv_spec, kv_spec],
        out_specs=o_spec,
        compiler_params=pltpu.CompilerParams(
            dimension_semantics=("parallel", "parallel"),
            vmem_limit_bytes=_VMEM_LIMIT),
    )(q, k, v)


# ------------------------- plain-JAX glue / params --------------------------

def bilinear_resize_align_corners(w, out_hw):
    """F.interpolate(..., mode='bilinear', align_corners=True) on last 2 dims."""
    Hin, Win = w.shape[-2], w.shape[-1]
    Hout, Wout = out_hw

    def coords(n_in, n_out):
        if n_out == 1:
            return jnp.zeros((1,), jnp.float32)
        return jnp.arange(n_out, dtype=jnp.float32) * (n_in - 1) / (n_out - 1)

    ys, xs = coords(Hin, Hout), coords(Win, Wout)
    y0 = jnp.clip(jnp.floor(ys).astype(jnp.int32), 0, Hin - 1)
    y1 = jnp.clip(y0 + 1, 0, Hin - 1)
    x0 = jnp.clip(jnp.floor(xs).astype(jnp.int32), 0, Win - 1)
    x1 = jnp.clip(x0 + 1, 0, Win - 1)
    wy = ys - y0.astype(jnp.float32)
    wx = xs - x0.astype(jnp.float32)

    top = jnp.take(w, y0, axis=-2)
    bot = jnp.take(w, y1, axis=-2)
    rows = top * (1.0 - wy)[:, None] + bot * wy[:, None]
    left = jnp.take(rows, x0, axis=-1)
    right = jnp.take(rows, x1, axis=-1)
    return left * (1.0 - wx) + right * wx


def extract_patches(x, p):
    """(B,C,H,W) -> (B, (H/p)*(W/p), C*p*p), matching stride-p conv2d patch order."""
    B, C, H, W = x.shape
    hp, wp = H // p, W // p
    x = x.reshape(B, C, hp, p, wp, p)
    x = jnp.transpose(x, (0, 2, 4, 1, 3, 5))  # (B, hp, wp, C, p, p)
    return x.reshape(B, hp * wp, C * p * p)


def init_params(key, cfg):
    D, C = cfg["hidden"], cfg["channels"]
    I, L = cfg["intermediate"], cfg["layers"]
    ok, og = cfg["orig_kernel"], cfg["orig_grid"]

    def nrm(k, shape):
        return 0.02 * jax.random.normal(k, shape, dtype=jnp.float32)

    keys = iter(jax.random.split(key, 8 + 10 * L))
    params = {
        "patch_embedding_w": nrm(next(keys), (D, C, ok, ok)),   # conv weight (out,in,kh,kw)
        "patch_embedding_b": nrm(next(keys), (D,)),
        "class_embedding": nrm(next(keys), (D,)),
        "position_embedding": nrm(next(keys), (og * og + 1, D)),
        "pre_ln_g": jnp.ones((D,), jnp.float32),
        "pre_ln_b": jnp.zeros((D,), jnp.float32),
        "post_ln_g": jnp.ones((D,), jnp.float32),
        "post_ln_b": jnp.zeros((D,), jnp.float32),
        "layers": [],
    }
    for _ in range(L):
        lp = {
            "ln1_g": jnp.ones((D,), jnp.float32), "ln1_b": jnp.zeros((D,), jnp.float32),
            "q_w": nrm(next(keys), (D, D)), "q_b": jnp.zeros((D,), jnp.float32),
            "k_w": nrm(next(keys), (D, D)), "k_b": jnp.zeros((D,), jnp.float32),
            "v_w": nrm(next(keys), (D, D)), "v_b": jnp.zeros((D,), jnp.float32),
            "o_w": nrm(next(keys), (D, D)), "o_b": jnp.zeros((D,), jnp.float32),
            "ln2_g": jnp.ones((D,), jnp.float32), "ln2_b": jnp.zeros((D,), jnp.float32),
            "fc1_w": nrm(next(keys), (D, I)), "fc1_b": jnp.zeros((I,), jnp.float32),
            "fc2_w": nrm(next(keys), (I, D)), "fc2_b": jnp.zeros((D,), jnp.float32),
        }
        params["layers"].append(lp)
    return params


def prepare_params(params, cfg):
    """One-time preprocessing: resize conv/pos embeddings, cast weights to bf16,
    biases / LN params to f32 row vectors, and pre-concatenate QKV."""
    D, C = cfg["hidden"], cfg["channels"]
    p = cfg["patch_size"]
    fs = cfg["image_size"] // p
    og = cfg["orig_grid"]

    f32 = jnp.float32
    bf16 = jnp.bfloat16

    # Patch-embedding conv weight resized to (p, p): bilinear, align_corners=True.
    w_conv = bilinear_resize_align_corners(
        params["patch_embedding_w"].astype(f32), (p, p))          # (D, C, p, p)
    patch_w = w_conv.reshape(D, C * p * p).T.astype(bf16)         # (C*p*p, D)
    patch_b = params["patch_embedding_b"].astype(f32).reshape(1, D)

    # Position embedding rescaled (bicubic) to the new grid.
    pos = params["position_embedding"].astype(f32)                # (og*og+1, D)
    grid_pos = pos[1:].T.reshape(D, og, og)
    grid_pos = jax.image.resize(grid_pos, (D, fs, fs), method="bicubic",
                                antialias=False)
    # TODO(synk): jax bicubic uses Keys a=-0.5; torch F.interpolate bicubic uses a=-0.75.
    grid_pos = grid_pos.reshape(D, fs * fs).T
    pos_emb = jnp.concatenate([pos[:1], grid_pos], axis=0)        # (N, D)

    prep = {
        "patch_w": patch_w,
        "patch_b": patch_b,
        "class_embedding": params["class_embedding"].astype(bf16),
        "pos_emb": pos_emb,
        "pre_ln_g": params["pre_ln_g"].astype(f32).reshape(1, D),
        "pre_ln_b": params["pre_ln_b"].astype(f32).reshape(1, D),
        "post_ln_g": params["post_ln_g"].astype(f32),
        "post_ln_b": params["post_ln_b"].astype(f32),
        "layers": [],
    }
    for lp in params["layers"]:
        I = lp["fc1_w"].shape[1]
        wqkv = jnp.concatenate([lp["q_w"], lp["k_w"], lp["v_w"]], axis=1).astype(bf16)
        bqkv = jnp.concatenate([lp["q_b"], lp["k_b"], lp["v_b"]],
                               axis=0).astype(f32).reshape(1, 3 * D)
        prep["layers"].append({
            "ln1_g": lp["ln1_g"].astype(f32).reshape(1, D),
            "ln1_b": lp["ln1_b"].astype(f32).reshape(1, D),
            "wqkv": wqkv, "bqkv": bqkv,
            "o_w": lp["o_w"].astype(bf16),
            "o_b": lp["o_b"].astype(f32).reshape(1, D),
            "ln2_g": lp["ln2_g"].astype(f32).reshape(1, D),
            "ln2_b": lp["ln2_b"].astype(f32).reshape(1, D),
            "fc1_w": lp["fc1_w"].astype(bf16),
            "fc1_b": lp["fc1_b"].astype(f32).reshape(1, I),
            "fc2_w": lp["fc2_w"].astype(bf16),
            "fc2_b": lp["fc2_b"].astype(f32).reshape(1, D),
        })
    return prep


# ------------------------------- forward pass --------------------------------

def clip_vision_forward(prep, pixel_values, cfg):
    B, C, H, W = pixel_values.shape
    p = cfg["patch_size"]
    D = cfg["hidden"]
    heads = cfg["heads"]
    dh = D // heads
    fs = H // p                  # feature_size (= image_size // patch_size)
    N = fs * fs + 1              # num_positions

    # 1) strided conv == patch matmul (weight already resized/bf16 in prep)
    patches = extract_patches(pixel_values, p).astype(jnp.bfloat16)  # (B, np, C*p*p)
    npat = fs * fs
    patch_embeds = pallas_linear(
        patches.reshape(B * npat, C * p * p), prep["patch_w"], prep["patch_b"]
    ).reshape(B, npat, D)                                            # bf16

    # 2) prepend class token, add rescaled position embedding (f32)
    class_embeds = jnp.broadcast_to(
        prep["class_embedding"].reshape(1, 1, D), (B, 1, D))
    embeddings = jnp.concatenate([class_embeds, patch_embeds], axis=1)  # (B, N, D)
    x = embeddings.astype(jnp.float32) + prep["pos_emb"][None]          # (B, N, D)

    # 3) pad sequence ONCE to a tile multiple; all encoder kernels run padded.
    Np = _round_up(N, 8)
    rt = _pick_row_tile(Np)          # row tile for matmuls; divides Np
    Np = _round_up(N, rt)
    x = _pad_axis(x, 1, Np)          # zeros in padded rows
    Mp = B * Np
    tq = _pick_attn_tile(Np)

    # 4) pre_layrnorm
    hidden = pallas_layernorm(x.reshape(Mp, D), prep["pre_ln_g"], prep["pre_ln_b"],
                              row_tile=rt, out_dtype=jnp.bfloat16)

    # 5) CLIP encoder layers: LN1+QKV (3 outputs), attention (lane-dense out),
    #    out-proj(+res), LN2+FC1(+gelu), FC2(+res) -- all Pallas, no pad/slice.
    scale = dh ** -0.5
    for lp in prep["layers"]:
        residual = hidden
        q, k, v = pallas_ln_qkv(hidden, lp["ln1_g"], lp["ln1_b"],
                                lp["wqkv"], lp["bqkv"], row_tile=rt)
        attn = pallas_attention(q.reshape(B, Np, heads, dh),
                                k.reshape(B, Np, heads, dh),
                                v.reshape(B, Np, heads, dh),
                                scale, seq_len=N, tq=tq)             # (B, Np, D)
        hidden = pallas_linear(attn.reshape(Mp, D), lp["o_w"], lp["o_b"],
                               residual=residual, row_tile=rt)

        residual = hidden
        h = pallas_ln_linear(hidden, lp["ln2_g"], lp["ln2_b"],
                             lp["fc1_w"], lp["fc1_b"],
                             activation="quick_gelu", row_tile=rt)
        hidden = pallas_linear(h, lp["fc2_w"], lp["fc2_b"],
                               residual=residual, row_tile=rt)

    # 6) single slice back to the true sequence length
    last_hidden_state = hidden.reshape(B, Np, D)[:, :N].astype(jnp.float32)

    # 7) pooled output = post_layernorm(CLS token)
    pooled = last_hidden_state[:, 0, :]                              # (B, D)
    pooled = pallas_layernorm(pooled, prep["post_ln_g"], prep["post_ln_b"],
                              out_dtype=jnp.float32)
    return last_hidden_state, pooled


# ----------------------------------- main ------------------------------------

if __name__ == "__main__":
    # Small synthetic config consistent with the module's forward logic
    # (image 32x32 with patch_size=8 -> feature_size=4, num_positions=17).
    cfg = dict(
        hidden=32, heads=4, intermediate=64, layers=2,
        channels=3, patch_size=8, image_size=32,
        orig_kernel=14,   # original patch_embedding kernel size (resized -> patch_size)
        orig_grid=16,     # original position-embedding grid (resized -> feature_size)
    )

    key = jax.random.PRNGKey(0)
    k_in, k_par = jax.random.split(key)
    pixel_values = jax.random.normal(
        k_in, (2, cfg["channels"], cfg["image_size"], cfg["image_size"]),
        dtype=jnp.float32)
    params = init_params(k_par, cfg)
    prep = prepare_params(params, cfg)          # one-time weight prep (bf16, QKV concat)

    fwd = jax.jit(functools.partial(clip_vision_forward, cfg=cfg))
    last_hidden_state, pooled_output = fwd(prep, pixel_values)
    jax.block_until_ready((last_hidden_state, pooled_output))

    fs = cfg["image_size"] // cfg["patch_size"]
    assert last_hidden_state.shape == (2, fs * fs + 1, cfg["hidden"])
    assert pooled_output.shape == (2, cfg["hidden"])
    assert bool(jnp.all(jnp.isfinite(last_hidden_state))) and bool(jnp.all(jnp.isfinite(pooled_output)))
    print("KERNEL_OK")
</pallas_src>

<mosaic_0001>
module attributes {stable_mosaic.version = 11 : i64} {
  func.func @_linear_kernel(%arg0: i32, %arg1: i32, %arg2: memref<32x192xbf16, #tpu.memory_space<vmem>>, %arg3: memref<192x32xbf16, #tpu.memory_space<vmem>>, %arg4: memref<1x32xf32, #tpu.memory_space<vmem>>, %arg5: memref<32x32xbf16, #tpu.memory_space<vmem>>) attributes {dimension_semantics = [#tpu.dimension_semantics<parallel>, #tpu.dimension_semantics<parallel>], iteration_bounds = array<i64: 1, 1>, scalar_prefetch = 0 : i64, scratch_operands = 0 : i64, tpu.core_type = #tpu.core_type<tc>, window_params = [{transform_indices = @transform_0, window_bounds = array<i64: 32, 192>}, {transform_indices = @transform_1, window_bounds = array<i64: 192, 32>}, {transform_indices = @transform_2, window_bounds = array<i64: 1, 32>}, {transform_indices = @transform_3, window_bounds = array<i64: 32, 32>}]} {
    %c0 = arith.constant 0 : index
    %c0_0 = arith.constant 0 : index
    %0 = vector.load %arg2[%c0, %c0_0] : memref<32x192xbf16, #tpu.memory_space<vmem>>, vector<32x192xbf16>
    %c0_1 = arith.constant 0 : index
    %c0_2 = arith.constant 0 : index
    %1 = vector.load %arg3[%c0_1, %c0_2] : memref<192x32xbf16, #tpu.memory_space<vmem>>, vector<192x32xbf16>
    %cst = arith.constant dense<0.000000e+00> : vector<32x32xf32>
    %2 = tpu.matmul %0, %1, %cst {dimension_numbers = #tpu.dot_dimension_numbers<[1], [0], [0], [1], [0, 0, 1, 1], [], []>} : vector<32x192xbf16>, vector<192x32xbf16>, vector<32x32xf32> -> vector<32x32xf32>
    %c0_3 = arith.constant 0 : index
    %c0_4 = arith.constant 0 : index
    %3 = vector.load %arg4[%c0_3, %c0_4] : memref<1x32xf32, #tpu.memory_space<vmem>>, vector<1x32xf32>
    %4 = vector.broadcast %3 : vector<1x32xf32> to vector<32x32xf32>
    %5 = arith.addf %2, %4 : vector<32x32xf32>
    %6 = arith.truncf %5 : vector<32x32xf32> to vector<32x32xbf16>
    %c0_5 = arith.constant 0 : index
    %c0_6 = arith.constant 0 : index
    %7 = vector.load %arg5[%c0_5, %c0_6] : memref<32x32xbf16, #tpu.memory_space<vmem>>, vector<32x32xbf16>
    tpu.vector_store %arg5[%c0_5, %c0_6], %6 {strides = array<i32>} : memref<32x32xbf16, #tpu.memory_space<vmem>>, vector<32x32xbf16>,
    return
  }
  func.func @transform_0(%arg0: i32, %arg1: i32) -> (i32, i32) {
    %c0_i32 = arith.constant 0 : i32
    %c0_i32_0 = arith.constant 0 : i32
    return %arg1, %c0_i32 : i32, i32
  }
  func.func @transform_1(%arg0: i32, %arg1: i32) -> (i32, i32) {
    %c0_i32 = arith.constant 0 : i32
    %c0_i32_0 = arith.constant 0 : i32
    return %c0_i32, %arg0 : i32, i32
  }
  func.func @transform_2(%arg0: i32, %arg1: i32) -> (i32, i32) {
    %c0_i32 = arith.constant 0 : i32
    %c0_i32_0 = arith.constant 0 : i32
    return %c0_i32, %arg0 : i32, i32
  }
  func.func @transform_3(%arg0: i32, %arg1: i32) -> (i32, i32) {
    %c0_i32 = arith.constant 0 : i32
    return %arg1, %arg0 : i32, i32
  }
}

module attributes {stable_mosaic.version = 11 : i64} {
  func.func @_layernorm_kernel(%arg0: i32, %arg1: memref<24x32xf32, #tpu.memory_space<vmem>>, %arg2: memref<1x32xf32, #tpu.memory_space<vmem>>, %arg3: memref<1x32xf32, #tpu.memory_space<vmem>>, %arg4: memref<24x32xbf16, #tpu.memory_space<vmem>>) attributes {dimension_semantics = [#tpu.dimension_semantics<parallel>], iteration_bounds = array<i64: 2>, scalar_prefetch = 0 : i64, scratch_operands = 0 : i64, tpu.core_type = #tpu.core_type<tc>, window_params = [{transform_indices = @transform_0, window_bounds = array<i64: 24, 32>}, {pipeline_mode = #tpu.pipeline_mode<synchronous>, transform_indices = @transform_1, window_bounds = array<i64: 1, 32>}, {pipeline_mode = #tpu.pipeline_mode<synchronous>, transform_indices = @transform_2, window_bounds = array<i64: 1, 32>}, {transform_indices = @transform_3, window_bounds = array<i64: 24, 32>}]} {
    %c0 = arith.constant 0 : index
    %c0_0 = arith.constant 0 : index
    %0 = vector.load %arg1[%c0, %c0_0] : memref<24x32xf32, #tpu.memory_space<vmem>>, vector<24x32xf32>
    %cst = arith.constant dense<0.000000e+00> : vector<24xf32>
    %1 = vector.multi_reduction <add>, %0, %cst [1] : vector<24x32xf32> to vector<24xf32>
    %2 = vector.shape_cast %1 : vector<24xf32> to vector<24x1xf32>
    %cst_1 = arith.constant 3.200000e+01 : f32
    %3 = vector.broadcast %cst_1 : f32 to vector<24x1xf32>
    %4 = arith.divf %2, %3 : vector<24x1xf32>
    %5 = vector.broadcast %4 : vector<24x1xf32> to vector<24x32xf32>
    %6 = arith.subf %0, %5 : vector<24x32xf32>
    %7 = arith.mulf %6, %6 : vector<24x32xf32>
    %cst_2 = arith.constant dense<0.000000e+00> : vector<24xf32>
    %8 = vector.multi_reduction <add>, %7, %cst_2 [1] : vector<24x32xf32> to vector<24xf32>
    %9 = vector.shape_cast %8 : vector<24xf32> to vector<24x1xf32>
    %cst_3 = arith.constant 3.200000e+01 : f32
    %10 = vector.broadcast %cst_3 : f32 to vector<24x1xf32>
    %11 = arith.divf %9, %10 : vector<24x1xf32>
    %12 = vector.broadcast %4 : vector<24x1xf32> to vector<24x32xf32>
    %13 = arith.subf %0, %12 : vector<24x32xf32>
    %cst_4 = arith.constant 9.99999974E-6 : f32
    %14 = vector.broadcast %cst_4 : f32 to vector<24x1xf32>
    %15 = arith.addf %11, %14 : vector<24x1xf32>
    %16 = math.rsqrt %15 : vector<24x1xf32>
    %17 = vector.broadcast %16 : vector<24x1xf32> to vector<24x32xf32>
    %18 = arith.mulf %13, %17 : vector<24x32xf32>
    %c0_5 = arith.constant 0 : index
    %c0_6 = arith.constant 0 : index
    %19 = vector.load %arg2[%c0_5, %c0_6] : memref<1x32xf32, #tpu.memory_space<vmem>>, vector<1x32xf32>
    %20 = vector.broadcast %19 : vector<1x32xf32> to vector<24x32xf32>
    %21 = arith.mulf %18, %20 : vector<24x32xf32>
    %c0_7 = arith.constant 0 : index
    %c0_8 = arith.constant 0 : index
    %22 = vector.load %arg3[%c0_7, %c0_8] : memref<1x32xf32, #tpu.memory_space<vmem>>, vector<1x32xf32>
    %23 = vector.broadcast %22 : vector<1x32xf32> to vector<24x32xf32>
    %24 = arith.addf %21, %23 : vector<24x32xf32>
    %25 = arith.truncf %24 : vector<24x32xf32> to vector<24x32xbf16>
    %c0_9 = arith.constant 0 : index
    %c0_10 = arith.constant 0 : index
    %26 = vector.load %arg4[%c0_9, %c0_10] : memref<24x32xbf16, #tpu.memory_space<vmem>>, vector<24x32xbf16>
    tpu.vector_store %arg4[%c0_9, %c0_10], %25 {strides = array<i32>} : memref<24x32xbf16, #tpu.memory_space<vmem>>, vector<24x32xbf16>,
    return
  }
  func.func @transform_0(%arg0: i32) -> (i32, i32) {
    %c0_i32 = arith.constant 0 : i32
    %c0_i32_0 = arith.constant 0 : i32
    return %arg0, %c0_i32 : i32, i32
  }
  func.func @transform_1(%arg0: i32) -> (i32, i32) {
    %c0_i32 = arith.constant 0 : i32
    %c0_i32_0 = arith.constant 0 : i32
    %c0_i32_1 = arith.constant 0 : i32
    return %c0_i32, %c0_i32_0 : i32, i32
  }
  func.func @transform_2(%arg0: i32) -> (i32, i32) {
    %c0_i32 = arith.constant 0 : i32
    %c0_i32_0 = arith.constant 0 : i32
    %c0_i32_1 = arith.constant 0 : i32
    return %c0_i32, %c0_i32_0 : i32, i32
  }
  func.func @transform_3(%arg0: i32) -> (i32, i32) {
    %c0_i32 = arith.constant 0 : i32
    %c0_i32_0 = arith.constant 0 : i32
    return %arg0, %c0_i32 : i32, i32
  }
}

module attributes {stable_mosaic.version = 11 : i64} {
  func.func @_ln_qkv_kernel(%arg0: i32, %arg1: memref<24x32xbf16, #tpu.memory_space<vmem>>, %arg2: memref<1x32xf32, #tpu.memory_space<vmem>>, %arg3: memref<1x32xf32, #tpu.memory_space<vmem>>, %arg4: memref<32x96xbf16, #tpu.memory_space<vmem>>, %arg5: memref<1x96xf32, #tpu.memory_space<vmem>>, %arg6: memref<24x32xbf16, #tpu.memory_space<vmem>>, %arg7: memref<24x32xbf16, #tpu.memory_space<vmem>>, %arg8: memref<24x32xbf16, #tpu.memory_space<vmem>>) attributes {dimension_semantics = [#tpu.dimension_semantics<parallel>], iteration_bounds = array<i64: 2>, scalar_prefetch = 0 : i64, scratch_operands = 0 : i64, tpu.core_type = #tpu.core_type<tc>, window_params = [{transform_indices = @transform_0, window_bounds = array<i64: 24, 32>}, {pipeline_mode = #tpu.pipeline_mode<synchronous>, transform_indices = @transform_1, window_bounds = array<i64: 1, 32>}, {pipeline_mode = #tpu.pipeline_mode<synchronous>, transform_indices = @transform_2, window_bounds = array<i64: 1, 32>}, {pipeline_mode = #tpu.pipeline_mode<synchronous>, transform_indices = @transform_3, window_bounds = array<i64: 32, 96>}, {pipeline_mode = #tpu.pipeline_mode<synchronous>, transform_indices = @transform_4, window_bounds = array<i64: 1, 96>}, {transform_indices = @transform_5, window_bounds = array<i64: 24, 32>}, {transform_indices = @transform_6, window_bounds = array<i64: 24, 32>}, {transform_indices = @transform_7, window_bounds = array<i64: 24, 32>}]} {
    %c0 = arith.constant 0 : index
    %c0_0 = arith.constant 0 : index
    %0 = vector.load %arg1[%c0, %c0_0] : memref<24x32xbf16, #tpu.memory_space<vmem>>, vector<24x32xbf16>
    %1 = arith.extf %0 : vector<24x32xbf16> to vector<24x32xf32>
    %cst = arith.constant dense<0.000000e+00> : vector<24xf32>
    %2 = vector.multi_reduction <add>, %1, %cst [1] : vector<24x32xf32> to vector<24xf32>
    %3 = vector.shape_cast %2 : vector<24xf32> to vector<24x1xf32>
    %cst_1 = arith.constant 3.200000e+01 : f32
    %4 = vector.broadcast %cst_1 : f32 to vector<24x1xf32>
    %5 = arith.divf %3, %4 : vector<24x1xf32>
    %6 = vector.broadcast %5 : vector<24x1xf32> to vector<24x32xf32>
    %7 = arith.subf %1, %6 : vector<24x32xf32>
    %8 = arith.mulf %7, %7 : vector<24x32xf32>
    %cst_2 = arith.constant dense<0.000000e+00> : vector<24xf32>
    %9 = vector.multi_reduction <add>, %8, %cst_2 [1] : vector<24x32xf32> to vector<24xf32>
    %10 = vector.shape_cast %9 : vector<24xf32> to vector<24x1xf32>
    %cst_3 = arith.constant 3.200000e+01 : f32
    %11 = vector.broadcast %cst_3 : f32 to vector<24x1xf32>
    %12 = arith.divf %10, %11 : vector<24x1xf32>
    %13 = vector.broadcast %5 : vector<24x1xf32> to vector<24x32xf32>
    %14 = arith.subf %1, %13 : vector<24x32xf32>
    %cst_4 = arith.constant 9.99999974E-6 : f32
    %15 = vector.broadcast %cst_4 : f32 to vector<24x1xf32>
    %16 = arith.addf %12, %15 : vector<24x1xf32>
    %17 = math.rsqrt %16 : vector<24x1xf32>
    %18 = vector.broadcast %17 : vector<24x1xf32> to vector<24x32xf32>
    %19 = arith.mulf %14, %18 : vector<24x32xf32>
    %c0_5 = arith.constant 0 : index
    %c0_6 = arith.constant 0 : index
    %20 = vector.load %arg2[%c0_5, %c0_6] : memref<1x32xf32, #tpu.memory_space<vmem>>, vector<1x32xf32>
    %21 = vector.broadcast %20 : vector<1x32xf32> to vector<24x32xf32>
    %22 = arith.mulf %19, %21 : vector<24x32xf32>
    %c0_7 = arith.constant 0 : index
    %c0_8 = arith.constant 0 : index
    %23 = vector.load %arg3[%c0_7, %c0_8] : memref<1x32xf32, #tpu.memory_space<vmem>>, vector<1x32xf32>
    %24 = vector.broadcast %23 : vector<1x32xf32> to vector<24x32xf32>
    %25 = arith.addf %22, %24 : vector<24x32xf32>
    %26 = arith.truncf %25 : vector<24x32xf32> to vector<24x32xbf16>
    %c0_9 = arith.constant 0 : index
    %c0_10 = arith.constant 0 : index
    %27 = vector.load %arg4[%c0_9, %c0_10] : memref<32x96xbf16, #tpu.memory_space<vmem>>, vector<32x96xbf16>
    %cst_11 = arith.constant dense<0.000000e+00> : vector<24x96xf32>
    %28 = tpu.matmul %26, %27, %cst_11 {dimension_numbers = #tpu.dot_dimension_numbers<[1], [0], [0], [1], [0, 0, 1, 1], [], []>} : vector<24x32xbf16>, vector<32x96xbf16>, vector<24x96xf32> -> vector<24x96xf32>
    %c0_12 = arith.constant 0 : index
    %c0_13 = arith.constant 0 : index
    %29 = vector.load %arg5[%c0_12, %c0_13] : memref<1x96xf32, #tpu.memory_space<vmem>>, vector<1x96xf32>
    %30 = vector.broadcast %29 : vector<1x96xf32> to vector<24x96xf32>
    %31 = arith.addf %28, %30 : vector<24x96xf32>
    %32 = vector.extract_strided_slice %31 {offsets = [0, 0], sizes = [24, 32], strides = [1, 1]} : vector<24x96xf32> to vector<24x32xf32>
    %33 = arith.truncf %32 : vector<24x32xf32> to vector<24x32xbf16>
    %c0_14 = arith.constant 0 : index
    %c0_15 = arith.constant 0 : index
    %34 = vector.load %arg6[%c0_14, %c0_15] : memref<24x32xbf16, #tpu.memory_space<vmem>>, vector<24x32xbf16>
    tpu.vector_store %arg6[%c0_14, %c0_15], %33 {strides = array<i32>} : memref<24x32xbf16, #tpu.memory_space<vmem>>, vector<24x32xbf16>,
    %35 = vector.extract_strided_slice %31 {offsets = [0, 32], sizes = [24, 32], strides = [1, 1]} : vector<24x96xf32> to vector<24x32xf32>
    %36 = arith.truncf %35 : vector<24x32xf32> to vector<24x32xbf16>
    %c0_16 = arith.constant 0 : index
    %c0_17 = arith.constant 0 : index
    %37 = vector.load %arg7[%c0_16, %c0_17] : memref<24x32xbf16, #tpu.memory_space<vmem>>, vector<24x32xbf16>
    tpu.vector_store %arg7[%c0_16, %c0_17], %36 {strides = array<i32>} : memref<24x32xbf16, #tpu.memory_space<vmem>>, vector<24x32xbf16>,
    %38 = vector.extract_strided_slice %31 {offsets = [0, 64], sizes = [24, 32], strides = [1, 1]} : vector<24x96xf32> to vector<24x32xf32>
    %39 = arith.truncf %38 : vector<24x32xf32> to vector<24x32xbf16>
    %c0_18 = arith.constant 0 : index
    %c0_19 = arith.constant 0 : index
    %40 = vector.load %arg8[%c0_18, %c0_19] : memref<24x32xbf16, #tpu.memory_space<vmem>>, vector<24x32xbf16>
    tpu.vector_store %arg8[%c0_18, %c0_19], %39 {strides = array<i32>} : memref<24x32xbf16, #tpu.memory_space<vmem>>, vector<24x32xbf16>,
    return
  }
  func.func @transform_0(%arg0: i32) -> (i32, i32) {
    %c0_i32 = arith.constant 0 : i32
    %c0_i32_0 = arith.constant 0 : i32
    return %arg0, %c0_i32 : i32, i32
  }
  func.func @transform_1(%arg0: i32) -> (i32, i32) {
    %c0_i32 = arith.constant 0 : i32
    %c0_i32_0 = arith.constant 0 : i32
    %c0_i32_1 = arith.constant 0 : i32
    return %c0_i32, %c0_i32_0 : i32, i32
  }
  func.func @transform_2(%arg0: i32) -> (i32, i32) {
    %c0_i32 = arith.constant 0 : i32
    %c0_i32_0 = arith.constant 0 : i32
    %c0_i32_1 = arith.constant 0 : i32
    return %c0_i32, %c0_i32_0 : i32, i32
  }
  func.func @transform_3(%arg0: i32) -> (i32, i32) {
    %c0_i32 = arith.constant 0 : i32
    %c0_i32_0 = arith.constant 0 : i32
    %c0_i32_1 = arith.constant 0 : i32
    return %c0_i32, %c0_i32_0 : i32, i32
  }
  func.func @transform_4(%arg0: i32) -> (i32, i32) {
    %c0_i32 = arith.constant 0 : i32
    %c0_i32_0 = arith.constant 0 : i32
    %c0_i32_1 = arith.constant 0 : i32
    return %c0_i32, %c0_i32_0 : i32, i32
  }
  func.func @transform_5(%arg0: i32) -> (i32, i32) {
    %c0_i32 = arith.constant 0 : i32
    %c0_i32_0 = arith.constant 0 : i32
    return %arg0, %c0_i32 : i32, i32
  }
  func.func @transform_6(%arg0: i32) -> (i32, i32) {
    %c0_i32 = arith.constant 0 : i32
    %c0_i32_0 = arith.constant 0 : i32
    return %arg0, %c0_i32 : i32, i32
  }
  func.func @transform_7(%arg0: i32) -> (i32, i32) {
    %c0_i32 = arith.constant 0 : i32
    %c0_i32_0 = arith.constant 0 : i32
    return %arg0, %c0_i32 : i32, i32
  }
}

module attributes {stable_mosaic.version = 11 : i64} {
  func.func @_attention_kernel(%arg0: i32, %arg1: i32, %arg2: memref<1x24x4x8xbf16, #tpu.memory_space<vmem>>, %arg3: memref<1x24x4x8xbf16, #tpu.memory_space<vmem>>, %arg4: memref<1x24x4x8xbf16, #tpu.memory_space<vmem>>, %arg5: memref<1x24x32xbf16, #tpu.memory_space<vmem>>) attributes {dimension_semantics = [#tpu.dimension_semantics<parallel>, #tpu.dimension_semantics<parallel>], iteration_bounds = array<i64: 2, 1>, scalar_prefetch = 0 : i64, scratch_operands = 0 : i64, tpu.core_type = #tpu.core_type<tc>, window_params = [{transform_indices = @transform_0, window_bounds = array<i64: 1, 24, 4, 8>}, {transform_indices = @transform_1, window_bounds = array<i64: 1, 24, 4, 8>}, {transform_indices = @transform_2, window_bounds = array<i64: 1, 24, 4, 8>}, {transform_indices = @transform_3, window_bounds = array<i64: 1, 24, 32>}]} {
    %c0 = arith.constant 0 : index
    %c0_0 = arith.constant 0 : index
    %c0_1 = arith.constant 0 : index
    %c0_2 = arith.constant 0 : index
    %0 = vector.load %arg2[%c0, %c0_0, %c0_1, %c0_2] : memref<1x24x4x8xbf16, #tpu.memory_space<vmem>>, vector<1x24x4x8xbf16>
    %1 = vector.shape_cast %0 : vector<1x24x4x8xbf16> to vector<24x4x8xbf16>
    %c0_3 = arith.constant 0 : index
    %c0_4 = arith.constant 0 : index
    %c0_5 = arith.constant 0 : index
    %c0_6 = arith.constant 0 : index
    %2 = vector.load %arg3[%c0_3, %c0_4, %c0_5, %c0_6] : memref<1x24x4x8xbf16, #tpu.memory_space<vmem>>, vector<1x24x4x8xbf16>
    %3 = vector.shape_cast %2 : vector<1x24x4x8xbf16> to vector<24x4x8xbf16>
    %c0_7 = arith.constant 0 : index
    %c0_8 = arith.constant 0 : index
    %c0_9 = arith.constant 0 : index
    %c0_10 = arith.constant 0 : index
    %4 = vector.load %arg4[%c0_7, %c0_8, %c0_9, %c0_10] : memref<1x24x4x8xbf16, #tpu.memory_space<vmem>>, vector<1x24x4x8xbf16>
    %5 = vector.shape_cast %4 : vector<1x24x4x8xbf16> to vector<24x4x8xbf16>
    "tpu.trace_start"() <{level = 10 : i32, message = "qhd,khd->hqk"}> : () -> ()
    %cst = arith.constant dense<0.000000e+00> : vector<4x24x24xf32>
    %6 = tpu.matmul %1, %3, %cst {dimension_numbers = #tpu.dot_dimension_numbers<[2], [2], [0], [0], [0, 1, 0, 0, 1, 0], [1], [1]>} : vector<24x4x8xbf16>, vector<24x4x8xbf16>, vector<4x24x24xf32> -> vector<4x24x24xf32>
    "tpu.trace_stop"() : () -> ()
    %cst_11 = arith.constant 0.353553385 : f32
    %7 = vector.broadcast %cst_11 : f32 to vector<4x24x24xf32>
    %8 = arith.mulf %6, %7 : vector<4x24x24xf32>
    %9 = tpu.iota {dimensions = array<i32: 2>} : vector<4x24x24xi32>
    %c17_i32 = arith.constant 17 : i32
    %10 = vector.broadcast %c17_i32 : i32 to vector<4x24x24xi32>
    %11 = arith.cmpi slt, %9, %10 : vector<4x24x24xi32>
    %cst_12 = arith.constant -1.000000e+30 : f32
    %12 = vector.broadcast %cst_12 : f32 to vector<4x24x24xf32>
    %13 = arith.select %11, %8, %12 : vector<4x24x24xi1>, vector<4x24x24xf32>
    %cst_13 = arith.constant dense<0xFF800000> : vector<4x24xf32>
    %14 = vector.multi_reduction <maximumf>, %13, %cst_13 [2] : vector<4x24x24xf32> to vector<4x24xf32>
    %15 = vector.shape_cast %14 : vector<4x24xf32> to vector<4x24x1xf32>
    %16 = vector.broadcast %15 : vector<4x24x1xf32> to vector<4x24x24xf32>
    %17 = arith.subf %13, %16 : vector<4x24x24xf32>
    %18 = math.exp %17 : vector<4x24x24xf32>
    %cst_14 = arith.constant dense<0.000000e+00> : vector<4x24xf32>
    %19 = vector.multi_reduction <add>, %18, %cst_14 [2] : vector<4x24x24xf32> to vector<4x24xf32>
    %20 = vector.shape_cast %19 : vector<4x24xf32> to vector<4x24x1xf32>
    %21 = tpu.reciprocal %20 {approx = true} : vector<4x24x1xf32> -> vector<4x24x1xf32>
    %22 = vector.broadcast %21 : vector<4x24x1xf32> to vector<4x24x24xf32>
    %23 = arith.mulf %18, %22 : vector<4x24x24xf32>
    %24 = arith.truncf %23 : vector<4x24x24xf32> to vector<4x24x24xbf16>
    "tpu.trace_start"() <{level = 10 : i32, message = "hqk,khd->qhd"}> : () -> ()
    %cst_15 = arith.constant dense<0.000000e+00> : vector<4x8x24xf32>
    %25 = tpu.matmul %5, %24, %cst_15 {dimension_numbers = #tpu.dot_dimension_numbers<[0], [2], [2], [1], [0, 1, 0, 2, 1, 1], [1], [0]>} : vector<24x4x8xbf16>, vector<4x24x24xbf16>, vector<4x8x24xf32> -> vector<4x8x24xf32>
    %26 = tpu.transpose %25, [2, 0, 1] : vector<4x8x24xf32> -> vector<24x4x8xf32>
    "tpu.trace_stop"() : () -> ()
    %27 = vector.shape_cast %26 : vector<24x4x8xf32> to vector<24x32xf32>
    %28 = arith.truncf %27 : vector<24x32xf32> to vector<24x32xbf16>
    %c0_16 = arith.constant 0 : index
    %c0_17 = arith.constant 0 : index
    %c0_18 = arith.constant 0 : index
    %29 = vector.load %arg5[%c0_16, %c0_17, %c0_18] : memref<1x24x32xbf16, #tpu.memory_space<vmem>>, vector<1x24x32xbf16>
    %30 = vector.shape_cast %29 : vector<1x24x32xbf16> to vector<24x32xbf16>
    %31 = vector.shape_cast %28 : vector<24x32xbf16> to vector<1x24x32xbf16>
    tpu.vector_store %arg5[%c0_16, %c0_17, %c0_18], %31 {strides = array<i32>} : memref<1x24x32xbf16, #tpu.memory_space<vmem>>, vector<1x24x32xbf16>,
    return
  }
  func.func @transform_0(%arg0: i32, %arg1: i32) -> (i32, i32, i32, i32) {
    %c0_i32 = arith.constant 0 : i32
    %c0_i32_0 = arith.constant 0 : i32
    %c0_i32_1 = arith.constant 0 : i32
    return %arg0, %arg1, %c0_i32, %c0_i32_0 : i32, i32, i32, i32
  }
  func.func @transform_1(%arg0: i32, %arg1: i32) -> (i32, i32, i32, i32) {
    %c0_i32 = arith.constant 0 : i32
    %c0_i32_0 = arith.constant 0 : i32
    %c0_i32_1 = arith.constant 0 : i32
    %c0_i32_2 = arith.constant 0 : i32
    return %arg0, %c0_i32, %c0_i32_0, %c0_i32_1 : i32, i32, i32, i32
  }
  func.func @transform_2(%arg0: i32, %arg1: i32) -> (i32, i32, i32, i32) {
    %c0_i32 = arith.constant 0 : i32
    %c0_i32_0 = arith.constant 0 : i32
    %c0_i32_1 = arith.constant 0 : i32
    %c0_i32_2 = arith.constant 0 : i32
    return %arg0, %c0_i32, %c0_i32_0, %c0_i32_1 : i32, i32, i32, i32
  }
  func.func @transform_3(%arg0: i32, %arg1: i32) -> (i32, i32, i32) {
    %c0_i32 = arith.constant 0 : i32
    %c0_i32_0 = arith.constant 0 : i32
    return %arg0, %arg1, %c0_i32 : i32, i32, i32
  }
}

module attributes {stable_mosaic.version = 11 : i64} {
  func.func @_ln_linear_kernel(%arg0: i32, %arg1: i32, %arg2: memref<24x32xbf16, #tpu.memory_space<vmem>>, %arg3: memref<1x32xf32, #tpu.memory_space<vmem>>, %arg4: memref<1x32xf32, #tpu.memory_space<vmem>>, %arg5: memref<32x64xbf16, #tpu.memory_space<vmem>>, %arg6: memref<1x64xf32, #tpu.memory_space<vmem>>, %arg7: memref<24x64xbf16, #tpu.memory_space<vmem>>, %arg8: memref<24x32xbf16, #tpu.memory_space<vmem>>) attributes {dimension_semantics = [#tpu.dimension_semantics<parallel>, #tpu.dimension_semantics<arbitrary>], iteration_bounds = array<i64: 2, 1>, scalar_prefetch = 0 : i64, scratch_operands = 1 : i64, tpu.core_type = #tpu.core_type<tc>, window_params = [{transform_indices = @transform_0, window_bounds = array<i64: 24, 32>}, {pipeline_mode = #tpu.pipeline_mode<synchronous>, transform_indices = @transform_1, window_bounds = array<i64: 1, 32>}, {pipeline_mode = #tpu.pipeline_mode<synchronous>, transform_indices = @transform_2, window_bounds = array<i64: 1, 32>}, {transform_indices = @transform_3, window_bounds = array<i64: 32, 64>}, {transform_indices = @transform_4, window_bounds = array<i64: 1, 64>}, {transform_indices = @transform_5, window_bounds = array<i64: 24, 64>}]} {
    %c0_i32 = arith.constant 0 : i32
    %0 = arith.cmpi eq, %arg1, %c0_i32 : i32
    %1 = arith.extui %0 : i1 to i32
    %c0_i32_0 = arith.constant 0 : i32
    %2 = arith.cmpi ne, %1, %c0_i32_0 : i32
    scf.if %2 {
      %c0_10 = arith.constant 0 : index
      %c0_11 = arith.constant 0 : index
      %19 = vector.load %arg2[%c0_10, %c0_11] : memref<24x32xbf16, #tpu.memory_space<vmem>>, vector<24x32xbf16>
      %20 = arith.extf %19 : vector<24x32xbf16> to vector<24x32xf32>
      %cst_12 = arith.constant dense<0.000000e+00> : vector<24xf32>
      %21 = vector.multi_reduction <add>, %20, %cst_12 [1] : vector<24x32xf32> to vector<24xf32>
      %22 = vector.shape_cast %21 : vector<24xf32> to vector<24x1xf32>
      %cst_13 = arith.constant 3.200000e+01 : f32
      %23 = vector.broadcast %cst_13 : f32 to vector<24x1xf32>
      %24 = arith.divf %22, %23 : vector<24x1xf32>
      %25 = vector.broadcast %24 : vector<24x1xf32> to vector<24x32xf32>
      %26 = arith.subf %20, %25 : vector<24x32xf32>
      %27 = arith.mulf %26, %26 : vector<24x32xf32>
      %cst_14 = arith.constant dense<0.000000e+00> : vector<24xf32>
      %28 = vector.multi_reduction <add>, %27, %cst_14 [1] : vector<24x32xf32> to vector<24xf32>
      %29 = vector.shape_cast %28 : vector<24xf32> to vector<24x1xf32>
      %cst_15 = arith.constant 3.200000e+01 : f32
      %30 = vector.broadcast %cst_15 : f32 to vector<24x1xf32>
      %31 = arith.divf %29, %30 : vector<24x1xf32>
      %32 = vector.broadcast %24 : vector<24x1xf32> to vector<24x32xf32>
      %33 = arith.subf %20, %32 : vector<24x32xf32>
      %cst_16 = arith.constant 9.99999974E-6 : f32
      %34 = vector.broadcast %cst_16 : f32 to vector<24x1xf32>
      %35 = arith.addf %31, %34 : vector<24x1xf32>
      %36 = math.rsqrt %35 : vector<24x1xf32>
      %37 = vector.broadcast %36 : vector<24x1xf32> to vector<24x32xf32>
      %38 = arith.mulf %33, %37 : vector<24x32xf32>
      %c0_17 = arith.constant 0 : index
      %c0_18 = arith.constant 0 : index
      %39 = vector.load %arg3[%c0_17, %c0_18] : memref<1x32xf32, #tpu.memory_space<vmem>>, vector<1x32xf32>
      %40 = vector.broadcast %39 : vector<1x32xf32> to vector<24x32xf32>
      %41 = arith.mulf %38, %40 : vector<24x32xf32>
      %c0_19 = arith.constant 0 : index
      %c0_20 = arith.constant 0 : index
      %42 = vector.load %arg4[%c0_19, %c0_20] : memref<1x32xf32, #tpu.memory_space<vmem>>, vector<1x32xf32>
      %43 = vector.broadcast %42 : vector<1x32xf32> to vector<24x32xf32>
      %44 = arith.addf %41, %43 : vector<24x32xf32>
      %45 = arith.truncf %44 : vector<24x32xf32> to vector<24x32xbf16>
      %c0_21 = arith.constant 0 : index
      %c0_22 = arith.constant 0 : index
      %46 = vector.load %arg8[%c0_21, %c0_22] : memref<24x32xbf16, #tpu.memory_space<vmem>>, vector<24x32xbf16>
      tpu.vector_store %arg8[%c0_21, %c0_22], %45 {strides = array<i32>} : memref<24x32xbf16, #tpu.memory_space<vmem>>, vector<24x32xbf16>,
    } else {
    }
    %c0 = arith.constant 0 : index
    %c0_1 = arith.constant 0 : index
    %3 = vector.load %arg8[%c0, %c0_1] : memref<24x32xbf16, #tpu.memory_space<vmem>>, vector<24x32xbf16>
    %c0_2 = arith.constant 0 : index
    %c0_3 = arith.constant 0 : index
    %4 = vector.load %arg5[%c0_2, %c0_3] : memref<32x64xbf16, #tpu.memory_space<vmem>>, vector<32x64xbf16>
    %cst = arith.constant dense<0.000000e+00> : vector<24x64xf32>
    %5 = tpu.matmul %3, %4, %cst {dimension_numbers = #tpu.dot_dimension_numbers<[1], [0], [0], [1], [0, 0, 1, 1], [], []>} : vector<24x32xbf16>, vector<32x64xbf16>, vector<24x64xf32> -> vector<24x64xf32>
    %c0_4 = arith.constant 0 : index
    %c0_5 = arith.constant 0 : index
    %6 = vector.load %arg6[%c0_4, %c0_5] : memref<1x64xf32, #tpu.memory_space<vmem>>, vector<1x64xf32>
    %7 = vector.broadcast %6 : vector<1x64xf32> to vector<24x64xf32>
    %8 = arith.addf %5, %7 : vector<24x64xf32>
    %cst_6 = arith.constant 1.702000e+00 : f32
    %9 = vector.broadcast %cst_6 : f32 to vector<24x64xf32>
    %10 = arith.mulf %9, %8 : vector<24x64xf32>
    %11 = arith.negf %10 : vector<24x64xf32>
    %12 = math.exp %11 : vector<24x64xf32>
    %cst_7 = arith.constant 1.000000e+00 : f32
    %13 = vector.broadcast %cst_7 : f32 to vector<24x64xf32>
    %14 = arith.addf %13, %12 : vector<24x64xf32>
    %15 = arith.divf %13, %14 : vector<24x64xf32>
    %16 = arith.mulf %8, %15 : vector<24x64xf32>
    %17 = arith.truncf %16 : vector<24x64xf32> to vector<24x64xbf16>
    %c0_8 = arith.constant 0 : index
    %c0_9 = arith.constant 0 : index
    %18 = vector.load %arg7[%c0_8, %c0_9] : memref<24x64xbf16, #tpu.memory_space<vmem>>, vector<24x64xbf16>
    tpu.vector_store %arg7[%c0_8, %c0_9], %17 {strides = array<i32>} : memref<24x64xbf16, #tpu.memory_space<vmem>>, vector<24x64xbf16>,
    return
  }
  func.func @transform_0(%arg0: i32, %arg1: i32) -> (i32, i32) {
    %c0_i32 = arith.constant 0 : i32
    %c0_i32_0 = arith.constant 0 : i32
    return %arg0, %c0_i32 : i32, i32
  }
  func.func @transform_1(%arg0: i32, %arg1: i32) -> (i32, i32) {
    %c0_i32 = arith.constant 0 : i32
    %c0_i32_0 = arith.constant 0 : i32
    %c0_i32_1 = arith.constant 0 : i32
    return %c0_i32, %c0_i32_0 : i32, i32
  }
  func.func @transform_2(%arg0: i32, %arg1: i32) -> (i32, i32) {
    %c0_i32 = arith.constant 0 : i32
    %c0_i32_0 = arith.constant 0 : i32
    %c0_i32_1 = arith.constant 0 : i32
    return %c0_i32, %c0_i32_0 : i32, i32
  }
  func.func @transform_3(%arg0: i32, %arg1: i32) -> (i32, i32) {
    %c0_i32 = arith.constant 0 : i32
    %c0_i32_0 = arith.constant 0 : i32
    return %c0_i32, %arg1 : i32, i32
  }
  func.func @transform_4(%arg0: i32, %arg1: i32) -> (i32, i32) {
    %c0_i32 = arith.constant 0 : i32
    %c0_i32_0 = arith.constant 0 : i32
    return %c0_i32, %arg1 : i32, i32
  }
  func.func @transform_5(%arg0: i32, %arg1: i32) -> (i32, i32) {
    %c0_i32 = arith.constant 0 : i32
    return %arg0, %arg1 : i32, i32
  }
}

module attributes {stable_mosaic.version = 11 : i64} {
  func.func @_linear_res_kernel(%arg0: i32, %arg1: i32, %arg2: memref<24x32xbf16, #tpu.memory_space<vmem>>, %arg3: memref<32x32xbf16, #tpu.memory_space<vmem>>, %arg4: memref<1x32xf32, #tpu.memory_space<vmem>>, %arg5: memref<24x32xbf16, #tpu.memory_space<vmem>>, %arg6: memref<24x32xbf16, #tpu.memory_space<vmem>>) attributes {dimension_semantics = [#tpu.dimension_semantics<parallel>, #tpu.dimension_semantics<parallel>], iteration_bounds = array<i64: 1, 2>, scalar_prefetch = 0 : i64, scratch_operands = 0 : i64, tpu.core_type = #tpu.core_type<tc>, window_params = [{transform_indices = @transform_0, window_bounds = array<i64: 24, 32>}, {transform_indices = @transform_1, window_bounds = array<i64: 32, 32>}, {transform_indices = @transform_2, window_bounds = array<i64: 1, 32>}, {transform_indices = @transform_3, window_bounds = array<i64: 24, 32>}, {transform_indices = @transform_4, window_bounds = array<i64: 24, 32>}]} {
    %c0 = arith.constant 0 : index
    %c0_0 = arith.constant 0 : index
    %0 = vector.load %arg2[%c0, %c0_0] : memref<24x32xbf16, #tpu.memory_space<vmem>>, vector<24x32xbf16>
    %c0_1 = arith.constant 0 : index
    %c0_2 = arith.constant 0 : index
    %1 = vector.load %arg3[%c0_1, %c0_2] : memref<32x32xbf16, #tpu.memory_space<vmem>>, vector<32x32xbf16>
    %cst = arith.constant dense<0.000000e+00> : vector<24x32xf32>
    %2 = tpu.matmul %0, %1, %cst {dimension_numbers = #tpu.dot_dimension_numbers<[1], [0], [0], [1], [0, 0, 1, 1], [], []>} : vector<24x32xbf16>, vector<32x32xbf16>, vector<24x32xf32> -> vector<24x32xf32>
    %c0_3 = arith.constant 0 : index
    %c0_4 = arith.constant 0 : index
    %3 = vector.load %arg4[%c0_3, %c0_4] : memref<1x32xf32, #tpu.memory_space<vmem>>, vector<1x32xf32>
    %4 = vector.broadcast %3 : vector<1x32xf32> to vector<24x32xf32>
    %5 = arith.addf %2, %4 : vector<24x32xf32>
    %c0_5 = arith.constant 0 : index
    %c0_6 = arith.constant 0 : index
    %6 = vector.load %arg5[%c0_5, %c0_6] : memref<24x32xbf16, #tpu.memory_space<vmem>>, vector<24x32xbf16>
    %7 = arith.extf %6 : vector<24x32xbf16> to vector<24x32xf32>
    %8 = arith.addf %5, %7 : vector<24x32xf32>
    %9 = arith.truncf %8 : vector<24x32xf32> to vector<24x32xbf16>
    %c0_7 = arith.constant 0 : index
    %c0_8 = arith.constant 0 : index
    %10 = vector.load %arg6[%c0_7, %c0_8] : memref<24x32xbf16, #tpu.memory_space<vmem>>, vector<24x32xbf16>
    tpu.vector_store %arg6[%c0_7, %c0_8], %9 {strides = array<i32>} : memref<24x32xbf16, #tpu.memory_space<vmem>>, vector<24x32xbf16>,
    return
  }
  func.func @transform_0(%arg0: i32, %arg1: i32) -> (i32, i32) {
    %c0_i32 = arith.constant 0 : i32
    %c0_i32_0 = arith.constant 0 : i32
    return %arg1, %c0_i32 : i32, i32
  }
  func.func @transform_1(%arg0: i32, %arg1: i32) -> (i32, i32) {
    %c0_i32 = arith.constant 0 : i32
    %c0_i32_0 = arith.constant 0 : i32
    return %c0_i32, %arg0 : i32, i32
  }
  func.func @transform_2(%arg0: i32, %arg1: i32) -> (i32, i32) {
    %c0_i32 = arith.constant 0 : i32
    %c0_i32_0 = arith.constant 0 : i32
    return %c0_i32, %arg0 : i32, i32
  }
  func.func @transform_3(%arg0: i32, %arg1: i32) -> (i32, i32) {
    %c0_i32 = arith.constant 0 : i32
    return %arg1, %arg0 : i32, i32
  }
  func.func @transform_4(%arg0: i32, %arg1: i32) -> (i32, i32) {
    %c0_i32 = arith.constant 0 : i32
    return %arg1, %arg0 : i32, i32
  }
}

module attributes {stable_mosaic.version = 11 : i64} {
  func.func @_linear_res_kernel(%arg0: i32, %arg1: i32, %arg2: memref<24x64xbf16, #tpu.memory_space<vmem>>, %arg3: memref<64x32xbf16, #tpu.memory_space<vmem>>, %arg4: memref<1x32xf32, #tpu.memory_space<vmem>>, %arg5: memref<24x32xbf16, #tpu.memory_space<vmem>>, %arg6: memref<24x32xbf16, #tpu.memory_space<vmem>>) attributes {dimension_semantics = [#tpu.dimension_semantics<parallel>, #tpu.dimension_semantics<parallel>], iteration_bounds = array<i64: 1, 2>, scalar_prefetch = 0 : i64, scratch_operands = 0 : i64, tpu.core_type = #tpu.core_type<tc>, window_params = [{transform_indices = @transform_0, window_bounds = array<i64: 24, 64>}, {transform_indices = @transform_1, window_bounds = array<i64: 64, 32>}, {transform_indices = @transform_2, window_bounds = array<i64: 1, 32>}, {transform_indices = @transform_3, window_bounds = array<i64: 24, 32>}, {transform_indices = @transform_4, window_bounds = array<i64: 24, 32>}]} {
    %c0 = arith.constant 0 : index
    %c0_0 = arith.constant 0 : index
    %0 = vector.load %arg2[%c0, %c0_0] : memref<24x64xbf16, #tpu.memory_space<vmem>>, vector<24x64xbf16>
    %c0_1 = arith.constant 0 : index
    %c0_2 = arith.constant 0 : index
    %1 = vector.load %arg3[%c0_1, %c0_2] : memref<64x32xbf16, #tpu.memory_space<vmem>>, vector<64x32xbf16>
    %cst = arith.constant dense<0.000000e+00> : vector<24x32xf32>
    %2 = tpu.matmul %0, %1, %cst {dimension_numbers = #tpu.dot_dimension_numbers<[1], [0], [0], [1], [0, 0, 1, 1], [], []>} : vector<24x64xbf16>, vector<64x32xbf16>, vector<24x32xf32> -> vector<24x32xf32>
    %c0_3 = arith.constant 0 : index
    %c0_4 = arith.constant 0 : index
    %3 = vector.load %arg4[%c0_3, %c0_4] : memref<1x32xf32, #tpu.memory_space<vmem>>, vector<1x32xf32>
    %4 = vector.broadcast %3 : vector<1x32xf32> to vector<24x32xf32>
    %5 = arith.addf %2, %4 : vector<24x32xf32>
    %c0_5 = arith.constant 0 : index
    %c0_6 = arith.constant 0 : index
    %6 = vector.load %arg5[%c0_5, %c0_6] : memref<24x32xbf16, #tpu.memory_space<vmem>>, vector<24x32xbf16>
    %7 = arith.extf %6 : vector<24x32xbf16> to vector<24x32xf32>
    %8 = arith.addf %5, %7 : vector<24x32xf32>
    %9 = arith.truncf %8 : vector<24x32xf32> to vector<24x32xbf16>
    %c0_7 = arith.constant 0 : index
    %c0_8 = arith.constant 0 : index
    %10 = vector.load %arg6[%c0_7, %c0_8] : memref<24x32xbf16, #tpu.memory_space<vmem>>, vector<24x32xbf16>
    tpu.vector_store %arg6[%c0_7, %c0_8], %9 {strides = array<i32>} : memref<24x32xbf16, #tpu.memory_space<vmem>>, vector<24x32xbf16>,
    return
  }
  func.func @transform_0(%arg0: i32, %arg1: i32) -> (i32, i32) {
    %c0_i32 = arith.constant 0 : i32
    %c0_i32_0 = arith.constant 0 : i32
    return %arg1, %c0_i32 : i32, i32
  }
  func.func @transform_1(%arg0: i32, %arg1: i32) -> (i32, i32) {
    %c0_i32 = arith.constant 0 : i32
    %c0_i32_0 = arith.constant 0 : i32
    return %c0_i32, %arg0 : i32, i32
  }
  func.func @transform_2(%arg0: i32, %arg1: i32) -> (i32, i32) {
    %c0_i32 = arith.constant 0 : i32
    %c0_i32_0 = arith.constant 0 : i32
    return %c0_i32, %arg0 : i32, i32
  }
  func.func @transform_3(%arg0: i32, %arg1: i32) -> (i32, i32) {
    %c0_i32 = arith.constant 0 : i32
    return %arg1, %arg0 : i32, i32
  }
  func.func @transform_4(%arg0: i32, %arg1: i32) -> (i32, i32) {
    %c0_i32 = arith.constant 0 : i32
    return %arg1, %arg0 : i32, i32
  }
}

module attributes {stable_mosaic.version = 11 : i64} {
  func.func @_layernorm_kernel(%arg0: i32, %arg1: memref<2x32xf32, #tpu.memory_space<vmem>>, %arg2: memref<1x32xf32, #tpu.memory_space<vmem>>, %arg3: memref<1x32xf32, #tpu.memory_space<vmem>>, %arg4: memref<2x32xf32, #tpu.memory_space<vmem>>) attributes {dimension_semantics = [#tpu.dimension_semantics<parallel>], iteration_bounds = array<i64: 1>, scalar_prefetch = 0 : i64, scratch_operands = 0 : i64, tpu.core_type = #tpu.core_type<tc>, window_params = [{transform_indices = @transform_0, window_bounds = array<i64: 2, 32>}, {pipeline_mode = #tpu.pipeline_mode<synchronous>, transform_indices = @transform_1, window_bounds = array<i64: 1, 32>}, {pipeline_mode = #tpu.pipeline_mode<synchronous>, transform_indices = @transform_2, window_bounds = array<i64: 1, 32>}, {transform_indices = @transform_3, window_bounds = array<i64: 2, 32>}]} {
    %c0 = arith.constant 0 : index
    %c0_0 = arith.constant 0 : index
    %0 = vector.load %arg1[%c0, %c0_0] : memref<2x32xf32, #tpu.memory_space<vmem>>, vector<2x32xf32>
    %cst = arith.constant dense<0.000000e+00> : vector<2xf32>
    %1 = vector.multi_reduction <add>, %0, %cst [1] : vector<2x32xf32> to vector<2xf32>
    %2 = vector.shape_cast %1 : vector<2xf32> to vector<2x1xf32>
    %cst_1 = arith.constant 3.200000e+01 : f32
    %3 = vector.broadcast %cst_1 : f32 to vector<2x1xf32>
    %4 = arith.divf %2, %3 : vector<2x1xf32>
    %5 = vector.broadcast %4 : vector<2x1xf32> to vector<2x32xf32>
    %6 = arith.subf %0, %5 : vector<2x32xf32>
    %7 = arith.mulf %6, %6 : vector<2x32xf32>
    %cst_2 = arith.constant dense<0.000000e+00> : vector<2xf32>
    %8 = vector.multi_reduction <add>, %7, %cst_2 [1] : vector<2x32xf32> to vector<2xf32>
    %9 = vector.shape_cast %8 : vector<2xf32> to vector<2x1xf32>
    %cst_3 = arith.constant 3.200000e+01 : f32
    %10 = vector.broadcast %cst_3 : f32 to vector<2x1xf32>
    %11 = arith.divf %9, %10 : vector<2x1xf32>
    %12 = vector.broadcast %4 : vector<2x1xf32> to vector<2x32xf32>
    %13 = arith.subf %0, %12 : vector<2x32xf32>
    %cst_4 = arith.constant 9.99999974E-6 : f32
    %14 = vector.broadcast %cst_4 : f32 to vector<2x1xf32>
    %15 = arith.addf %11, %14 : vector<2x1xf32>
    %16 = math.rsqrt %15 : vector<2x1xf32>
    %17 = vector.broadcast %16 : vector<2x1xf32> to vector<2x32xf32>
    %18 = arith.mulf %13, %17 : vector<2x32xf32>
    %c0_5 = arith.constant 0 : index
    %c0_6 = arith.constant 0 : index
    %19 = vector.load %arg2[%c0_5, %c0_6] : memref<1x32xf32, #tpu.memory_space<vmem>>, vector<1x32xf32>
    %20 = vector.broadcast %19 : vector<1x32xf32> to vector<2x32xf32>
    %21 = arith.mulf %18, %20 : vector<2x32xf32>
    %c0_7 = arith.constant 0 : index
    %c0_8 = arith.constant 0 : index
    %22 = vector.load %arg3[%c0_7, %c0_8] : memref<1x32xf32, #tpu.memory_space<vmem>>, vector<1x32xf32>
    %23 = vector.broadcast %22 : vector<1x32xf32> to vector<2x32xf32>
    %24 = arith.addf %21, %23 : vector<2x32xf32>
    %c0_9 = arith.constant 0 : index
    %c0_10 = arith.constant 0 : index
    %25 = vector.load %arg4[%c0_9, %c0_10] : memref<2x32xf32, #tpu.memory_space<vmem>>, vector<2x32xf32>
    tpu.vector_store %arg4[%c0_9, %c0_10], %24 {strides = array<i32>} : memref<2x32xf32, #tpu.memory_space<vmem>>, vector<2x32xf32>,
    return
  }
  func.func @transform_0(%arg0: i32) -> (i32, i32) {
    %c0_i32 = arith.constant 0 : i32
    %c0_i32_0 = arith.constant 0 : i32
    return %arg0, %c0_i32 : i32, i32
  }
  func.func @transform_1(%arg0: i32) -> (i32, i32) {
    %c0_i32 = arith.constant 0 : i32
    %c0_i32_0 = arith.constant 0 : i32
    %c0_i32_1 = arith.constant 0 : i32
    return %c0_i32, %c0_i32_0 : i32, i32
  }
  func.func @transform_2(%arg0: i32) -> (i32, i32) {
    %c0_i32 = arith.constant 0 : i32
    %c0_i32_0 = arith.constant 0 : i32
    %c0_i32_1 = arith.constant 0 : i32
    return %c0_i32, %c0_i32_0 : i32, i32
  }
  func.func @transform_3(%arg0: i32) -> (i32, i32) {
    %c0_i32 = arith.constant 0 : i32
    %c0_i32_0 = arith.constant 0 : i32
    return %arg0, %c0_i32 : i32, i32
  }
}

</mosaic_0001>

<llo_original>
// kernel: clip_vision_forward.14
$region0: #{clip_vision_forward.14}
  #allocation0 [shape = 'u32[]', space=smem, size = 0x4, offset = 0x4, fixed_abs, tag = 'smem constant byte address 0x4 - core index']
  #allocation1 [shape = 'u32[72,128]{1,0:T(1,128)}', space=vmem, size = 0x9000, scoped, tag = 'internal scratch']
  %s0 = inlined_call_operand.vmem [shape: f32[48,32], index: 0, kind: input, shape index: {}]
  %s1 = inlined_call_operand.vmem [shape: f32[1,32], index: 1, kind: input, shape index: {}]
  %s2 = inlined_call_operand.vmem [shape: f32[1,32], index: 2, kind: input, shape index: {}]
  %s3 = inlined_call_operand.vmem [shape: bf16[48,32], index: 3, kind: output, shape index: {}]
  %s4 = sld [smem:[#allocation0]]
  $region45: #{clip_vision_forward.14} parent=0
    _
  %s6 = ssub.s32 1, %s4
  %s7 = scalar_select 0, %s6, %s4
  loop: start=0, step=1, limit=4
  $region2: #{clip_vision_forward.14} parent=0 // loop_pre_header
    _
  $region3: #{clip_vision_forward.14} parent=0 // loop_header
    %s9 = sphi 0, %s13
    %p10 = scmp.ge.s32.totalorder %s9, 4
    %s19 = sphi 0, %s21
    %s22 = sphi 0, %s19
    %s23 = sphi 0, %s22
    %s39 = sphi 0, %s23
    %s43 = sphi 0, %s43
    %s45 = sphi 0, %s43
    %s46 = sphi 0, %s45
    %s60 = sphi 0, %s46
    %s64 = sphi 0, %s64
    %s66 = sphi 0, %s64
    %s67 = sphi 0, %s66
    %s81 = sphi 0, %s67
    %s87 = sphi 0, %s89
    %s90 = sphi 0, %s87
    %s91 = sphi 0, %s90
    %s107 = sphi 0, %s91
  $region4: #{clip_vision_forward.14} parent=0 // loop_header_branch
    %12 = sbr.rel (%p10) target = $region8
  $region5: #{clip_vision_forward.14} parent=0 // loop_body
    %s14 = ssub.s32 %s9, 1
    %s15 = ssub.s32 %s9, 2
    %s16 = sadd.s32 %s9, 1
    %s17 = ssub.s32 %s9, %s16
    %p18 = scmp.eq.s32.totalorder %s17, 0
    %s20 = sadd.s32 %s19, 1
    %s21 = scalar_select %p18, %s19, %s20
    %p24 = pneg %p18
    %p25 = scmp.eq.s32.totalorder %s9, 1
    %p26 = por %p24, %p25
    %p27 = scmp.ne.s32.totalorder %s19, %s22
    %p28 = scmp.eq.s32.totalorder %s9, 0
    %p29 = por %p27, %p28
    %p30 = scmp.ne.s32.totalorder %s19, %s22
    %p31 = scmp.eq.s32.totalorder %s14, 1
    %p32 = por %p30, %p31
    %p33 = scmp.ne.s32.totalorder %s22, %s23
    %p34 = scmp.eq.s32.totalorder %s14, 0
    %p35 = por %p33, %p34
    %p36 = scmp.ne.s32.totalorder %s22, %s23
    %p37 = scmp.eq.s32.totalorder %s15, 1
    %p38 = por %p36, %p37
    %p40 = scmp.ne.s32.totalorder %s23, %s39
    %p41 = scmp.eq.s32.totalorder %s15, 0
    %p42 = por %p40, %p41
    %s44 = sadd.s32 %s43, 1
    %p47 = scmp.eq.s32.totalorder %s9, 1
    %p48 = scmp.ne.s32.totalorder %s43, %s45
    %p49 = scmp.eq.s32.totalorder %s9, 0
    %p50 = por %p48, %p49
    %p51 = scmp.ne.s32.totalorder %s43, %s45
    %p52 = scmp.eq.s32.totalorder %s14, 1
    %p53 = por %p51, %p52
    %p54 = scmp.ne.s32.totalorder %s45, %s46
    %p55 = scmp.eq.s32.totalorder %s14, 0
    %p56 = por %p54, %p55
    %p57 = scmp.ne.s32.totalorder %s45, %s46
    %p58 = scmp.eq.s32.totalorder %s15, 1
    %p59 = por %p57, %p58
    %p61 = scmp.ne.s32.totalorder %s46, %s60
    %p62 = scmp.eq.s32.totalorder %s15, 0
    %p63 = por %p61, %p62
    %s65 = sadd.s32 %s64, 1
    %p68 = scmp.eq.s32.totalorder %s9, 1
    %p69 = scmp.ne.s32.totalorder %s64, %s66
    %p70 = scmp.eq.s32.totalorder %s9, 0
    %p71 = por %p69, %p70
    %p72 = scmp.ne.s32.totalorder %s64, %s66
    %p73 = scmp.eq.s32.totalorder %s14, 1
    %p74 = por %p72, %p73
    %p75 = scmp.ne.s32.totalorder %s66, %s67
    %p76 = scmp.eq.s32.totalorder %s14, 0
    %p77 = por %p75, %p76
    %p78 = scmp.ne.s32.totalorder %s66, %s67
    %p79 = scmp.eq.s32.totalorder %s15, 1
    %p80 = por %p78, %p79
    %p82 = scmp.ne.s32.totalorder %s67, %s81
    %p83 = scmp.eq.s32.totalorder %s15, 0
    %p84 = por %p82, %p83
    %s85 = ssub.s32 %s9, %s16
    %p86 = scmp.eq.s32.totalorder %s85, 0
    %s88 = sadd.s32 %s87, 1
    %s89 = scalar_select %p86, %s87, %s88
    %p92 = pneg %p86
    %p93 = scmp.eq.s32.totalorder %s9, 1
    %p94 = por %p92, %p93
    %p95 = scmp.ne.s32.totalorder %s87, %s90
    %p96 = scmp.eq.s32.totalorder %s9, 0
    %p97 = por %p95, %p96
    %p98 = scmp.ne.s32.totalorder %s87, %s90
    %p99 = scmp.eq.s32.totalorder %s14, 1
    %p100 = por %p98, %p99
    %p101 = scmp.ne.s32.totalorder %s90, %s91
    %p102 = scmp.eq.s32.totalorder %s14, 0
    %p103 = por %p101, %p102
    %p104 = scmp.ne.s32.totalorder %s90, %s91
    %p105 = scmp.eq.s32.totalorder %s15, 1
    %p106 = por %p104, %p105
    %p108 = scmp.ne.s32.totalorder %s91, %s107
    %p109 = scmp.eq.s32.totalorder %s15, 0
    %p110 = por %p108, %p109
    %p111 = scmp.le.s32.totalorder 1, %s9
    %p112 = scmp.lt.s32.totalorder %s9, 3
    %p113 = pnand %p111, %p112
    %p114 = pneg %p113
    // Predicated region
    $region9: #{clip_vision_forward.14} parent=5 // pred_check
      _
    $region10: #{clip_vision_forward.14} parent=5 // pred_check_branch
      %116 = sbr.rel (%p113) target = $region12
    $region11: #{clip_vision_forward.14} parent=5 // pred_region
      %s117 = ssub.s32 %s9, 1
      // Predicated region
      $region13: #{clip_vision_forward.14} parent=11 // pred_check
        %p118 = pneg %p56
      $region14: #{clip_vision_forward.14} parent=11 // pred_check_branch
        %120 = sbr.rel (%p118) target = $region16
      $region15: #{clip_vision_forward.14} parent=11 // pred_region
        _
      $region16: #{clip_vision_forward.14} parent=11 // pred_fallthru
        _
      // Predicated region
      $region17: #{clip_vision_forward.14} parent=11 // pred_check
        %p121 = pneg %p77
      $region18: #{clip_vision_forward.14} parent=11 // pred_check_branch
        %123 = sbr.rel (%p121) target = $region20
      $region19: #{clip_vision_forward.14} parent=11 // pred_region
        _
      $region20: #{clip_vision_forward.14} parent=11 // pred_fallthru
        _
    $region12: #{clip_vision_forward.14} parent=5 // pred_fallthru
      _
    %p124 = scmp.lt.s32.totalorder %s9, 2
    // Predicated region
    $region21: #{clip_vision_forward.14} parent=5 // pred_check
      %p125 = pneg %p124
    $region22: #{clip_vision_forward.14} parent=5 // pred_check_branch
      %127 = sbr.rel (%p125) target = $region24
    $region23: #{clip_vision_forward.14} parent=5 // pred_region
      // Predicated region
      $region25: #{clip_vision_forward.14} parent=23 // pred_check
        %p128 = pneg %p29
      $region26: #{clip_vision_forward.14} parent=23 // pred_check_branch
        %130 = sbr.rel (%p128) target = $region28
      $region27: #{clip_vision_forward.14} parent=23 // pred_region
        %s131 = smul.u32 3, %s9
        %p132 = scmp.lt.s32.totalorder %s131, 5
        %s133 = scalar_select %p132, %s131, 5
        %s134 = smul.addr %s133, 8
        %s135 = scalar_lea.vmem %s0, %s134
        %s136 = smul.u32 3, %s9
      $region28: #{clip_vision_forward.14} parent=23 // pred_fallthru
        _
    $region24: #{clip_vision_forward.14} parent=5 // pred_fallthru
      _
    %p137 = scmp.le.s32.totalorder 1, %s9
    %p138 = scmp.lt.s32.totalorder %s9, 3
    %p139 = pnand %p137, %p138
    %p140 = pneg %p139
    // Predicated region
    $region29: #{clip_vision_forward.14} parent=5 // pred_check
      _
    $region30: #{clip_vision_forward.14} parent=5 // pred_check_branch
      %142 = sbr.rel (%p139) target = $region32
    $region31: #{clip_vision_forward.14} parent=5 // pred_region
      %s143 = ssub.s32 %s9, 1
      %s144 = smul.u32 3, %s14
      %p145 = scmp.lt.s32.totalorder %s144, 5
      %s146 = scalar_select %p145, %s144, 5
      %s147 = smul.addr %s146, 8
      %s148 = scalar_lea.vmem %s0, %s147
      %p149 = pneg %p35
      %p150 = pneg %p32
      %p151 = pneg %p56
      %p152 = pneg %p53
      %p153 = pneg %p77
      %p154 = pneg %p74
      %p155 = pneg %p103
      %p156 = pneg %p100
      %s157 = smul.u32 3, %s14
      %p158 = scmp.lt.s32.totalorder %s157, 5
      %s159 = scalar_select %p158, %s157, 5
      %s160 = smul.addr %s159, 4
      %s161 = scalar_lea.vmem %s3, %s160
      %s162 = smul.u32 3, %s14
      %p163 = scmp.lt.s32.totalorder %s162, 5
      %s164 = scalar_select %p163, %s162, 5
      %s165 = smul.addr %s164, 8
      %s166 = scalar_lea.vmem %s0, %s165
      %s167 = smul.u32 3, %s14
      %s168 = smul.u32 3, %s14
      %p169 = scmp.lt.s32.totalorder %s168, 5
      %s170 = scalar_select %p169, %s168, 5
      %s171 = smul.addr %s170, 4
      %s172 = scalar_lea.vmem %s3, %s171
      %s173 = smul.u32 3, %s14
      %v174 = vld [vmem:[%s166] sm:$0xff]
      %v175 = vld [vmem:[%s166 + $0x8] sm:$0xff]
      %v176 = vld [vmem:[%s166 + $0x10] sm:$0xff]
      %vm177 = vcmask 261120
      %v178 = vsel %vm177, %v174, 0.0
      %179 = vadd.xlane.f32.xlu0 %v178
      %v180 = vpop.xlane.xlu0 %179
      %v181 = vsel %vm177, %v175, 0.0
      %182 = vadd.xlane.f32.xlu0 %v181
      %v183 = vpop.xlane.xlu0 %182
      %v184 = vsel %vm177, %v176, 0.0
      %185 = vadd.xlane.f32.xlu0 %v184
      %v186 = vpop.xlane.xlu0 %185
      %v187 = vrcp.pop 32.0
      %v188 = vmul.f32 32.0, %v187
      %v189 = vsub.f32 1.0, %v188
      %v190 = vmul.f32 %v187, %v189
      %v191 = vadd.f32 %v187, %v190
      %vm192 = vweird.f32 %v187
      %v193 = vsel %vm192, %v187, %v191
      %v194 = vmul.f32 %v180, %v193
      %v195 = vmul.f32 %v183, %v193
      %v196 = vmul.f32 %v186, %v193
      %v197 = vsub.f32 %v174, %v194
      %v198 = vsub.f32 %v175, %v195
      %v199 = vsub.f32 %v176, %v196
      %v200 = vmul.f32 %v197, %v197
      %v201 = vmul.f32 %v198, %v198
      %v202 = vmul.f32 %v199, %v199
      %v203 = vsel %vm177, %v200, 0.0
      %204 = vadd.xlane.f32.xlu0 %v203
      %v205 = vpop.xlane.xlu0 %204
      %v206 = vsel %vm177, %v201, 0.0
      %207 = vadd.xlane.f32.xlu0 %v206
      %v208 = vpop.xlane.xlu0 %207
      %v209 = vsel %vm177, %v202, 0.0
      %210 = vadd.xlane.f32.xlu0 %v209
      %v211 = vpop.xlane.xlu0 %210
      %v212 = vmul.f32 %v205, %v193
      %v213 = vmul.f32 %v208, %v193
      %v214 = vmul.f32 %v211, %v193
      %v215 = vadd.f32 %v212, 1e-05
      %v216 = vadd.f32 %v213, 1e-05
      %v217 = vadd.f32 %v214, 1e-05
      %v218 = vrsqrt.pop %v215
      %v219 = vmul.f32 %v218, %v215
      %v220 = vmul.f32 %v219, %v218
      %v221 = vmul.f32 0.5, %v220
      %v222 = vsub.f32 1.5, %v221
      %v223 = vmul.f32 %v218, %v222
      %vm224 = vweird.f32 %v215
      %vm225 = vweird.f32 %v218
      %vm226 = vmor %vm224, %vm225
      %v227 = vsel %vm226, %v218, %v223
      %v228 = vrsqrt.pop %v216
      %v229 = vmul.f32 %v228, %v216
      %v230 = vmul.f32 %v229, %v228
      %v231 = vmul.f32 0.5, %v230
      %v232 = vsub.f32 1.5, %v231
      %v233 = vmul.f32 %v228, %v232
      %vm234 = vweird.f32 %v216
      %vm235 = vweird.f32 %v228
      %vm236 = vmor %vm234, %vm235
      %v237 = vsel %vm236, %v228, %v233
      %v238 = vrsqrt.pop %v217
      %v239 = vmul.f32 %v238, %v217
      %v240 = vmul.f32 %v239, %v238
      %v241 = vmul.f32 0.5, %v240
      %v242 = vsub.f32 1.5, %v241
      %v243 = vmul.f32 %v238, %v242
      %vm244 = vweird.f32 %v217
      %vm245 = vweird.f32 %v238
      %vm246 = vmor %vm244, %vm245
      %v247 = vsel %vm246, %v238, %v243
      %v248 = vmul.f32 %v197, %v227
      %v249 = vmul.f32 %v198, %v237
      %v250 = vmul.f32 %v199, %v247
      %v251 = vld [vmem:[%s1] sm:$0x1]
      %v253 = vperm.slane %v251, 0
      %v255 = vmul.f32 %v248, %v253
      %v256 = vmul.f32 %v249, %v253
      %v257 = vmul.f32 %v250, %v253
      %v258 = vld [vmem:[%s2] sm:$0x1]
      %v260 = vperm.slane %v258, 0
      %v262 = vadd.f32 %v255, %v260
      %v263 = vadd.f32 %v256, %v260
      %v264 = vadd.f32 %v257, %v260
      %v265 = vpack.c.bf16 %v262, %v262
      %v266 = vpack.c.bf16 %v263, %v263
      %v267 = vpack.c.bf16 %v264, %v264
      %vm268 = vcmask 257024
      %269 = vst.msk [vmem:[%s172] sm:$0xf] %vm268, %v265
      %270 = vst.msk [vmem:[%s172 + $0x4] sm:$0xf] %vm268, %v266
      %271 = vst.msk [vmem:[%s172 + $0x8] sm:$0xf] %vm268, %v267
      %s272 = smul.u32 3, %s14
      %p273 = scmp.lt.s32.totalorder %s272, 5
      %s274 = scalar_select %p273, %s272, 5
      %s275 = smul.addr %s274, 4
      %s276 = scalar_lea.vmem %s3, %s275
      // Predicated region
      $region33: #{clip_vision_forward.14} parent=31 // pred_check
        %p277 = pneg %p100
      $region34: #{clip_vision_forward.14} parent=31 // pred_check_branch
        %279 = sbr.rel (%p277) target = $region36
      $region35: #{clip_vision_forward.14} parent=31 // pred_region
        %s280 = smul.u32 3, %s14
      $region36: #{clip_vision_forward.14} parent=31 // pred_fallthru
        _
    $region32: #{clip_vision_forward.14} parent=5 // pred_fallthru
      _
    %p281 = scmp.le.s32.totalorder 2, %s9
    // Predicated region
    $region37: #{clip_vision_forward.14} parent=5 // pred_check
      %p282 = pneg %p281
    $region38: #{clip_vision_forward.14} parent=5 // pred_check_branch
      %284 = sbr.rel (%p282) target = $region40
    $region39: #{clip_vision_forward.14} parent=5 // pred_region
      %s285 = ssub.s32 %s9, 2
      // Predicated region
      $region41: #{clip_vision_forward.14} parent=39 // pred_check
        %p286 = pneg %p106
      $region42: #{clip_vision_forward.14} parent=39 // pred_check_branch
        %288 = sbr.rel (%p286) target = $region44
      $region43: #{clip_vision_forward.14} parent=39 // pred_region
        %s289 = smul.u32 3, %s15
        %p290 = scmp.lt.s32.totalorder %s289, 5
        %s291 = scalar_select %p290, %s289, 5
        %s292 = smul.addr %s291, 4
        %s293 = scalar_lea.vmem %s3, %s292
      $region44: #{clip_vision_forward.14} parent=39 // pred_fallthru
        _
    $region40: #{clip_vision_forward.14} parent=5 // pred_fallthru
      _
  $region6: #{clip_vision_forward.14} parent=0 // loop_footer
    %s13 = sadd.s32 1, %s9
  $region7: #{clip_vision_forward.14} parent=0 // loop_footer_branch
    %8 = sbr.rel target = $region3
  $region8: #{clip_vision_forward.14} parent=0 // loop_exit
    _

// kernel: clip_vision_forward.13
$region0: #{clip_vision_forward.13}
  #allocation0 [shape = 'u32[]', space=smem, size = 0x4, offset = 0x4, fixed_abs, tag = 'smem constant byte address 0x4 - core index']
  #allocation1 [shape = 'u32[72,128]{1,0:T(1,128)}', space=vmem, size = 0x9000, scoped, tag = 'internal scratch']
  %s0 = inlined_call_operand.vmem [shape: bf16[32,192], index: 0, kind: input, shape index: {}]
  %s1 = inlined_call_operand.vmem [shape: bf16[192,32], index: 1, kind: input, shape index: {}]
  %s2 = inlined_call_operand.vmem [shape: f32[1,32], index: 2, kind: input, shape index: {}]
  %s3 = inlined_call_operand.vmem [shape: bf16[32,32], index: 3, kind: output, shape index: {}]
  %s4 = sld [smem:[#allocation0]]
  $region22: #{clip_vision_forward.13} parent=0
    _
  %s6 = ssub.s32 1, %s4
  %s7 = scalar_select 0, %s6, %s4
  // Predicated region
  $region2: #{clip_vision_forward.13} parent=0 // pred_check
    _
  $region3: #{clip_vision_forward.13} parent=0 // pred_check_branch
    %9 = sbr.rel (0) target = $region5
  $region4: #{clip_vision_forward.13} parent=0 // pred_region
    _
  $region5: #{clip_vision_forward.13} parent=0 // pred_fallthru
    _
  // Predicated region
  $region6: #{clip_vision_forward.13} parent=0 // pred_check
    _
  $region7: #{clip_vision_forward.13} parent=0 // pred_check_branch
    %11 = sbr.rel (0) target = $region9
  $region8: #{clip_vision_forward.13} parent=0 // pred_region
    _
  $region9: #{clip_vision_forward.13} parent=0 // pred_fallthru
    _
  // Predicated region
  $region10: #{clip_vision_forward.13} parent=0 // pred_check
    _
  $region11: #{clip_vision_forward.13} parent=0 // pred_check_branch
    %13 = sbr.rel (0) target = $region13
  $region12: #{clip_vision_forward.13} parent=0 // pred_region
    _
  $region13: #{clip_vision_forward.13} parent=0 // pred_fallthru
    _
  %v15 = vld [vmem:[%s0] sm:$0xff]
  %v16 = vld [vmem:[%s0 + $0x8] sm:$0xff]
  %v17 = vld [vmem:[%s0 + $0x10] sm:$0xff]
  %v18 = vld [vmem:[%s0 + $0x18] sm:$0xff]
  %v19 = vld [vmem:[%s1] sm:$0xf]
  %v20 = vld [vmem:[%s1 + $0x4] sm:$0xf]
  %v21 = vld [vmem:[%s1 + $0x8] sm:$0xf]
  %v22 = vld [vmem:[%s1 + $0xc] sm:$0xf]
  %v23 = vld [vmem:[%s1 + $0x10] sm:$0xf]
  %v24 = vld [vmem:[%s1 + $0x14] sm:$0xf]
  %v25 = vld [vmem:[%s1 + $0x18] sm:$0xf]
  %v26 = vld [vmem:[%s1 + $0x1c] sm:$0xf]
  %v27 = vld [vmem:[%s1 + $0x20] sm:$0xf]
  %v28 = vld [vmem:[%s1 + $0x24] sm:$0xf]
  %v29 = vld [vmem:[%s1 + $0x28] sm:$0xf]
  %v30 = vld [vmem:[%s1 + $0x2c] sm:$0xf]
  %v31 = vld [vmem:[%s1 + $0x30] sm:$0xf]
  %v32 = vld [vmem:[%s1 + $0x34] sm:$0xf]
  %v33 = vld [vmem:[%s1 + $0x38] sm:$0xf]
  %v34 = vld [vmem:[%s1 + $0x3c] sm:$0xf]
  %v35 = vld [vmem:[%s1 + $0x40] sm:$0xf]
  %v36 = vld [vmem:[%s1 + $0x44] sm:$0xf]
  %v37 = vld [vmem:[%s1 + $0x48] sm:$0xf]
  %v38 = vld [vmem:[%s1 + $0x4c] sm:$0xf]
  %v39 = vld [vmem:[%s1 + $0x50] sm:$0xf]
  %v40 = vld [vmem:[%s1 + $0x54] sm:$0xf]
  %v41 = vld [vmem:[%s1 + $0x58] sm:$0xf]
  %v42 = vld [vmem:[%s1 + $0x5c] sm:$0xf]
  %v43 = vld [vmem:[%s2] sm:$0x1]
  %v45 = vperm.slane %v43, 0
  %v51 = vunpack.c.l.b16 %v15
  %v52 = vunpack.c.h.b16 %v15
  %v53 = vunpack.c.l.b16 %v16
  %v54 = vunpack.c.h.b16 %v16
  %v55 = vunpack.c.l.b16 %v17
  %v56 = vunpack.c.h.b16 %v17
  %v57 = vunpack.c.l.b16 %v18
  %v58 = vunpack.c.h.b16 %v18
  %v59 = vpack.c.b16 %v53, %v51
  %v60 = vpack.c.b16 %v54, %v52
  %v61 = vpack.c.b16 %v57, %v55
  %v62 = vpack.c.b16 %v58, %v56
  %v89 = vunpack.c.l.b16 %v19
  %v90 = vunpack.c.l.b16 %v20
  %v91 = vunpack.c.l.b16 %v21
  %v92 = vunpack.c.l.b16 %v22
  %v93 = vunpack.c.l.b16 %v23
  %v94 = vunpack.c.l.b16 %v24
  %v95 = vunpack.c.l.b16 %v25
  %v96 = vunpack.c.l.b16 %v26
  %v97 = vunpack.c.l.b16 %v27
  %v98 = vunpack.c.l.b16 %v28
  %v99 = vunpack.c.l.b16 %v29
  %v100 = vunpack.c.l.b16 %v30
  %v101 = vunpack.c.l.b16 %v31
  %v102 = vunpack.c.l.b16 %v32
  %v103 = vunpack.c.l.b16 %v33
  %v104 = vunpack.c.l.b16 %v34
  %v105 = vunpack.c.l.b16 %v35
  %v106 = vunpack.c.l.b16 %v36
  %v107 = vunpack.c.l.b16 %v37
  %v108 = vunpack.c.l.b16 %v38
  %v109 = vunpack.c.l.b16 %v39
  %v110 = vunpack.c.l.b16 %v40
  %v111 = vunpack.c.l.b16 %v41
  %v112 = vunpack.c.l.b16 %v42
  %v113 = vpack.c.b16 %v90, %v89
  %v114 = vpack.c.b16 %v92, %v91
  %v115 = vpack.c.b16 %v94, %v93
  %v116 = vpack.c.b16 %v96, %v95
  %v117 = vpack.c.b16 %v98, %v97
  %v118 = vpack.c.b16 %v100, %v99
  %v119 = vpack.c.b16 %v102, %v101
  %v120 = vpack.c.b16 %v104, %v103
  %v121 = vpack.c.b16 %v106, %v105
  %v122 = vpack.c.b16 %v108, %v107
  %v123 = vpack.c.b16 %v110, %v109
  %v124 = vpack.c.b16 %v112, %v111
  %vm137 = vcmask 523264
  %v139 = vsel %vm137, %v60, 0
  %v142 = vsel %vm137, %v62, 0
  %144 = vmatpush.bf16.msra.mxu0 %v120
  %145 = vmatpush.bf16.msra.mxu0 %v119
  %146 = vmatpush.bf16.msra.mxu0 %v118
  %147 = vmatpush.bf16.msra.mxu0 %v117
  %148 = vmatpush.bf16.msra.mxu0 %v116
  %149 = vmatpush.bf16.msra.mxu0 %v115
  %150 = vmatpush.bf16.msra.mxu0 %v114
  %151 = vmatpush.bf16.msra.mxu0 %v113
  %152 = vmatmul.bf16.gmra.mxu0 %v59
  %v153 = vpop.f32.mrf.mxu0
  %v154 = vadd.f32 %v45, %v153
  %v155 = vpop.f32.mrf.mxu0
  %v156 = vadd.f32 %v45, %v155
  %157 = vmatmul.bf16.gmra.mxu0 %v61
  %v158 = vpop.f32.mrf.mxu0
  %v159 = vadd.f32 %v45, %v158
  %v160 = vpop.f32.mrf.mxu0
  %v161 = vadd.f32 %v45, %v160
  %162 = vdwg.mxu0
  %163 = vmatpush.bf16.msra.mxu0 0
  %164 = vmatpush.bf16.msra.mxu0 0
  %165 = vmatpush.bf16.msra.mxu0 0
  %166 = vmatpush.bf16.msra.mxu0 0
  %167 = vmatpush.bf16.msra.mxu0 %v124
  %168 = vmatpush.bf16.msra.mxu0 %v123
  %169 = vmatpush.bf16.msra.mxu0 %v122
  %170 = vmatpush.bf16.msra.mxu0 %v121
  %171 = vmatmul.bf16.gmra.mxu0 %v139
  %v172 = vpop.f32.mrf.mxu0
  %v173 = vadd.f32 %v154, %v172
  %v174 = vpop.f32.mrf.mxu0
  %v175 = vadd.f32 %v156, %v174
  %176 = vmatmul.bf16.gmra.mxu0 %v142
  %v177 = vpop.f32.mrf.mxu0
  %v178 = vadd.f32 %v159, %v177
  %v179 = vpop.f32.mrf.mxu0
  %v180 = vadd.f32 %v161, %v179
  %181 = vdwg.mxu0
  %v182 = vpack.c.bf16 %v173, %v173
  %v183 = vpack.c.bf16 %v175, %v175
  %v184 = vpack.c.bf16 %v178, %v178
  %v185 = vpack.c.bf16 %v180, %v180
  %vm186 = vcmask 257024
  %187 = vst.msk [vmem:[%s3] sm:$0xf] %vm186, %v182
  %188 = vst.msk [vmem:[%s3 + $0x4] sm:$0xf] %vm186, %v183
  %189 = vst.msk [vmem:[%s3 + $0x8] sm:$0xf] %vm186, %v184
  %190 = vst.msk [vmem:[%s3 + $0xc] sm:$0xf] %vm186, %v185
  // Predicated region
  $region14: #{clip_vision_forward.13} parent=0 // pred_check
    _
  $region15: #{clip_vision_forward.13} parent=0 // pred_check_branch
    %192 = sbr.rel (0) target = $region17
  $region16: #{clip_vision_forward.13} parent=0 // pred_region
    _
  $region17: #{clip_vision_forward.13} parent=0 // pred_fallthru
    _
  // Predicated region
  $region18: #{clip_vision_forward.13} parent=0 // pred_check
    _
  $region19: #{clip_vision_forward.13} parent=0 // pred_check_branch
    %194 = sbr.rel (0) target = $region21
  $region20: #{clip_vision_forward.13} parent=0 // pred_region
    _
  $region21: #{clip_vision_forward.13} parent=0 // pred_fallthru
    _

// kernel: clip_vision_forward.15
$region0: #{clip_vision_forward.15}
  #allocation0 [shape = 'u32[]', space=smem, size = 0x4, offset = 0x4, fixed_abs, tag = 'smem constant byte address 0x4 - core index']
  #allocation1 [shape = 'u32[72,128]{1,0:T(1,128)}', space=vmem, size = 0x9000, scoped, tag = 'internal scratch']
  %s0 = inlined_call_operand.vmem [shape: bf16[48,32], index: 0, kind: input, shape index: {}]
  %s1 = inlined_call_operand.vmem [shape: f32[1,32], index: 1, kind: input, shape index: {}]
  %s2 = inlined_call_operand.vmem [shape: f32[1,32], index: 2, kind: input, shape index: {}]
  %s3 = inlined_call_operand.vmem [shape: bf16[32,96], index: 3, kind: input, shape index: {}]
  %s4 = inlined_call_operand.vmem [shape: f32[1,96], index: 4, kind: input, shape index: {}]
  %s5 = inlined_call_operand.vmem [shape: bf16[48,32], index: 5, kind: output, shape index: {0}]
  %s6 = inlined_call_operand.vmem [shape: bf16[48,32], index: 6, kind: output, shape index: {1}]
  %s7 = inlined_call_operand.vmem [shape: bf16[48,32], index: 7, kind: output, shape index: {2}]
  %8 = xla_tuple %s5, %s6, %s7
  %s9 = sld [smem:[#allocation0]]
  $region69: #{clip_vision_forward.15} parent=0
    _
  %s11 = ssub.s32 1, %s9
  %s12 = scalar_select 0, %s11, %s9
  loop: start=0, step=1, limit=4
  $region2: #{clip_vision_forward.15} parent=0 // loop_pre_header
    _
  $region3: #{clip_vision_forward.15} parent=0 // loop_header
    %s14 = sphi 0, %s18
    %p15 = scmp.ge.s32.totalorder %s14, 4
    %s24 = sphi 0, %s26
    %s27 = sphi 0, %s24
    %s28 = sphi 0, %s27
    %s44 = sphi 0, %s28
    %s48 = sphi 0, %s48
    %s50 = sphi 0, %s48
    %s51 = sphi 0, %s50
    %s65 = sphi 0, %s51
    %s69 = sphi 0, %s69
    %s71 = sphi 0, %s69
    %s72 = sphi 0, %s71
    %s86 = sphi 0, %s72
    %s90 = sphi 0, %s90
    %s92 = sphi 0, %s90
    %s93 = sphi 0, %s92
    %s107 = sphi 0, %s93
    %s111 = sphi 0, %s111
    %s113 = sphi 0, %s111
    %s114 = sphi 0, %s113
    %s128 = sphi 0, %s114
    %s134 = sphi 0, %s136
    %s137 = sphi 0, %s134
    %s138 = sphi 0, %s137
    %s154 = sphi 0, %s138
    %s160 = sphi 0, %s162
    %s163 = sphi 0, %s160
    %s164 = sphi 0, %s163
    %s180 = sphi 0, %s164
    %s186 = sphi 0, %s188
    %s189 = sphi 0, %s186
    %s190 = sphi 0, %s189
    %s206 = sphi 0, %s190
  $region4: #{clip_vision_forward.15} parent=0 // loop_header_branch
    %17 = sbr.rel (%p15) target = $region8
  $region5: #{clip_vision_forward.15} parent=0 // loop_body
    %s19 = ssub.s32 %s14, 1
    %s20 = ssub.s32 %s14, 2
    %s21 = sadd.s32 %s14, 1
    %s22 = ssub.s32 %s14, %s21
    %p23 = scmp.eq.s32.totalorder %s22, 0
    %s25 = sadd.s32 %s24, 1
    %s26 = scalar_select %p23, %s24, %s25
    %p29 = pneg %p23
    %p30 = scmp.eq.s32.totalorder %s14, 1
    %p31 = por %p29, %p30
    %p32 = scmp.ne.s32.totalorder %s24, %s27
    %p33 = scmp.eq.s32.totalorder %s14, 0
    %p34 = por %p32, %p33
    %p35 = scmp.ne.s32.totalorder %s24, %s27
    %p36 = scmp.eq.s32.totalorder %s19, 1
    %p37 = por %p35, %p36
    %p38 = scmp.ne.s32.totalorder %s27, %s28
    %p39 = scmp.eq.s32.totalorder %s19, 0
    %p40 = por %p38, %p39
    %p41 = scmp.ne.s32.totalorder %s27, %s28
    %p42 = scmp.eq.s32.totalorder %s20, 1
    %p43 = por %p41, %p42
    %p45 = scmp.ne.s32.totalorder %s28, %s44
    %p46 = scmp.eq.s32.totalorder %s20, 0
    %p47 = por %p45, %p46
    %s49 = sadd.s32 %s48, 1
    %p52 = scmp.eq.s32.totalorder %s14, 1
    %p53 = scmp.ne.s32.totalorder %s48, %s50
    %p54 = scmp.eq.s32.totalorder %s14, 0
    %p55 = por %p53, %p54
    %p56 = scmp.ne.s32.totalorder %s48, %s50
    %p57 = scmp.eq.s32.totalorder %s19, 1
    %p58 = por %p56, %p57
    %p59 = scmp.ne.s32.totalorder %s50, %s51
    %p60 = scmp.eq.s32.totalorder %s19, 0
    %p61 = por %p59, %p60
    %p62 = scmp.ne.s32.totalorder %s50, %s51
    %p63 = scmp.eq.s32.totalorder %s20, 1
    %p64 = por %p62, %p63
    %p66 = scmp.ne.s32.totalorder %s51, %s65
    %p67 = scmp.eq.s32.totalorder %s20, 0
    %p68 = por %p66, %p67
    %s70 = sadd.s32 %s69, 1
    %p73 = scmp.eq.s32.totalorder %s14, 1
    %p74 = scmp.ne.s32.totalorder %s69, %s71
    %p75 = scmp.eq.s32.totalorder %s14, 0
    %p76 = por %p74, %p75
    %p77 = scmp.ne.s32.totalorder %s69, %s71
    %p78 = scmp.eq.s32.totalorder %s19, 1
    %p79 = por %p77, %p78
    %p80 = scmp.ne.s32.totalorder %s71, %s72
    %p81 = scmp.eq.s32.totalorder %s19, 0
    %p82 = por %p80, %p81
    %p83 = scmp.ne.s32.totalorder %s71, %s72
    %p84 = scmp.eq.s32.totalorder %s20, 1
    %p85 = por %p83, %p84
    %p87 = scmp.ne.s32.totalorder %s72, %s86
    %p88 = scmp.eq.s32.totalorder %s20, 0
    %p89 = por %p87, %p88
    %s91 = sadd.s32 %s90, 1
    %p94 = scmp.eq.s32.totalorder %s14, 1
    %p95 = scmp.ne.s32.totalorder %s90, %s92
    %p96 = scmp.eq.s32.totalorder %s14, 0
    %p97 = por %p95, %p96
    %p98 = scmp.ne.s32.totalorder %s90, %s92
    %p99 = scmp.eq.s32.totalorder %s19, 1
    %p100 = por %p98, %p99
    %p101 = scmp.ne.s32.totalorder %s92, %s93
    %p102 = scmp.eq.s32.totalorder %s19, 0
    %p103 = por %p101, %p102
    %p104 = scmp.ne.s32.totalorder %s92, %s93
    %p105 = scmp.eq.s32.totalorder %s20, 1
    %p106 = por %p104, %p105
    %p108 = scmp.ne.s32.totalorder %s93, %s107
    %p109 = scmp.eq.s32.totalorder %s20, 0
    %p110 = por %p108, %p109
    %s112 = sadd.s32 %s111, 1
    %p115 = scmp.eq.s32.totalorder %s14, 1
    %p116 = scmp.ne.s32.totalorder %s111, %s113
    %p117 = scmp.eq.s32.totalorder %s14, 0
    %p118 = por %p116, %p117
    %p119 = scmp.ne.s32.totalorder %s111, %s113
    %p120 = scmp.eq.s32.totalorder %s19, 1
    %p121 = por %p119, %p120
    %p122 = scmp.ne.s32.totalorder %s113, %s114
    %p123 = scmp.eq.s32.totalorder %s19, 0
    %p124 = por %p122, %p123
    %p125 = scmp.ne.s32.totalorder %s113, %s114
    %p126 = scmp.eq.s32.totalorder %s20, 1
    %p127 = por %p125, %p126
    %p129 = scmp.ne.s32.totalorder %s114, %s128
    %p130 = scmp.eq.s32.totalorder %s20, 0
    %p131 = por %p129, %p130
    %s132 = ssub.s32 %s14, %s21
    %p133 = scmp.eq.s32.totalorder %s132, 0
    %s135 = sadd.s32 %s134, 1
    %s136 = scalar_select %p133, %s134, %s135
    %p139 = pneg %p133
    %p140 = scmp.eq.s32.totalorder %s14, 1
    %p141 = por %p139, %p140
    %p142 = scmp.ne.s32.totalorder %s134, %s137
    %p143 = scmp.eq.s32.totalorder %s14, 0
    %p144 = por %p142, %p143
    %p145 = scmp.ne.s32.totalorder %s134, %s137
    %p146 = scmp.eq.s32.totalorder %s19, 1
    %p147 = por %p145, %p146
    %p148 = scmp.ne.s32.totalorder %s137, %s138
    %p149 = scmp.eq.s32.totalorder %s19, 0
    %p150 = por %p148, %p149
    %p151 = scmp.ne.s32.totalorder %s137, %s138
    %p152 = scmp.eq.s32.totalorder %s20, 1
    %p153 = por %p151, %p152
    %p155 = scmp.ne.s32.totalorder %s138, %s154
    %p156 = scmp.eq.s32.totalorder %s20, 0
    %p157 = por %p155, %p156
    %s158 = ssub.s32 %s14, %s21
    %p159 = scmp.eq.s32.totalorder %s158, 0
    %s161 = sadd.s32 %s160, 1
    %s162 = scalar_select %p159, %s160, %s161
    %p165 = pneg %p159
    %p166 = scmp.eq.s32.totalorder %s14, 1
    %p167 = por %p165, %p166
    %p168 = scmp.ne.s32.totalorder %s160, %s163
    %p169 = scmp.eq.s32.totalorder %s14, 0
    %p170 = por %p168, %p169
    %p171 = scmp.ne.s32.totalorder %s160, %s163
    %p172 = scmp.eq.s32.totalorder %s19, 1
    %p173 = por %p171, %p172
    %p174 = scmp.ne.s32.totalorder %s163, %s164
    %p175 = scmp.eq.s32.totalorder %s19, 0
    %p176 = por %p174, %p175
    %p177 = scmp.ne.s32.totalorder %s163, %s164
    %p178 = scmp.eq.s32.totalorder %s20, 1
    %p179 = por %p177, %p178
    %p181 = scmp.ne.s32.totalorder %s164, %s180
    %p182 = scmp.eq.s32.totalorder %s20, 0
    %p183 = por %p181, %p182
    %s184 = ssub.s32 %s14, %s21
    %p185 = scmp.eq.s32.totalorder %s184, 0
    %s187 = sadd.s32 %s186, 1
    %s188 = scalar_select %p185, %s186, %s187
    %p191 = pneg %p185
    %p192 = scmp.eq.s32.totalorder %s14, 1
    %p193 = por %p191, %p192
    %p194 = scmp.ne.s32.totalorder %s186, %s189
    %p195 = scmp.eq.s32.totalorder %s14, 0
    %p196 = por %p194, %p195
    %p197 = scmp.ne.s32.totalorder %s186, %s189
    %p198 = scmp.eq.s32.totalorder %s19, 1
    %p199 = por %p197, %p198
    %p200 = scmp.ne.s32.totalorder %s189, %s190
    %p201 = scmp.eq.s32.totalorder %s19, 0
    %p202 = por %p200, %p201
    %p203 = scmp.ne.s32.totalorder %s189, %s190
    %p204 = scmp.eq.s32.totalorder %s20, 1
    %p205 = por %p203, %p204
    %p207 = scmp.ne.s32.totalorder %s190, %s206
    %p208 = scmp.eq.s32.totalorder %s20, 0
    %p209 = por %p207, %p208
    %p210 = scmp.le.s32.totalorder 1, %s14
    %p211 = scmp.lt.s32.totalorder %s14, 3
    %p212 = pnand %p210, %p211
    %p213 = pneg %p212
    // Predicated region
    $region9: #{clip_vision_forward.15} parent=5 // pred_check
      _
    $region10: #{clip_vision_forward.15} parent=5 // pred_check_branch
      %215 = sbr.rel (%p212) target = $region12
    $region11: #{clip_vision_forward.15} parent=5 // pred_region
      %s216 = ssub.s32 %s14, 1
      // Predicated region
      $region13: #{clip_vision_forward.15} parent=11 // pred_check
        %p217 = pneg %p61
      $region14: #{clip_vision_forward.15} parent=11 // pred_check_branch
        %219 = sbr.rel (%p217) target = $region16
      $region15: #{clip_vision_forward.15} parent=11 // pred_region
        _
      $region16: #{clip_vision_forward.15} parent=11 // pred_fallthru
        _
      // Predicated region
      $region17: #{clip_vision_forward.15} parent=11 // pred_check
        %p220 = pneg %p82
      $region18: #{clip_vision_forward.15} parent=11 // pred_check_branch
        %222 = sbr.rel (%p220) target = $region20
      $region19: #{clip_vision_forward.15} parent=11 // pred_region
        _
      $region20: #{clip_vision_forward.15} parent=11 // pred_fallthru
        _
      // Predicated region
      $region21: #{clip_vision_forward.15} parent=11 // pred_check
        %p223 = pneg %p103
      $region22: #{clip_vision_forward.15} parent=11 // pred_check_branch
        %225 = sbr.rel (%p223) target = $region24
      $region23: #{clip_vision_forward.15} parent=11 // pred_region
        _
      $region24: #{clip_vision_forward.15} parent=11 // pred_fallthru
        _
      // Predicated region
      $region25: #{clip_vision_forward.15} parent=11 // pred_check
        %p226 = pneg %p124
      $region26: #{clip_vision_forward.15} parent=11 // pred_check_branch
        %228 = sbr.rel (%p226) target = $region28
      $region27: #{clip_vision_forward.15} parent=11 // pred_region
        _
      $region28: #{clip_vision_forward.15} parent=11 // pred_fallthru
        _
    $region12: #{clip_vision_forward.15} parent=5 // pred_fallthru
      _
    %p229 = scmp.lt.s32.totalorder %s14, 2
    // Predicated region
    $region29: #{clip_vision_forward.15} parent=5 // pred_check
      %p230 = pneg %p229
    $region30: #{clip_vision_forward.15} parent=5 // pred_check_branch
      %232 = sbr.rel (%p230) target = $region32
    $region31: #{clip_vision_forward.15} parent=5 // pred_region
      // Predicated region
      $region33: #{clip_vision_forward.15} parent=31 // pred_check
        %p233 = pneg %p34
      $region34: #{clip_vision_forward.15} parent=31 // pred_check_branch
        %235 = sbr.rel (%p233) target = $region36
      $region35: #{clip_vision_forward.15} parent=31 // pred_region
        %s236 = smul.u32 3, %s14
        %p237 = scmp.lt.s32.totalorder %s236, 5
        %s238 = scalar_select %p237, %s236, 5
        %s239 = smul.addr %s238, 4
        %s240 = scalar_lea.vmem %s0, %s239
        %s241 = smul.u32 3, %s14
      $region36: #{clip_vision_forward.15} parent=31 // pred_fallthru
        _
    $region32: #{clip_vision_forward.15} parent=5 // pred_fallthru
      _
    %p242 = scmp.le.s32.totalorder 1, %s14
    %p243 = scmp.lt.s32.totalorder %s14, 3
    %p244 = pnand %p242, %p243
    %p245 = pneg %p244
    // Predicated region
    $region37: #{clip_vision_forward.15} parent=5 // pred_check
      _
    $region38: #{clip_vision_forward.15} parent=5 // pred_check_branch
      %247 = sbr.rel (%p244) target = $region40
    $region39: #{clip_vision_forward.15} parent=5 // pred_region
      %s248 = ssub.s32 %s14, 1
      %s249 = smul.u32 3, %s19
      %p250 = scmp.lt.s32.totalorder %s249, 5
      %s251 = scalar_select %p250, %s249, 5
      %s252 = smul.addr %s251, 4
      %s253 = scalar_lea.vmem %s0, %s252
      %p254 = pneg %p40
      %p255 = pneg %p37
      %p256 = pneg %p61
      %p257 = pneg %p58
      %p258 = pneg %p82
      %p259 = pneg %p79
      %p260 = pneg %p103
      %p261 = pneg %p100
      %p262 = pneg %p124
      %p263 = pneg %p121
      %p264 = pneg %p150
      %p265 = pneg %p147
      %s266 = smul.u32 3, %s19
      %p267 = scmp.lt.s32.totalorder %s266, 5
      %s268 = scalar_select %p267, %s266, 5
      %s269 = smul.addr %s268, 4
      %s270 = scalar_lea.vmem %s5, %s269
      %p271 = pneg %p176
      %p272 = pneg %p173
      %s273 = smul.u32 3, %s19
      %p274 = scmp.lt.s32.totalorder %s273, 5
      %s275 = scalar_select %p274, %s273, 5
      %s276 = smul.addr %s275, 4
      %s277 = scalar_lea.vmem %s6, %s276
      %p278 = pneg %p202
      %p279 = pneg %p199
      %s280 = smul.u32 3, %s19
      %p281 = scmp.lt.s32.totalorder %s280, 5
      %s282 = scalar_select %p281, %s280, 5
      %s283 = smul.addr %s282, 4
      %s284 = scalar_lea.vmem %s7, %s283
      %s285 = smul.u32 3, %s19
      %p286 = scmp.lt.s32.totalorder %s285, 5
      %s287 = scalar_select %p286, %s285, 5
      %s288 = smul.addr %s287, 4
      %s289 = scalar_lea.vmem %s0, %s288
      %s290 = smul.u32 3, %s19
      %s291 = smul.u32 3, %s19
      %p292 = scmp.lt.s32.totalorder %s291, 5
      %s293 = scalar_select %p292, %s291, 5
      %s294 = smul.addr %s293, 4
      %s295 = scalar_lea.vmem %s5, %s294
      %s296 = smul.u32 3, %s19
      %s297 = smul.u32 3, %s19
      %p298 = scmp.lt.s32.totalorder %s297, 5
      %s299 = scalar_select %p298, %s297, 5
      %s300 = smul.addr %s299, 4
      %s301 = scalar_lea.vmem %s6, %s300
      %s302 = smul.u32 3, %s19
      %s303 = smul.u32 3, %s19
      %p304 = scmp.lt.s32.totalorder %s303, 5
      %s305 = scalar_select %p304, %s303, 5
      %s306 = smul.addr %s305, 4
      %s307 = scalar_lea.vmem %s7, %s306
      %s308 = smul.u32 3, %s19
      %v310 = vld [vmem:[%s289] sm:$0xf]
      %v311 = vld [vmem:[%s289 + $0x4] sm:$0xf]
      %v312 = vld [vmem:[%s289 + $0x8] sm:$0xf]
      %v313 = vunpack.c.l.bf16 %v310
      %v314 = vunpack.c.l.bf16 %v311
      %v315 = vunpack.c.l.bf16 %v312
      %vm316 = vcmask 261120
      %v317 = vsel %vm316, %v313, 0.0
      %318 = vadd.xlane.f32.xlu0 %v317
      %v319 = vpop.xlane.xlu0 %318
      %v320 = vsel %vm316, %v314, 0.0
      %321 = vadd.xlane.f32.xlu0 %v320
      %v322 = vpop.xlane.xlu0 %321
      %v323 = vsel %vm316, %v315, 0.0
      %324 = vadd.xlane.f32.xlu0 %v323
      %v325 = vpop.xlane.xlu0 %324
      %v326 = vrcp.pop 32.0
      %v327 = vmul.f32 32.0, %v326
      %v328 = vsub.f32 1.0, %v327
      %v329 = vmul.f32 %v326, %v328
      %v330 = vadd.f32 %v326, %v329
      %vm331 = vweird.f32 %v326
      %v332 = vsel %vm331, %v326, %v330
      %v333 = vmul.f32 %v319, %v332
      %v334 = vmul.f32 %v322, %v332
      %v335 = vmul.f32 %v325, %v332
      %v336 = vsub.f32 %v313, %v333
      %v337 = vsub.f32 %v314, %v334
      %v338 = vsub.f32 %v315, %v335
      %v339 = vmul.f32 %v336, %v336
      %v340 = vmul.f32 %v337, %v337
      %v341 = vmul.f32 %v338, %v338
      %v342 = vsel %vm316, %v339, 0.0
      %343 = vadd.xlane.f32.xlu0 %v342
      %v344 = vpop.xlane.xlu0 %343
      %v345 = vsel %vm316, %v340, 0.0
      %346 = vadd.xlane.f32.xlu0 %v345
      %v347 = vpop.xlane.xlu0 %346
      %v348 = vsel %vm316, %v341, 0.0
      %349 = vadd.xlane.f32.xlu0 %v348
      %v350 = vpop.xlane.xlu0 %349
      %v351 = vmul.f32 %v344, %v332
      %v352 = vmul.f32 %v347, %v332
      %v353 = vmul.f32 %v350, %v332
      %v354 = vadd.f32 %v351, 1e-05
      %v355 = vadd.f32 %v352, 1e-05
      %v356 = vadd.f32 %v353, 1e-05
      %v357 = vrsqrt.pop %v354
      %v358 = vmul.f32 %v357, %v354
      %v359 = vmul.f32 %v358, %v357
      %v360 = vmul.f32 0.5, %v359
      %v361 = vsub.f32 1.5, %v360
      %v362 = vmul.f32 %v357, %v361
      %vm363 = vweird.f32 %v354
      %vm364 = vweird.f32 %v357
      %vm365 = vmor %vm363, %vm364
      %v366 = vsel %vm365, %v357, %v362
      %v367 = vrsqrt.pop %v355
      %v368 = vmul.f32 %v367, %v355
      %v369 = vmul.f32 %v368, %v367
      %v370 = vmul.f32 0.5, %v369
      %v371 = vsub.f32 1.5, %v370
      %v372 = vmul.f32 %v367, %v371
      %vm373 = vweird.f32 %v355
      %vm374 = vweird.f32 %v367
      %vm375 = vmor %vm373, %vm374
      %v376 = vsel %vm375, %v367, %v372
      %v377 = vrsqrt.pop %v356
      %v378 = vmul.f32 %v377, %v356
      %v379 = vmul.f32 %v378, %v377
      %v380 = vmul.f32 0.5, %v379
      %v381 = vsub.f32 1.5, %v380
      %v382 = vmul.f32 %v377, %v381
      %vm383 = vweird.f32 %v356
      %vm384 = vweird.f32 %v377
      %vm385 = vmor %vm383, %vm384
      %v386 = vsel %vm385, %v377, %v382
      %v387 = vmul.f32 %v336, %v366
      %v388 = vmul.f32 %v337, %v376
      %v389 = vmul.f32 %v338, %v386
      %v390 = vld [vmem:[%s1] sm:$0x1]
      %v392 = vperm.slane %v390, 0
      %v394 = vmul.f32 %v387, %v392
      %v395 = vmul.f32 %v388, %v392
      %v396 = vmul.f32 %v389, %v392
      %v397 = vld [vmem:[%s2] sm:$0x1]
      %v399 = vperm.slane %v397, 0
      %v401 = vadd.f32 %v394, %v399
      %v402 = vadd.f32 %v395, %v399
      %v403 = vadd.f32 %v396, %v399
      %v404 = vpack.c.bf16 %v402, %v401
      %v405 = vpack.c.bf16 %v403, %v403
      %v406 = vld [vmem:[%s3] sm:$0xf]
      %v407 = vld [vmem:[%s3 + $0x4] sm:$0xf]
      %v408 = vld [vmem:[%s3 + $0x8] sm:$0xf]
      %v409 = vld [vmem:[%s3 + $0xc] sm:$0xf]
      %v410 = vld [vmem:[%s4] sm:$0x1]
      %v412 = vperm.slane %v410, 0
      %v418 = vunpack.c.l.b16 %v406
      %v419 = vunpack.c.l.b16 %v407
      %v420 = vunpack.c.l.b16 %v408
      %v421 = vunpack.c.l.b16 %v409
      %v422 = vpack.c.b16 %v419, %v418
      %v423 = vpack.c.b16 %v421, %v420
      %v427 = vsel %vm316, %v404, 0
      %v430 = vsel %vm316, %v405, 0
      %432 = vmatpush.bf16.msra.mxu0 0
      %433 = vmatpush.bf16.msra.mxu0 0
      %434 = vmatpush.bf16.msra.mxu0 0
      %435 = vmatpush.bf16.msra.mxu0 0
      %436 = vmatpush.bf16.msra.mxu0 0
      %437 = vmatpush.bf16.msra.mxu0 0
      %438 = vmatpush.bf16.msra.mxu0 %v423
      %439 = vmatpush.bf16.msra.mxu0 %v422
      %440 = vmatmul.bf16.gmra.mxu0 %v427
      %v441 = vpop.f32.mrf.mxu0
      %v442 = vadd.f32 %v412, %v441
      %v443 = vpop.f32.mrf.mxu0
      %v444 = vadd.f32 %v412, %v443
      %445 = vmatmul.bf16.gmra.mxu0 %v430
      %v446 = vpop.f32.mrf.mxu0
      %v447 = vadd.f32 %v412, %v446
      %v448 = vpop.f32.mrf.mxu0
      %449 = vdwg.mxu0
      %v450 = vpack.c.bf16 %v442, %v442
      %v451 = vpack.c.bf16 %v444, %v444
      %v452 = vpack.c.bf16 %v447, %v447
      %vm453 = vcmask 257024
      %454 = vst.msk [vmem:[%s295] sm:$0xf] %vm453, %v450
      %455 = vst.msk [vmem:[%s295 + $0x4] sm:$0xf] %vm453, %v451
      %456 = vst.msk [vmem:[%s295 + $0x8] sm:$0xf] %vm453, %v452
      %460 = vrot.lane.b32.xlu0 %v450, 96
      %v461 = vpop.permute.xlu0 %460
      %462 = vrot.lane.b32.xlu0 %v451, 96
      %v463 = vpop.permute.xlu0 %462
      %464 = vrot.lane.b32.xlu0 %v452, 96
      %v465 = vpop.permute.xlu0 %464
      %469 = vst.msk [vmem:[%s301] sm:$0xf] %vm453, %v461
      %470 = vst.msk [vmem:[%s301 + $0x4] sm:$0xf] %vm453, %v463
      %471 = vst.msk [vmem:[%s301 + $0x8] sm:$0xf] %vm453, %v465
      %472 = vrot.lane.b32.xlu0 %v450, 64
      %v473 = vpop.permute.xlu0 %472
      %474 = vrot.lane.b32.xlu0 %v451, 64
      %v475 = vpop.permute.xlu0 %474
      %476 = vrot.lane.b32.xlu0 %v452, 64
      %v477 = vpop.permute.xlu0 %476
      %481 = vst.msk [vmem:[%s307] sm:$0xf] %vm453, %v473
      %482 = vst.msk [vmem:[%s307 + $0x4] sm:$0xf] %vm453, %v475
      %483 = vst.msk [vmem:[%s307 + $0x8] sm:$0xf] %vm453, %v477
      %s484 = smul.u32 3, %s19
      %p485 = scmp.lt.s32.totalorder %s484, 5
      %s486 = scalar_select %p485, %s484, 5
      %s487 = smul.addr %s486, 4
      %s488 = scalar_lea.vmem %s5, %s487
      %s489 = smul.u32 3, %s19
      %p490 = scmp.lt.s32.totalorder %s489, 5
      %s491 = scalar_select %p490, %s489, 5
      %s492 = smul.addr %s491, 4
      %s493 = scalar_lea.vmem %s6, %s492
      %s494 = smul.u32 3, %s19
      %p495 = scmp.lt.s32.totalorder %s494, 5
      %s496 = scalar_select %p495, %s494, 5
      %s497 = smul.addr %s496, 4
      %s498 = scalar_lea.vmem %s7, %s497
      // Predicated region
      $region41: #{clip_vision_forward.15} parent=39 // pred_check
        %p499 = pneg %p147
      $region42: #{clip_vision_forward.15} parent=39 // pred_check_branch
        %501 = sbr.rel (%p499) target = $region44
      $region43: #{clip_vision_forward.15} parent=39 // pred_region
        %s502 = smul.u32 3, %s19
      $region44: #{clip_vision_forward.15} parent=39 // pred_fallthru
        _
      // Predicated region
      $region45: #{clip_vision_forward.15} parent=39 // pred_check
        %p503 = pneg %p173
      $region46: #{clip_vision_forward.15} parent=39 // pred_check_branch
        %505 = sbr.rel (%p503) target = $region48
      $region47: #{clip_vision_forward.15} parent=39 // pred_region
        %s506 = smul.u32 3, %s19
      $region48: #{clip_vision_forward.15} parent=39 // pred_fallthru
        _
      // Predicated region
      $region49: #{clip_vision_forward.15} parent=39 // pred_check
        %p507 = pneg %p199
      $region50: #{clip_vision_forward.15} parent=39 // pred_check_branch
        %509 = sbr.rel (%p507) target = $region52
      $region51: #{clip_vision_forward.15} parent=39 // pred_region
        %s510 = smul.u32 3, %s19
      $region52: #{clip_vision_forward.15} parent=39 // pred_fallthru
        _
    $region40: #{clip_vision_forward.15} parent=5 // pred_fallthru
      _
    %p511 = scmp.le.s32.totalorder 2, %s14
    // Predicated region
    $region53: #{clip_vision_forward.15} parent=5 // pred_check
      %p512 = pneg %p511
    $region54: #{clip_vision_forward.15} parent=5 // pred_check_branch
      %514 = sbr.rel (%p512) target = $region56
    $region55: #{clip_vision_forward.15} parent=5 // pred_region
      %s515 = ssub.s32 %s14, 2
      // Predicated region
      $region57: #{clip_vision_forward.15} parent=55 // pred_check
        %p516 = pneg %p153
      $region58: #{clip_vision_forward.15} parent=55 // pred_check_branch
        %518 = sbr.rel (%p516) target = $region60
      $region59: #{clip_vision_forward.15} parent=55 // pred_region
        %s519 = smul.u32 3, %s20
        %p520 = scmp.lt.s32.totalorder %s519, 5
        %s521 = scalar_select %p520, %s519, 5
        %s522 = smul.addr %s521, 4
        %s523 = scalar_lea.vmem %s5, %s522
      $region60: #{clip_vision_forward.15} parent=55 // pred_fallthru
        _
      // Predicated region
      $region61: #{clip_vision_forward.15} parent=55 // pred_check
        %p524 = pneg %p179
      $region62: #{clip_vision_forward.15} parent=55 // pred_check_branch
        %526 = sbr.rel (%p524) target = $region64
      $region63: #{clip_vision_forward.15} parent=55 // pred_region
        %s527 = smul.u32 3, %s20
        %p528 = scmp.lt.s32.totalorder %s527, 5
        %s529 = scalar_select %p528, %s527, 5
        %s530 = smul.addr %s529, 4
        %s531 = scalar_lea.vmem %s6, %s530
      $region64: #{clip_vision_forward.15} parent=55 // pred_fallthru
        _
      // Predicated region
      $region65: #{clip_vision_forward.15} parent=55 // pred_check
        %p532 = pneg %p205
      $region66: #{clip_vision_forward.15} parent=55 // pred_check_branch
        %534 = sbr.rel (%p532) target = $region68
      $region67: #{clip_vision_forward.15} parent=55 // pred_region
        %s535 = smul.u32 3, %s20
        %p536 = scmp.lt.s32.totalorder %s535, 5
        %s537 = scalar_select %p536, %s535, 5
        %s538 = smul.addr %s537, 4
        %s539 = scalar_lea.vmem %s7, %s538
      $region68: #{clip_vision_forward.15} parent=55 // pred_fallthru
        _
    $region56: #{clip_vision_forward.15} parent=5 // pred_fallthru
      _
  $region6: #{clip_vision_forward.15} parent=0 // loop_footer
    %s18 = sadd.s32 1, %s14
  $region7: #{clip_vision_forward.15} parent=0 // loop_footer_branch
    %13 = sbr.rel target = $region3
  $region8: #{clip_vision_forward.15} parent=0 // loop_exit
    _

// kernel: clip_vision_forward.17
$region0: #{clip_vision_forward.17}
  #allocation0 [shape = 'u32[]', space=smem, size = 0x4, offset = 0x4, fixed_abs, tag = 'smem constant byte address 0x4 - core index']
  #allocation1 [shape = 'u32[72,128]{1,0:T(1,128)}', space=vmem, size = 0x9000, scoped, tag = 'internal scratch']
  %s0 = inlined_call_operand.vmem [shape: bf16[48,32], index: 0, kind: input, shape index: {}]
  %s1 = inlined_call_operand.vmem [shape: bf16[32,32], index: 1, kind: input, shape index: {}]
  %s2 = inlined_call_operand.vmem [shape: f32[1,32], index: 2, kind: input, shape index: {}]
  %s3 = inlined_call_operand.vmem [shape: bf16[48,32], index: 3, kind: input, shape index: {}]
  %s4 = inlined_call_operand.vmem [shape: bf16[48,32], index: 4, kind: output, shape index: {}]
  %s5 = sld [smem:[#allocation0]]
  $region49: #{clip_vision_forward.17} parent=0
    _
  %s7 = ssub.s32 1, %s5
  %s8 = scalar_select 0, %s7, %s5
  loop: start=0, step=1, limit=4
  $region2: #{clip_vision_forward.17} parent=0 // loop_pre_header
    _
  $region3: #{clip_vision_forward.17} parent=0 // loop_header
    %s10 = sphi 0, %s14
    %p11 = scmp.ge.s32.totalorder %s10, 4
    %s17 = sphi 0, %s29
    %s18 = sphi 0, %s25
    %s19 = sphi 0, %s17
    %s20 = sphi 0, %s18
    %s21 = sphi 0, %s19
    %s22 = sphi 0, %s20
    %s32 = sphi 0, %s34
    %s35 = sphi 0, %s32
    %s36 = sphi 0, %s35
    %s52 = sphi 0, %s36
    %s58 = sphi 0, %s60
    %s61 = sphi 0, %s58
    %s62 = sphi 0, %s61
    %s78 = sphi 0, %s62
    %s84 = sphi 0, %s86
    %s87 = sphi 0, %s84
    %s88 = sphi 0, %s87
    %s104 = sphi 0, %s88
    %s112 = sphi 0, %s114
    %s115 = sphi 0, %s112
    %s116 = sphi 0, %s115
    %s132 = sphi 0, %s116
    %s140 = sphi 0, %s142
    %s143 = sphi 0, %s140
    %s144 = sphi 0, %s143
    %s160 = sphi 0, %s144
  $region4: #{clip_vision_forward.17} parent=0 // loop_header_branch
    %13 = sbr.rel (%p11) target = $region8
  $region5: #{clip_vision_forward.17} parent=0 // loop_body
    %s15 = ssub.s32 %s10, 1
    %s16 = ssub.s32 %s10, 2
    %s23 = sadd.s32 1, %s18
    %p24 = scmp.ge.s32.totalorder %s23, 2
    %s25 = scalar_select %p24, 0, %s23
    %s26 = sadd.s32 1, %s17
    %s27 = scalar_select %p24, %s26, %s17
    %p28 = scmp.ge.s32.totalorder %s27, 1
    %s29 = scalar_select %p28, 0, %s27
    %s30 = ssub.s32 %s18, %s25
    %p31 = scmp.eq.s32.totalorder %s30, 0
    %s33 = sadd.s32 %s32, 1
    %s34 = scalar_select %p31, %s32, %s33
    %p37 = pneg %p31
    %p38 = scmp.eq.s32.totalorder %s10, 1
    %p39 = por %p37, %p38
    %p40 = scmp.ne.s32.totalorder %s32, %s35
    %p41 = scmp.eq.s32.totalorder %s10, 0
    %p42 = por %p40, %p41
    %p43 = scmp.ne.s32.totalorder %s32, %s35
    %p44 = scmp.eq.s32.totalorder %s15, 1
    %p45 = por %p43, %p44
    %p46 = scmp.ne.s32.totalorder %s35, %s36
    %p47 = scmp.eq.s32.totalorder %s15, 0
    %p48 = por %p46, %p47
    %p49 = scmp.ne.s32.totalorder %s35, %s36
    %p50 = scmp.eq.s32.totalorder %s16, 1
    %p51 = por %p49, %p50
    %p53 = scmp.ne.s32.totalorder %s36, %s52
    %p54 = scmp.eq.s32.totalorder %s16, 0
    %p55 = por %p53, %p54
    %s56 = ssub.s32 %s17, %s29
    %p57 = scmp.eq.s32.totalorder %s56, 0
    %s59 = sadd.s32 %s58, 1
    %s60 = scalar_select %p57, %s58, %s59
    %p63 = pneg %p57
    %p64 = scmp.eq.s32.totalorder %s10, 1
    %p65 = por %p63, %p64
    %p66 = scmp.ne.s32.totalorder %s58, %s61
    %p67 = scmp.eq.s32.totalorder %s10, 0
    %p68 = por %p66, %p67
    %p69 = scmp.ne.s32.totalorder %s58, %s61
    %p70 = scmp.eq.s32.totalorder %s15, 1
    %p71 = por %p69, %p70
    %p72 = scmp.ne.s32.totalorder %s61, %s62
    %p73 = scmp.eq.s32.totalorder %s15, 0
    %p74 = por %p72, %p73
    %p75 = scmp.ne.s32.totalorder %s61, %s62
    %p76 = scmp.eq.s32.totalorder %s16, 1
    %p77 = por %p75, %p76
    %p79 = scmp.ne.s32.totalorder %s62, %s78
    %p80 = scmp.eq.s32.totalorder %s16, 0
    %p81 = por %p79, %p80
    %s82 = ssub.s32 %s17, %s29
    %p83 = scmp.eq.s32.totalorder %s82, 0
    %s85 = sadd.s32 %s84, 1
    %s86 = scalar_select %p83, %s84, %s85
    %p89 = pneg %p83
    %p90 = scmp.eq.s32.totalorder %s10, 1
    %p91 = por %p89, %p90
    %p92 = scmp.ne.s32.totalorder %s84, %s87
    %p93 = scmp.eq.s32.totalorder %s10, 0
    %p94 = por %p92, %p93
    %p95 = scmp.ne.s32.totalorder %s84, %s87
    %p96 = scmp.eq.s32.totalorder %s15, 1
    %p97 = por %p95, %p96
    %p98 = scmp.ne.s32.totalorder %s87, %s88
    %p99 = scmp.eq.s32.totalorder %s15, 0
    %p100 = por %p98, %p99
    %p101 = scmp.ne.s32.totalorder %s87, %s88
    %p102 = scmp.eq.s32.totalorder %s16, 1
    %p103 = por %p101, %p102
    %p105 = scmp.ne.s32.totalorder %s88, %s104
    %p106 = scmp.eq.s32.totalorder %s16, 0
    %p107 = por %p105, %p106
    %s108 = ssub.s32 %s18, %s25
    %s109 = ssub.s32 %s17, %s29
    %s110 = sor.u32 %s108, %s109
    %p111 = scmp.eq.s32.totalorder %s110, 0
    %s113 = sadd.s32 %s112, 1
    %s114 = scalar_select %p111, %s112, %s113
    %p117 = pneg %p111
    %p118 = scmp.eq.s32.totalorder %s10, 1
    %p119 = por %p117, %p118
    %p120 = scmp.ne.s32.totalorder %s112, %s115
    %p121 = scmp.eq.s32.totalorder %s10, 0
    %p122 = por %p120, %p121
    %p123 = scmp.ne.s32.totalorder %s112, %s115
    %p124 = scmp.eq.s32.totalorder %s15, 1
    %p125 = por %p123, %p124
    %p126 = scmp.ne.s32.totalorder %s115, %s116
    %p127 = scmp.eq.s32.totalorder %s15, 0
    %p128 = por %p126, %p127
    %p129 = scmp.ne.s32.totalorder %s115, %s116
    %p130 = scmp.eq.s32.totalorder %s16, 1
    %p131 = por %p129, %p130
    %p133 = scmp.ne.s32.totalorder %s116, %s132
    %p134 = scmp.eq.s32.totalorder %s16, 0
    %p135 = por %p133, %p134
    %s136 = ssub.s32 %s18, %s25
    %s137 = ssub.s32 %s17, %s29
    %s138 = sor.u32 %s136, %s137
    %p139 = scmp.eq.s32.totalorder %s138, 0
    %s141 = sadd.s32 %s140, 1
    %s142 = scalar_select %p139, %s140, %s141
    %p145 = pneg %p139
    %p146 = scmp.eq.s32.totalorder %s10, 1
    %p147 = por %p145, %p146
    %p148 = scmp.ne.s32.totalorder %s140, %s143
    %p149 = scmp.eq.s32.totalorder %s10, 0
    %p150 = por %p148, %p149
    %p151 = scmp.ne.s32.totalorder %s140, %s143
    %p152 = scmp.eq.s32.totalorder %s15, 1
    %p153 = por %p151, %p152
    %p154 = scmp.ne.s32.totalorder %s143, %s144
    %p155 = scmp.eq.s32.totalorder %s15, 0
    %p156 = por %p154, %p155
    %p157 = scmp.ne.s32.totalorder %s143, %s144
    %p158 = scmp.eq.s32.totalorder %s16, 1
    %p159 = por %p157, %p158
    %p161 = scmp.ne.s32.totalorder %s144, %s160
    %p162 = scmp.eq.s32.totalorder %s16, 0
    %p163 = por %p161, %p162
    %p164 = scmp.le.s32.totalorder 1, %s10
    %p165 = scmp.lt.s32.totalorder %s10, 3
    %p166 = pnand %p164, %p165
    %p167 = pneg %p166
    // Predicated region
    $region9: #{clip_vision_forward.17} parent=5 // pred_check
      _
    $region10: #{clip_vision_forward.17} parent=5 // pred_check_branch
      %169 = sbr.rel (%p166) target = $region12
    $region11: #{clip_vision_forward.17} parent=5 // pred_region
      %s170 = ssub.s32 %s10, 1
      // Predicated region
      $region13: #{clip_vision_forward.17} parent=11 // pred_check
        %p171 = pneg %p74
      $region14: #{clip_vision_forward.17} parent=11 // pred_check_branch
        %173 = sbr.rel (%p171) target = $region16
      $region15: #{clip_vision_forward.17} parent=11 // pred_region
        %p174 = scmp.lt.s32.totalorder %s19, 0
        %s175 = scalar_select %p174, %s19, 0
        %s176 = smul.addr %s175, 4
        %s177 = scalar_lea.vmem %s1, %s176
      $region16: #{clip_vision_forward.17} parent=11 // pred_fallthru
        _
      // Predicated region
      $region17: #{clip_vision_forward.17} parent=11 // pred_check
        %p178 = pneg %p100
      $region18: #{clip_vision_forward.17} parent=11 // pred_check_branch
        %180 = sbr.rel (%p178) target = $region20
      $region19: #{clip_vision_forward.17} parent=11 // pred_region
        %p181 = scmp.lt.s32.totalorder %s19, 0
        %s182 = scalar_select %p181, %s19, 0
        %s183 = scalar_lea.vmem %s2, %s182
      $region20: #{clip_vision_forward.17} parent=11 // pred_fallthru
        _
    $region12: #{clip_vision_forward.17} parent=5 // pred_fallthru
      _
    %p184 = scmp.lt.s32.totalorder %s10, 2
    // Predicated region
    $region21: #{clip_vision_forward.17} parent=5 // pred_check
      %p185 = pneg %p184
    $region22: #{clip_vision_forward.17} parent=5 // pred_check_branch
      %187 = sbr.rel (%p185) target = $region24
    $region23: #{clip_vision_forward.17} parent=5 // pred_region
      // Predicated region
      $region25: #{clip_vision_forward.17} parent=23 // pred_check
        %p188 = pneg %p42
      $region26: #{clip_vision_forward.17} parent=23 // pred_check_branch
        %190 = sbr.rel (%p188) target = $region28
      $region27: #{clip_vision_forward.17} parent=23 // pred_region
        %s191 = smul.u32 3, %s18
        %p192 = scmp.lt.s32.totalorder %s191, 5
        %s193 = scalar_select %p192, %s191, 5
        %s194 = smul.addr %s193, 4
        %s195 = scalar_lea.vmem %s0, %s194
        %s196 = smul.u32 3, %s18
      $region28: #{clip_vision_forward.17} parent=23 // pred_fallthru
        _
      // Predicated region
      $region29: #{clip_vision_forward.17} parent=23 // pred_check
        %p197 = pneg %p122
      $region30: #{clip_vision_forward.17} parent=23 // pred_check_branch
        %199 = sbr.rel (%p197) target = $region32
      $region31: #{clip_vision_forward.17} parent=23 // pred_region
        %s200 = smul.u32 3, %s18
        %p201 = scmp.lt.s32.totalorder %s200, 5
        %s202 = scalar_select %p201, %s200, 5
        %p203 = scmp.lt.s32.totalorder %s17, 0
        %s204 = scalar_select %p203, %s17, 0
        %s205 = sadd.s32 %s204, %s202
        %s206 = smul.addr %s205, 4
        %s207 = scalar_lea.vmem %s3, %s206
        %s208 = smul.u32 3, %s18
      $region32: #{clip_vision_forward.17} parent=23 // pred_fallthru
        _
    $region24: #{clip_vision_forward.17} parent=5 // pred_fallthru
      _
    %p209 = scmp.le.s32.totalorder 1, %s10
    %p210 = scmp.lt.s32.totalorder %s10, 3
    %p211 = pnand %p209, %p210
    %p212 = pneg %p211
    // Predicated region
    $region33: #{clip_vision_forward.17} parent=5 // pred_check
      _
    $region34: #{clip_vision_forward.17} parent=5 // pred_check_branch
      %214 = sbr.rel (%p211) target = $region36
    $region35: #{clip_vision_forward.17} parent=5 // pred_region
      %s215 = ssub.s32 %s10, 1
      %s216 = smul.u32 3, %s20
      %p217 = scmp.lt.s32.totalorder %s216, 5
      %s218 = scalar_select %p217, %s216, 5
      %s219 = smul.addr %s218, 4
      %s220 = scalar_lea.vmem %s0, %s219
      %p221 = pneg %p48
      %p222 = pneg %p45
      %p223 = scmp.lt.s32.totalorder %s19, 0
      %s224 = scalar_select %p223, %s19, 0
      %s225 = smul.addr %s224, 4
      %s226 = scalar_lea.vmem %s1, %s225
      %p227 = pneg %p74
      %p228 = pneg %p71
      %p229 = scmp.lt.s32.totalorder %s19, 0
      %s230 = scalar_select %p229, %s19, 0
      %s231 = scalar_lea.vmem %s2, %s230
      %p232 = pneg %p100
      %p233 = pneg %p97
      %s234 = smul.u32 3, %s20
      %p235 = scmp.lt.s32.totalorder %s234, 5
      %s236 = scalar_select %p235, %s234, 5
      %p237 = scmp.lt.s32.totalorder %s19, 0
      %s238 = scalar_select %p237, %s19, 0
      %s239 = sadd.s32 %s238, %s236
      %s240 = smul.addr %s239, 4
      %s241 = scalar_lea.vmem %s3, %s240
      %p242 = pneg %p128
      %p243 = pneg %p125
      %p244 = pneg %p156
      %p245 = pneg %p153
      %s246 = smul.u32 3, %s20
      %p247 = scmp.lt.s32.totalorder %s246, 5
      %s248 = scalar_select %p247, %s246, 5
      %p249 = scmp.lt.s32.totalorder %s19, 0
      %s250 = scalar_select %p249, %s19, 0
      %s251 = sadd.s32 %s250, %s248
      %s252 = smul.addr %s251, 4
      %s253 = scalar_lea.vmem %s4, %s252
      %s254 = smul.u32 3, %s20
      %p255 = scmp.lt.s32.totalorder %s254, 5
      %s256 = scalar_select %p255, %s254, 5
      %s257 = smul.addr %s256, 4
      %s258 = scalar_lea.vmem %s0, %s257
      %s259 = smul.u32 3, %s20
      %p260 = scmp.lt.s32.totalorder %s19, 0
      %s261 = scalar_select %p260, %s19, 0
      %s262 = smul.addr %s261, 4
      %s263 = scalar_lea.vmem %s1, %s262
      %p264 = scmp.lt.s32.totalorder %s19, 0
      %s265 = scalar_select %p264, %s19, 0
      %s266 = scalar_lea.vmem %s2, %s265
      %s267 = smul.u32 3, %s20
      %p268 = scmp.lt.s32.totalorder %s267, 5
      %s269 = scalar_select %p268, %s267, 5
      %p270 = scmp.lt.s32.totalorder %s19, 0
      %s271 = scalar_select %p270, %s19, 0
      %s272 = sadd.s32 %s271, %s269
      %s273 = smul.addr %s272, 4
      %s274 = scalar_lea.vmem %s3, %s273
      %s275 = smul.u32 3, %s20
      %s276 = smul.u32 3, %s20
      %p277 = scmp.lt.s32.totalorder %s276, 5
      %s278 = scalar_select %p277, %s276, 5
      %p279 = scmp.lt.s32.totalorder %s19, 0
      %s280 = scalar_select %p279, %s19, 0
      %s281 = sadd.s32 %s280, %s278
      %s282 = smul.addr %s281, 4
      %s283 = scalar_lea.vmem %s4, %s282
      %s284 = smul.u32 3, %s20
      %v286 = vld [vmem:[%s258] sm:$0xf]
      %v287 = vld [vmem:[%s258 + $0x4] sm:$0xf]
      %v288 = vld [vmem:[%s258 + $0x8] sm:$0xf]
      %v289 = vld [vmem:[%s263] sm:$0xf]
      %v290 = vld [vmem:[%s263 + $0x4] sm:$0xf]
      %v291 = vld [vmem:[%s263 + $0x8] sm:$0xf]
      %v292 = vld [vmem:[%s263 + $0xc] sm:$0xf]
      %v293 = vld [vmem:[%s266] sm:$0x1]
      %v295 = vperm.slane %v293, 0
      %v300 = vunpack.c.l.b16 %v286
      %v301 = vunpack.c.l.b16 %v287
      %v302 = vunpack.c.l.b16 %v288
      %v303 = vpack.c.b16 %v301, %v300
      %v304 = vpack.c.b16 %v302, %v302
      %v309 = vunpack.c.l.b16 %v289
      %v310 = vunpack.c.l.b16 %v290
      %v311 = vunpack.c.l.b16 %v291
      %v312 = vunpack.c.l.b16 %v292
      %v313 = vpack.c.b16 %v310, %v309
      %v314 = vpack.c.b16 %v312, %v311
      %vm317 = vcmask 261120
      %v319 = vsel %vm317, %v303, 0
      %v322 = vsel %vm317, %v304, 0
      %324 = vmatpush.bf16.msra.mxu0 0
      %325 = vmatpush.bf16.msra.mxu0 0
      %326 = vmatpush.bf16.msra.mxu0 0
      %327 = vmatpush.bf16.msra.mxu0 0
      %328 = vmatpush.bf16.msra.mxu0 0
      %329 = vmatpush.bf16.msra.mxu0 0
      %330 = vmatpush.bf16.msra.mxu0 %v314
      %331 = vmatpush.bf16.msra.mxu0 %v313
      %332 = vmatmul.bf16.gmra.mxu0 %v319
      %v333 = vpop.f32.mrf.mxu0
      %v334 = vadd.f32 %v295, %v333
      %v335 = vpop.f32.mrf.mxu0
      %v336 = vadd.f32 %v295, %v335
      %337 = vmatmul.bf16.gmra.mxu0 %v322
      %v338 = vpop.f32.mrf.mxu0
      %v339 = vadd.f32 %v295, %v338
      %v340 = vpop.f32.mrf.mxu0
      %341 = vdwg.mxu0
      %v342 = vld [vmem:[%s274] sm:$0xf]
      %v343 = vld [vmem:[%s274 + $0x4] sm:$0xf]
      %v344 = vld [vmem:[%s274 + $0x8] sm:$0xf]
      %v345 = vunpack.c.l.bf16 %v342
      %v346 = vunpack.c.l.bf16 %v343
      %v347 = vunpack.c.l.bf16 %v344
      %v348 = vadd.f32 %v334, %v345
      %v349 = vadd.f32 %v336, %v346
      %v350 = vadd.f32 %v339, %v347
      %v351 = vpack.c.bf16 %v348, %v348
      %v352 = vpack.c.bf16 %v349, %v349
      %v353 = vpack.c.bf16 %v350, %v350
      %vm354 = vcmask 257024
      %355 = vst.msk [vmem:[%s283] sm:$0xf] %vm354, %v351
      %356 = vst.msk [vmem:[%s283 + $0x4] sm:$0xf] %vm354, %v352
      %357 = vst.msk [vmem:[%s283 + $0x8] sm:$0xf] %vm354, %v353
      %s358 = smul.u32 3, %s20
      %p359 = scmp.lt.s32.totalorder %s358, 5
      %s360 = scalar_select %p359, %s358, 5
      %p361 = scmp.lt.s32.totalorder %s19, 0
      %s362 = scalar_select %p361, %s19, 0
      %s363 = sadd.s32 %s362, %s360
      %s364 = smul.addr %s363, 4
      %s365 = scalar_lea.vmem %s4, %s364
      // Predicated region
      $region37: #{clip_vision_forward.17} parent=35 // pred_check
        %p366 = pneg %p153
      $region38: #{clip_vision_forward.17} parent=35 // pred_check_branch
        %368 = sbr.rel (%p366) target = $region40
      $region39: #{clip_vision_forward.17} parent=35 // pred_region
        %s369 = smul.u32 3, %s20
      $region40: #{clip_vision_forward.17} parent=35 // pred_fallthru
        _
    $region36: #{clip_vision_forward.17} parent=5 // pred_fallthru
      _
    %p370 = scmp.le.s32.totalorder 2, %s10
    // Predicated region
    $region41: #{clip_vision_forward.17} parent=5 // pred_check
      %p371 = pneg %p370
    $region42: #{clip_vision_forward.17} parent=5 // pred_check_branch
      %373 = sbr.rel (%p371) target = $region44
    $region43: #{clip_vision_forward.17} parent=5 // pred_region
      %s374 = ssub.s32 %s10, 2
      // Predicated region
      $region45: #{clip_vision_forward.17} parent=43 // pred_check
        %p375 = pneg %p159
      $region46: #{clip_vision_forward.17} parent=43 // pred_check_branch
        %377 = sbr.rel (%p375) target = $region48
      $region47: #{clip_vision_forward.17} parent=43 // pred_region
        %s378 = smul.u32 3, %s22
        %p379 = scmp.lt.s32.totalorder %s378, 5
        %s380 = scalar_select %p379, %s378, 5
        %p381 = scmp.lt.s32.totalorder %s21, 0
        %s382 = scalar_select %p381, %s21, 0
        %s383 = sadd.s32 %s382, %s380
        %s384 = smul.addr %s383, 4
        %s385 = scalar_lea.vmem %s4, %s384
      $region48: #{clip_vision_forward.17} parent=43 // pred_fallthru
        _
    $region44: #{clip_vision_forward.17} parent=5 // pred_fallthru
      _
  $region6: #{clip_vision_forward.17} parent=0 // loop_footer
    %s14 = sadd.s32 1, %s10
  $region7: #{clip_vision_forward.17} parent=0 // loop_footer_branch
    %9 = sbr.rel target = $region3
  $region8: #{clip_vision_forward.17} parent=0 // loop_exit
    _

// kernel: clip_vision_forward.18
$region0: #{clip_vision_forward.18}
  #allocation0 [shape = 'u32[]', space=smem, size = 0x4, offset = 0x4, fixed_abs, tag = 'smem constant byte address 0x4 - core index']
  #allocation1 [shape = 'u32[72,128]{1,0:T(1,128)}', space=vmem, size = 0x9000, scoped, tag = 'internal scratch']
  #allocation2 [shape = 'bf16[24,32]{1,0:T(8,128)(2,1)}', space=vmem, size = 0x1800, scoped, tag = 'scratch operand']
  %s0 = inlined_call_operand.vmem [shape: bf16[48,32], index: 0, kind: input, shape index: {}]
  %s1 = inlined_call_operand.vmem [shape: f32[1,32], index: 1, kind: input, shape index: {}]
  %s2 = inlined_call_operand.vmem [shape: f32[1,32], index: 2, kind: input, shape index: {}]
  %s3 = inlined_call_operand.vmem [shape: bf16[32,64], index: 3, kind: input, shape index: {}]
  %s4 = inlined_call_operand.vmem [shape: f32[1,64], index: 4, kind: input, shape index: {}]
  %s5 = inlined_call_operand.vmem [shape: bf16[48,64], index: 5, kind: output, shape index: {}]
  %s6 = sld [smem:[#allocation0]]
  $region57: #{clip_vision_forward.18} parent=0
    _
  %s8 = ssub.s32 1, %s6
  %s9 = scalar_select 0, %s8, %s6
  loop: start=0, step=1, limit=4
  $region2: #{clip_vision_forward.18} parent=0 // loop_pre_header
    _
  $region3: #{clip_vision_forward.18} parent=0 // loop_header
    %s11 = sphi 0, %s15
    %p12 = scmp.ge.s32.totalorder %s11, 4
    %s18 = sphi 0, %s30
    %s19 = sphi 0, %s26
    %s20 = sphi 0, %s18
    %s21 = sphi 0, %s19
    %s22 = sphi 0, %s20
    %s23 = sphi 0, %s21
    %s33 = sphi 0, %s35
    %s36 = sphi 0, %s33
    %s37 = sphi 0, %s36
    %s53 = sphi 0, %s37
    %s57 = sphi 0, %s57
    %s59 = sphi 0, %s57
    %s60 = sphi 0, %s59
    %s74 = sphi 0, %s60
    %s78 = sphi 0, %s78
    %s80 = sphi 0, %s78
    %s81 = sphi 0, %s80
    %s95 = sphi 0, %s81
    %s101 = sphi 0, %s103
    %s104 = sphi 0, %s101
    %s105 = sphi 0, %s104
    %s121 = sphi 0, %s105
    %s127 = sphi 0, %s129
    %s130 = sphi 0, %s127
    %s131 = sphi 0, %s130
    %s147 = sphi 0, %s131
    %s155 = sphi 0, %s157
    %s158 = sphi 0, %s155
    %s159 = sphi 0, %s158
    %s175 = sphi 0, %s159
  $region4: #{clip_vision_forward.18} parent=0 // loop_header_branch
    %14 = sbr.rel (%p12) target = $region8
  $region5: #{clip_vision_forward.18} parent=0 // loop_body
    %s16 = ssub.s32 %s11, 1
    %s17 = ssub.s32 %s11, 2
    %s24 = sadd.s32 1, %s19
    %p25 = scmp.ge.s32.totalorder %s24, 1
    %s26 = scalar_select %p25, 0, %s24
    %s27 = sadd.s32 1, %s18
    %s28 = scalar_select %p25, %s27, %s18
    %p29 = scmp.ge.s32.totalorder %s28, 2
    %s30 = scalar_select %p29, 0, %s28
    %s31 = ssub.s32 %s18, %s30
    %p32 = scmp.eq.s32.totalorder %s31, 0
    %s34 = sadd.s32 %s33, 1
    %s35 = scalar_select %p32, %s33, %s34
    %p38 = pneg %p32
    %p39 = scmp.eq.s32.totalorder %s11, 1
    %p40 = por %p38, %p39
    %p41 = scmp.ne.s32.totalorder %s33, %s36
    %p42 = scmp.eq.s32.totalorder %s11, 0
    %p43 = por %p41, %p42
    %p44 = scmp.ne.s32.totalorder %s33, %s36
    %p45 = scmp.eq.s32.totalorder %s16, 1
    %p46 = por %p44, %p45
    %p47 = scmp.ne.s32.totalorder %s36, %s37
    %p48 = scmp.eq.s32.totalorder %s16, 0
    %p49 = por %p47, %p48
    %p50 = scmp.ne.s32.totalorder %s36, %s37
    %p51 = scmp.eq.s32.totalorder %s17, 1
    %p52 = por %p50, %p51
    %p54 = scmp.ne.s32.totalorder %s37, %s53
    %p55 = scmp.eq.s32.totalorder %s17, 0
    %p56 = por %p54, %p55
    %s58 = sadd.s32 %s57, 1
    %p61 = scmp.eq.s32.totalorder %s11, 1
    %p62 = scmp.ne.s32.totalorder %s57, %s59
    %p63 = scmp.eq.s32.totalorder %s11, 0
    %p64 = por %p62, %p63
    %p65 = scmp.ne.s32.totalorder %s57, %s59
    %p66 = scmp.eq.s32.totalorder %s16, 1
    %p67 = por %p65, %p66
    %p68 = scmp.ne.s32.totalorder %s59, %s60
    %p69 = scmp.eq.s32.totalorder %s16, 0
    %p70 = por %p68, %p69
    %p71 = scmp.ne.s32.totalorder %s59, %s60
    %p72 = scmp.eq.s32.totalorder %s17, 1
    %p73 = por %p71, %p72
    %p75 = scmp.ne.s32.totalorder %s60, %s74
    %p76 = scmp.eq.s32.totalorder %s17, 0
    %p77 = por %p75, %p76
    %s79 = sadd.s32 %s78, 1
    %p82 = scmp.eq.s32.totalorder %s11, 1
    %p83 = scmp.ne.s32.totalorder %s78, %s80
    %p84 = scmp.eq.s32.totalorder %s11, 0
    %p85 = por %p83, %p84
    %p86 = scmp.ne.s32.totalorder %s78, %s80
    %p87 = scmp.eq.s32.totalorder %s16, 1
    %p88 = por %p86, %p87
    %p89 = scmp.ne.s32.totalorder %s80, %s81
    %p90 = scmp.eq.s32.totalorder %s16, 0
    %p91 = por %p89, %p90
    %p92 = scmp.ne.s32.totalorder %s80, %s81
    %p93 = scmp.eq.s32.totalorder %s17, 1
    %p94 = por %p92, %p93
    %p96 = scmp.ne.s32.totalorder %s81, %s95
    %p97 = scmp.eq.s32.totalorder %s17, 0
    %p98 = por %p96, %p97
    %s99 = ssub.s32 %s19, %s26
    %p100 = scmp.eq.s32.totalorder %s99, 0
    %s102 = sadd.s32 %s101, 1
    %s103 = scalar_select %p100, %s101, %s102
    %p106 = pneg %p100
    %p107 = scmp.eq.s32.totalorder %s11, 1
    %p108 = por %p106, %p107
    %p109 = scmp.ne.s32.totalorder %s101, %s104
    %p110 = scmp.eq.s32.totalorder %s11, 0
    %p111 = por %p109, %p110
    %p112 = scmp.ne.s32.totalorder %s101, %s104
    %p113 = scmp.eq.s32.totalorder %s16, 1
    %p114 = por %p112, %p113
    %p115 = scmp.ne.s32.totalorder %s104, %s105
    %p116 = scmp.eq.s32.totalorder %s16, 0
    %p117 = por %p115, %p116
    %p118 = scmp.ne.s32.totalorder %s104, %s105
    %p119 = scmp.eq.s32.totalorder %s17, 1
    %p120 = por %p118, %p119
    %p122 = scmp.ne.s32.totalorder %s105, %s121
    %p123 = scmp.eq.s32.totalorder %s17, 0
    %p124 = por %p122, %p123
    %s125 = ssub.s32 %s19, %s26
    %p126 = scmp.eq.s32.totalorder %s125, 0
    %s128 = sadd.s32 %s127, 1
    %s129 = scalar_select %p126, %s127, %s128
    %p132 = pneg %p126
    %p133 = scmp.eq.s32.totalorder %s11, 1
    %p134 = por %p132, %p133
    %p135 = scmp.ne.s32.totalorder %s127, %s130
    %p136 = scmp.eq.s32.totalorder %s11, 0
    %p137 = por %p135, %p136
    %p138 = scmp.ne.s32.totalorder %s127, %s130
    %p139 = scmp.eq.s32.totalorder %s16, 1
    %p140 = por %p138, %p139
    %p141 = scmp.ne.s32.totalorder %s130, %s131
    %p142 = scmp.eq.s32.totalorder %s16, 0
    %p143 = por %p141, %p142
    %p144 = scmp.ne.s32.totalorder %s130, %s131
    %p145 = scmp.eq.s32.totalorder %s17, 1
    %p146 = por %p144, %p145
    %p148 = scmp.ne.s32.totalorder %s131, %s147
    %p149 = scmp.eq.s32.totalorder %s17, 0
    %p150 = por %p148, %p149
    %s151 = ssub.s32 %s18, %s30
    %s152 = ssub.s32 %s19, %s26
    %s153 = sor.u32 %s151, %s152
    %p154 = scmp.eq.s32.totalorder %s153, 0
    %s156 = sadd.s32 %s155, 1
    %s157 = scalar_select %p154, %s155, %s156
    %p160 = pneg %p154
    %p161 = scmp.eq.s32.totalorder %s11, 1
    %p162 = por %p160, %p161
    %p163 = scmp.ne.s32.totalorder %s155, %s158
    %p164 = scmp.eq.s32.totalorder %s11, 0
    %p165 = por %p163, %p164
    %p166 = scmp.ne.s32.totalorder %s155, %s158
    %p167 = scmp.eq.s32.totalorder %s16, 1
    %p168 = por %p166, %p167
    %p169 = scmp.ne.s32.totalorder %s158, %s159
    %p170 = scmp.eq.s32.totalorder %s16, 0
    %p171 = por %p169, %p170
    %p172 = scmp.ne.s32.totalorder %s158, %s159
    %p173 = scmp.eq.s32.totalorder %s17, 1
    %p174 = por %p172, %p173
    %p176 = scmp.ne.s32.totalorder %s159, %s175
    %p177 = scmp.eq.s32.totalorder %s17, 0
    %p178 = por %p176, %p177
    %p179 = scmp.le.s32.totalorder 1, %s11
    %p180 = scmp.lt.s32.totalorder %s11, 3
    %p181 = pnand %p179, %p180
    %p182 = pneg %p181
    // Predicated region
    $region9: #{clip_vision_forward.18} parent=5 // pred_check
      _
    $region10: #{clip_vision_forward.18} parent=5 // pred_check_branch
      %184 = sbr.rel (%p181) target = $region12
    $region11: #{clip_vision_forward.18} parent=5 // pred_region
      %s185 = ssub.s32 %s11, 1
      // Predicated region
      $region13: #{clip_vision_forward.18} parent=11 // pred_check
        %p186 = pneg %p70
      $region14: #{clip_vision_forward.18} parent=11 // pred_check_branch
        %188 = sbr.rel (%p186) target = $region16
      $region15: #{clip_vision_forward.18} parent=11 // pred_region
        _
      $region16: #{clip_vision_forward.18} parent=11 // pred_fallthru
        _
      // Predicated region
      $region17: #{clip_vision_forward.18} parent=11 // pred_check
        %p189 = pneg %p91
      $region18: #{clip_vision_forward.18} parent=11 // pred_check_branch
        %191 = sbr.rel (%p189) target = $region20
      $region19: #{clip_vision_forward.18} parent=11 // pred_region
        _
      $region20: #{clip_vision_forward.18} parent=11 // pred_fallthru
        _
      // Predicated region
      $region21: #{clip_vision_forward.18} parent=11 // pred_check
        %p192 = pneg %p117
      $region22: #{clip_vision_forward.18} parent=11 // pred_check_branch
        %194 = sbr.rel (%p192) target = $region24
      $region23: #{clip_vision_forward.18} parent=11 // pred_region
        %p195 = scmp.lt.s32.totalorder %s21, 0
        %s196 = scalar_select %p195, %s21, 0
        %s197 = smul.addr %s196, 4
        %s198 = scalar_lea.vmem %s3, %s197
      $region24: #{clip_vision_forward.18} parent=11 // pred_fallthru
        _
      // Predicated region
      $region25: #{clip_vision_forward.18} parent=11 // pred_check
        %p199 = pneg %p143
      $region26: #{clip_vision_forward.18} parent=11 // pred_check_branch
        %201 = sbr.rel (%p199) target = $region28
      $region27: #{clip_vision_forward.18} parent=11 // pred_region
        %p202 = scmp.lt.s32.totalorder %s21, 0
        %s203 = scalar_select %p202, %s21, 0
        %s204 = scalar_lea.vmem %s4, %s203
      $region28: #{clip_vision_forward.18} parent=11 // pred_fallthru
        _
    $region12: #{clip_vision_forward.18} parent=5 // pred_fallthru
      _
    %p205 = scmp.lt.s32.totalorder %s11, 2
    // Predicated region
    $region29: #{clip_vision_forward.18} parent=5 // pred_check
      %p206 = pneg %p205
    $region30: #{clip_vision_forward.18} parent=5 // pred_check_branch
      %208 = sbr.rel (%p206) target = $region32
    $region31: #{clip_vision_forward.18} parent=5 // pred_region
      // Predicated region
      $region33: #{clip_vision_forward.18} parent=31 // pred_check
        %p209 = pneg %p43
      $region34: #{clip_vision_forward.18} parent=31 // pred_check_branch
        %211 = sbr.rel (%p209) target = $region36
      $region35: #{clip_vision_forward.18} parent=31 // pred_region
        %s212 = smul.u32 3, %s18
        %p213 = scmp.lt.s32.totalorder %s212, 5
        %s214 = scalar_select %p213, %s212, 5
        %s215 = smul.addr %s214, 4
        %s216 = scalar_lea.vmem %s0, %s215
        %s217 = smul.u32 3, %s18
      $region36: #{clip_vision_forward.18} parent=31 // pred_fallthru
        _
    $region32: #{clip_vision_forward.18} parent=5 // pred_fallthru
      _
    %p218 = scmp.le.s32.totalorder 1, %s11
    %p219 = scmp.lt.s32.totalorder %s11, 3
    %p220 = pnand %p218, %p219
    %p221 = pneg %p220
    // Predicated region
    $region37: #{clip_vision_forward.18} parent=5 // pred_check
      _
    $region38: #{clip_vision_forward.18} parent=5 // pred_check_branch
      %223 = sbr.rel (%p220) target = $region40
    $region39: #{clip_vision_forward.18} parent=5 // pred_region
      %s224 = ssub.s32 %s11, 1
      %s225 = smul.u32 3, %s20
      %p226 = scmp.lt.s32.totalorder %s225, 5
      %s227 = scalar_select %p226, %s225, 5
      %s228 = smul.addr %s227, 4
      %s229 = scalar_lea.vmem %s0, %s228
      %p230 = pneg %p49
      %p231 = pneg %p46
      %p232 = pneg %p70
      %p233 = pneg %p67
      %p234 = pneg %p91
      %p235 = pneg %p88
      %p236 = scmp.lt.s32.totalorder %s21, 0
      %s237 = scalar_select %p236, %s21, 0
      %s238 = smul.addr %s237, 4
      %s239 = scalar_lea.vmem %s3, %s238
      %p240 = pneg %p117
      %p241 = pneg %p114
      %p242 = scmp.lt.s32.totalorder %s21, 0
      %s243 = scalar_select %p242, %s21, 0
      %s244 = scalar_lea.vmem %s4, %s243
      %p245 = pneg %p143
      %p246 = pneg %p140
      %p247 = pneg %p171
      %p248 = pneg %p168
      %s249 = smul.u32 3, %s20
      %p250 = scmp.lt.s32.totalorder %s249, 5
      %s251 = scalar_select %p250, %s249, 5
      %p252 = scmp.lt.s32.totalorder %s21, 0
      %s253 = scalar_select %p252, %s21, 0
      %s254 = sadd.s32 %s253, %s251
      %s255 = smul.addr %s254, 4
      %s256 = scalar_lea.vmem %s5, %s255
      %s257 = smul.u32 3, %s20
      %p258 = scmp.lt.s32.totalorder %s257, 5
      %s259 = scalar_select %p258, %s257, 5
      %s260 = smul.addr %s259, 4
      %s261 = scalar_lea.vmem %s0, %s260
      %s262 = smul.u32 3, %s20
      %p263 = scmp.lt.s32.totalorder %s21, 0
      %s264 = scalar_select %p263, %s21, 0
      %s265 = smul.addr %s264, 4
      %s266 = scalar_lea.vmem %s3, %s265
      %p267 = scmp.lt.s32.totalorder %s21, 0
      %s268 = scalar_select %p267, %s21, 0
      %s269 = scalar_lea.vmem %s4, %s268
      %s270 = smul.u32 3, %s20
      %p271 = scmp.lt.s32.totalorder %s270, 5
      %s272 = scalar_select %p271, %s270, 5
      %p273 = scmp.lt.s32.totalorder %s21, 0
      %s274 = scalar_select %p273, %s21, 0
      %s275 = sadd.s32 %s274, %s272
      %s276 = smul.addr %s275, 4
      %s277 = scalar_lea.vmem %s5, %s276
      %s278 = smul.u32 3, %s20
      %p280 = scmp.eq.s32.totalorder %s21, 0
      // Predicated region
      $region41: #{clip_vision_forward.18} parent=39 // pred_check
        %p281 = pneg %p280
      $region42: #{clip_vision_forward.18} parent=39 // pred_check_branch
        %283 = sbr.rel (%p281) target = $region44
      $region43: #{clip_vision_forward.18} parent=39 // pred_region
        %v284 = vld [vmem:[%s261] sm:$0xf]
        %v285 = vld [vmem:[%s261 + $0x4] sm:$0xf]
        %v286 = vld [vmem:[%s261 + $0x8] sm:$0xf]
        %v287 = vunpack.c.l.bf16 %v284
        %v288 = vunpack.c.l.bf16 %v285
        %v289 = vunpack.c.l.bf16 %v286
        %vm290 = vcmask 261120
        %v291 = vsel %vm290, %v287, 0.0
        %292 = vadd.xlane.f32.xlu0 %v291
        %v293 = vpop.xlane.xlu0 %292
        %v294 = vsel %vm290, %v288, 0.0
        %295 = vadd.xlane.f32.xlu0 %v294
        %v296 = vpop.xlane.xlu0 %295
        %v297 = vsel %vm290, %v289, 0.0
        %298 = vadd.xlane.f32.xlu0 %v297
        %v299 = vpop.xlane.xlu0 %298
        %v300 = vrcp.pop 32.0
        %v301 = vmul.f32 32.0, %v300
        %v302 = vsub.f32 1.0, %v301
        %v303 = vmul.f32 %v300, %v302
        %v304 = vadd.f32 %v300, %v303
        %vm305 = vweird.f32 %v300
        %v306 = vsel %vm305, %v300, %v304
        %v307 = vmul.f32 %v293, %v306
        %v308 = vmul.f32 %v296, %v306
        %v309 = vmul.f32 %v299, %v306
        %v310 = vsub.f32 %v287, %v307
        %v311 = vsub.f32 %v288, %v308
        %v312 = vsub.f32 %v289, %v309
        %v313 = vmul.f32 %v310, %v310
        %v314 = vmul.f32 %v311, %v311
        %v315 = vmul.f32 %v312, %v312
        %v316 = vsel %vm290, %v313, 0.0
        %317 = vadd.xlane.f32.xlu0 %v316
        %v318 = vpop.xlane.xlu0 %317
        %v319 = vsel %vm290, %v314, 0.0
        %320 = vadd.xlane.f32.xlu0 %v319
        %v321 = vpop.xlane.xlu0 %320
        %v322 = vsel %vm290, %v315, 0.0
        %323 = vadd.xlane.f32.xlu0 %v322
        %v324 = vpop.xlane.xlu0 %323
        %v325 = vmul.f32 %v318, %v306
        %v326 = vmul.f32 %v321, %v306
        %v327 = vmul.f32 %v324, %v306
        %v328 = vadd.f32 %v325, 1e-05
        %v329 = vadd.f32 %v326, 1e-05
        %v330 = vadd.f32 %v327, 1e-05
        %v331 = vrsqrt.pop %v328
        %v332 = vmul.f32 %v331, %v328
        %v333 = vmul.f32 %v332, %v331
        %v334 = vmul.f32 0.5, %v333
        %v335 = vsub.f32 1.5, %v334
        %v336 = vmul.f32 %v331, %v335
        %vm337 = vweird.f32 %v328
        %vm338 = vweird.f32 %v331
        %vm339 = vmor %vm337, %vm338
        %v340 = vsel %vm339, %v331, %v336
        %v341 = vrsqrt.pop %v329
        %v342 = vmul.f32 %v341, %v329
        %v343 = vmul.f32 %v342, %v341
        %v344 = vmul.f32 0.5, %v343
        %v345 = vsub.f32 1.5, %v344
        %v346 = vmul.f32 %v341, %v345
        %vm347 = vweird.f32 %v329
        %vm348 = vweird.f32 %v341
        %vm349 = vmor %vm347, %vm348
        %v350 = vsel %vm349, %v341, %v346
        %v351 = vrsqrt.pop %v330
        %v352 = vmul.f32 %v351, %v330
        %v353 = vmul.f32 %v352, %v351
        %v354 = vmul.f32 0.5, %v353
        %v355 = vsub.f32 1.5, %v354
        %v356 = vmul.f32 %v351, %v355
        %vm357 = vweird.f32 %v330
        %vm358 = vweird.f32 %v351
        %vm359 = vmor %vm357, %vm358
        %v360 = vsel %vm359, %v351, %v356
        %v361 = vmul.f32 %v310, %v340
        %v362 = vmul.f32 %v311, %v350
        %v363 = vmul.f32 %v312, %v360
        %v364 = vld [vmem:[%s1] sm:$0x1]
        %v366 = vperm.slane %v364, 0
        %v368 = vmul.f32 %v361, %v366
        %v369 = vmul.f32 %v362, %v366
        %v370 = vmul.f32 %v363, %v366
        %v371 = vld [vmem:[%s2] sm:$0x1]
        %v373 = vperm.slane %v371, 0
        %v375 = vadd.f32 %v368, %v373
        %v376 = vadd.f32 %v369, %v373
        %v377 = vadd.f32 %v370, %v373
        %v378 = vpack.c.bf16 %v375, %v375
        %v379 = vpack.c.bf16 %v376, %v376
        %v380 = vpack.c.bf16 %v377, %v377
        %vm381 = vcmask 257024
        %382 = vst.msk [vmem:[#allocation2] sm:$0xf] %vm381, %v378
        %383 = vst.msk [vmem:[#allocation2 + $0x4] sm:$0xf] %vm381, %v379
        %384 = vst.msk [vmem:[#allocation2 + $0x8] sm:$0xf] %vm381, %v380
      $region44: #{clip_vision_forward.18} parent=39 // pred_fallthru
        _
      %v385 = vld [vmem:[#allocation2] sm:$0xf]
      %v386 = vld [vmem:[#allocation2 + $0x4] sm:$0xf]
      %v387 = vld [vmem:[#allocation2 + $0x8] sm:$0xf]
      %v388 = vld [vmem:[%s266] sm:$0xf]
      %v389 = vld [vmem:[%s266 + $0x4] sm:$0xf]
      %v390 = vld [vmem:[%s266 + $0x8] sm:$0xf]
      %v391 = vld [vmem:[%s266 + $0xc] sm:$0xf]
      %v392 = vld [vmem:[%s269] sm:$0x1]
      %v394 = vperm.slane %v392, 0
      %v399 = vunpack.c.l.b16 %v385
      %v400 = vunpack.c.l.b16 %v386
      %v401 = vunpack.c.l.b16 %v387
      %v402 = vpack.c.b16 %v400, %v399
      %v403 = vpack.c.b16 %v401, %v401
      %v408 = vunpack.c.l.b16 %v388
      %v409 = vunpack.c.l.b16 %v389
      %v410 = vunpack.c.l.b16 %v390
      %v411 = vunpack.c.l.b16 %v391
      %v412 = vpack.c.b16 %v409, %v408
      %v413 = vpack.c.b16 %v411, %v410
      %vm416 = vcmask 261120
      %v418 = vsel %vm416, %v402, 0
      %v421 = vsel %vm416, %v403, 0
      %423 = vmatpush.bf16.msra.mxu0 0
      %424 = vmatpush.bf16.msra.mxu0 0
      %425 = vmatpush.bf16.msra.mxu0 0
      %426 = vmatpush.bf16.msra.mxu0 0
      %427 = vmatpush.bf16.msra.mxu0 0
      %428 = vmatpush.bf16.msra.mxu0 0
      %429 = vmatpush.bf16.msra.mxu0 %v413
      %430 = vmatpush.bf16.msra.mxu0 %v412
      %431 = vmatmul.bf16.gmra.mxu0 %v418
      %v432 = vpop.f32.mrf.mxu0
      %v433 = vadd.f32 %v394, %v432
      %v434 = vpop.f32.mrf.mxu0
      %v435 = vadd.f32 %v394, %v434
      %436 = vmatmul.bf16.gmra.mxu0 %v421
      %v437 = vpop.f32.mrf.mxu0
      %v438 = vadd.f32 %v394, %v437
      %v439 = vpop.f32.mrf.mxu0
      %440 = vdwg.mxu0
      %v441 = vmul.f32 %v433, 1.702
      %v442 = vmul.f32 %v435, 1.702
      %v443 = vmul.f32 %v438, 1.702
      %v444 = vxor.u32 %v441, 2147483648
      %v445 = vxor.u32 %v442, 2147483648
      %v446 = vxor.u32 %v443, 2147483648
      %v447 = vmul.f32 %v444, 1.442695
      %v448 = vpow.pop %v447
      %v449 = vmul.f32 %v445, 1.442695
      %v450 = vpow.pop %v449
      %v451 = vmul.f32 %v446, 1.442695
      %v452 = vpow.pop %v451
      %v453 = vadd.f32 %v448, 1.0
      %v454 = vadd.f32 %v450, 1.0
      %v455 = vadd.f32 %v452, 1.0
      %v456 = vrcp.pop %v453
      %v457 = vmul.f32 %v453, %v456
      %v458 = vsub.f32 1.0, %v457
      %v459 = vmul.f32 %v456, %v458
      %v460 = vadd.f32 %v456, %v459
      %vm461 = vweird.f32 %v453
      %vm462 = vweird.f32 %v456
      %vm463 = vmor %vm461, %vm462
      %v464 = vsel %vm463, %v456, %v460
      %v465 = vand.u32 2147483647, %v453
      %vm466 = vcmp.eq.f32.partialorder %v465, 8.507059e+37
      %v467 = vand.u32 %v453, 2147483648
      %v468 = vor.u32 1.1754944e-38, %v467
      %v469 = vsel %vm466, %v468, %v464
      %v470 = vmul.f32 1.0, %v469
      %v471 = vrcp.pop %v454
      %v472 = vmul.f32 %v454, %v471
      %v473 = vsub.f32 1.0, %v472
      %v474 = vmul.f32 %v471, %v473
      %v475 = vadd.f32 %v471, %v474
      %vm476 = vweird.f32 %v454
      %vm477 = vweird.f32 %v471
      %vm478 = vmor %vm476, %vm477
      %v479 = vsel %vm478, %v471, %v475
      %v480 = vand.u32 2147483647, %v454
      %vm481 = vcmp.eq.f32.partialorder %v480, 8.507059e+37
      %v482 = vand.u32 %v454, 2147483648
      %v483 = vor.u32 1.1754944e-38, %v482
      %v484 = vsel %vm481, %v483, %v479
      %v485 = vmul.f32 1.0, %v484
      %v486 = vrcp.pop %v455
      %v487 = vmul.f32 %v455, %v486
      %v488 = vsub.f32 1.0, %v487
      %v489 = vmul.f32 %v486, %v488
      %v490 = vadd.f32 %v486, %v489
      %vm491 = vweird.f32 %v455
      %vm492 = vweird.f32 %v486
      %vm493 = vmor %vm491, %vm492
      %v494 = vsel %vm493, %v486, %v490
      %v495 = vand.u32 2147483647, %v455
      %vm496 = vcmp.eq.f32.partialorder %v495, 8.507059e+37
      %v497 = vand.u32 %v455, 2147483648
      %v498 = vor.u32 1.1754944e-38, %v497
      %v499 = vsel %vm496, %v498, %v494
      %v500 = vmul.f32 1.0, %v499
      %v501 = vmul.f32 %v433, %v470
      %v502 = vmul.f32 %v435, %v485
      %v503 = vmul.f32 %v438, %v500
      %v504 = vpack.c.bf16 %v501, %v501
      %v505 = vpack.c.bf16 %v502, %v502
      %v506 = vpack.c.bf16 %v503, %v503
      %vm507 = vcmask 519168
      %508 = vst.msk [vmem:[%s277] sm:$0xf] %vm507, %v504
      %509 = vst.msk [vmem:[%s277 + $0x4] sm:$0xf] %vm507, %v505
      %510 = vst.msk [vmem:[%s277 + $0x8] sm:$0xf] %vm507, %v506
      %s511 = smul.u32 3, %s20
      %p512 = scmp.lt.s32.totalorder %s511, 5
      %s513 = scalar_select %p512, %s511, 5
      %p514 = scmp.lt.s32.totalorder %s21, 0
      %s515 = scalar_select %p514, %s21, 0
      %s516 = sadd.s32 %s515, %s513
      %s517 = smul.addr %s516, 4
      %s518 = scalar_lea.vmem %s5, %s517
      // Predicated region
      $region45: #{clip_vision_forward.18} parent=39 // pred_check
        %p519 = pneg %p168
      $region46: #{clip_vision_forward.18} parent=39 // pred_check_branch
        %521 = sbr.rel (%p519) target = $region48
      $region47: #{clip_vision_forward.18} parent=39 // pred_region
        %s522 = smul.u32 3, %s20
      $region48: #{clip_vision_forward.18} parent=39 // pred_fallthru
        _
    $region40: #{clip_vision_forward.18} parent=5 // pred_fallthru
      _
    %p523 = scmp.le.s32.totalorder 2, %s11
    // Predicated region
    $region49: #{clip_vision_forward.18} parent=5 // pred_check
      %p524 = pneg %p523
    $region50: #{clip_vision_forward.18} parent=5 // pred_check_branch
      %526 = sbr.rel (%p524) target = $region52
    $region51: #{clip_vision_forward.18} parent=5 // pred_region
      %s527 = ssub.s32 %s11, 2
      // Predicated region
      $region53: #{clip_vision_forward.18} parent=51 // pred_check
        %p528 = pneg %p174
      $region54: #{clip_vision_forward.18} parent=51 // pred_check_branch
        %530 = sbr.rel (%p528) target = $region56
      $region55: #{clip_vision_forward.18} parent=51 // pred_region
        %s531 = smul.u32 3, %s22
        %p532 = scmp.lt.s32.totalorder %s531, 5
        %s533 = scalar_select %p532, %s531, 5
        %p534 = scmp.lt.s32.totalorder %s23, 0
        %s535 = scalar_select %p534, %s23, 0
        %s536 = sadd.s32 %s535, %s533
        %s537 = smul.addr %s536, 4
        %s538 = scalar_lea.vmem %s5, %s537
      $region56: #{clip_vision_forward.18} parent=51 // pred_fallthru
        _
    $region52: #{clip_vision_forward.18} parent=5 // pred_fallthru
      _
  $region6: #{clip_vision_forward.18} parent=0 // loop_footer
    %s15 = sadd.s32 1, %s11
  $region7: #{clip_vision_forward.18} parent=0 // loop_footer_branch
    %10 = sbr.rel target = $region3
  $region8: #{clip_vision_forward.18} parent=0 // loop_exit
    _

// kernel: clip_vision_forward.19
$region0: #{clip_vision_forward.19}
  #allocation0 [shape = 'u32[]', space=smem, size = 0x4, offset = 0x4, fixed_abs, tag = 'smem constant byte address 0x4 - core index']
  #allocation1 [shape = 'u32[72,128]{1,0:T(1,128)}', space=vmem, size = 0x9000, scoped, tag = 'internal scratch']
  %s0 = inlined_call_operand.vmem [shape: bf16[48,64], index: 0, kind: input, shape index: {}]
  %s1 = inlined_call_operand.vmem [shape: bf16[64,32], index: 1, kind: input, shape index: {}]
  %s2 = inlined_call_operand.vmem [shape: f32[1,32], index: 2, kind: input, shape index: {}]
  %s3 = inlined_call_operand.vmem [shape: bf16[48,32], index: 3, kind: input, shape index: {}]
  %s4 = inlined_call_operand.vmem [shape: bf16[48,32], index: 4, kind: output, shape index: {}]
  %s5 = sld [smem:[#allocation0]]
  $region49: #{clip_vision_forward.19} parent=0
    _
  %s7 = ssub.s32 1, %s5
  %s8 = scalar_select 0, %s7, %s5
  loop: start=0, step=1, limit=4
  $region2: #{clip_vision_forward.19} parent=0 // loop_pre_header
    _
  $region3: #{clip_vision_forward.19} parent=0 // loop_header
    %s10 = sphi 0, %s14
    %p11 = scmp.ge.s32.totalorder %s10, 4
    %s17 = sphi 0, %s29
    %s18 = sphi 0, %s25
    %s19 = sphi 0, %s17
    %s20 = sphi 0, %s18
    %s21 = sphi 0, %s19
    %s22 = sphi 0, %s20
    %s32 = sphi 0, %s34
    %s35 = sphi 0, %s32
    %s36 = sphi 0, %s35
    %s52 = sphi 0, %s36
    %s58 = sphi 0, %s60
    %s61 = sphi 0, %s58
    %s62 = sphi 0, %s61
    %s78 = sphi 0, %s62
    %s84 = sphi 0, %s86
    %s87 = sphi 0, %s84
    %s88 = sphi 0, %s87
    %s104 = sphi 0, %s88
    %s112 = sphi 0, %s114
    %s115 = sphi 0, %s112
    %s116 = sphi 0, %s115
    %s132 = sphi 0, %s116
    %s140 = sphi 0, %s142
    %s143 = sphi 0, %s140
    %s144 = sphi 0, %s143
    %s160 = sphi 0, %s144
  $region4: #{clip_vision_forward.19} parent=0 // loop_header_branch
    %13 = sbr.rel (%p11) target = $region8
  $region5: #{clip_vision_forward.19} parent=0 // loop_body
    %s15 = ssub.s32 %s10, 1
    %s16 = ssub.s32 %s10, 2
    %s23 = sadd.s32 1, %s18
    %p24 = scmp.ge.s32.totalorder %s23, 2
    %s25 = scalar_select %p24, 0, %s23
    %s26 = sadd.s32 1, %s17
    %s27 = scalar_select %p24, %s26, %s17
    %p28 = scmp.ge.s32.totalorder %s27, 1
    %s29 = scalar_select %p28, 0, %s27
    %s30 = ssub.s32 %s18, %s25
    %p31 = scmp.eq.s32.totalorder %s30, 0
    %s33 = sadd.s32 %s32, 1
    %s34 = scalar_select %p31, %s32, %s33
    %p37 = pneg %p31
    %p38 = scmp.eq.s32.totalorder %s10, 1
    %p39 = por %p37, %p38
    %p40 = scmp.ne.s32.totalorder %s32, %s35
    %p41 = scmp.eq.s32.totalorder %s10, 0
    %p42 = por %p40, %p41
    %p43 = scmp.ne.s32.totalorder %s32, %s35
    %p44 = scmp.eq.s32.totalorder %s15, 1
    %p45 = por %p43, %p44
    %p46 = scmp.ne.s32.totalorder %s35, %s36
    %p47 = scmp.eq.s32.totalorder %s15, 0
    %p48 = por %p46, %p47
    %p49 = scmp.ne.s32.totalorder %s35, %s36
    %p50 = scmp.eq.s32.totalorder %s16, 1
    %p51 = por %p49, %p50
    %p53 = scmp.ne.s32.totalorder %s36, %s52
    %p54 = scmp.eq.s32.totalorder %s16, 0
    %p55 = por %p53, %p54
    %s56 = ssub.s32 %s17, %s29
    %p57 = scmp.eq.s32.totalorder %s56, 0
    %s59 = sadd.s32 %s58, 1
    %s60 = scalar_select %p57, %s58, %s59
    %p63 = pneg %p57
    %p64 = scmp.eq.s32.totalorder %s10, 1
    %p65 = por %p63, %p64
    %p66 = scmp.ne.s32.totalorder %s58, %s61
    %p67 = scmp.eq.s32.totalorder %s10, 0
    %p68 = por %p66, %p67
    %p69 = scmp.ne.s32.totalorder %s58, %s61
    %p70 = scmp.eq.s32.totalorder %s15, 1
    %p71 = por %p69, %p70
    %p72 = scmp.ne.s32.totalorder %s61, %s62
    %p73 = scmp.eq.s32.totalorder %s15, 0
    %p74 = por %p72, %p73
    %p75 = scmp.ne.s32.totalorder %s61, %s62
    %p76 = scmp.eq.s32.totalorder %s16, 1
    %p77 = por %p75, %p76
    %p79 = scmp.ne.s32.totalorder %s62, %s78
    %p80 = scmp.eq.s32.totalorder %s16, 0
    %p81 = por %p79, %p80
    %s82 = ssub.s32 %s17, %s29
    %p83 = scmp.eq.s32.totalorder %s82, 0
    %s85 = sadd.s32 %s84, 1
    %s86 = scalar_select %p83, %s84, %s85
    %p89 = pneg %p83
    %p90 = scmp.eq.s32.totalorder %s10, 1
    %p91 = por %p89, %p90
    %p92 = scmp.ne.s32.totalorder %s84, %s87
    %p93 = scmp.eq.s32.totalorder %s10, 0
    %p94 = por %p92, %p93
    %p95 = scmp.ne.s32.totalorder %s84, %s87
    %p96 = scmp.eq.s32.totalorder %s15, 1
    %p97 = por %p95, %p96
    %p98 = scmp.ne.s32.totalorder %s87, %s88
    %p99 = scmp.eq.s32.totalorder %s15, 0
    %p100 = por %p98, %p99
    %p101 = scmp.ne.s32.totalorder %s87, %s88
    %p102 = scmp.eq.s32.totalorder %s16, 1
    %p103 = por %p101, %p102
    %p105 = scmp.ne.s32.totalorder %s88, %s104
    %p106 = scmp.eq.s32.totalorder %s16, 0
    %p107 = por %p105, %p106
    %s108 = ssub.s32 %s18, %s25
    %s109 = ssub.s32 %s17, %s29
    %s110 = sor.u32 %s108, %s109
    %p111 = scmp.eq.s32.totalorder %s110, 0
    %s113 = sadd.s32 %s112, 1
    %s114 = scalar_select %p111, %s112, %s113
    %p117 = pneg %p111
    %p118 = scmp.eq.s32.totalorder %s10, 1
    %p119 = por %p117, %p118
    %p120 = scmp.ne.s32.totalorder %s112, %s115
    %p121 = scmp.eq.s32.totalorder %s10, 0
    %p122 = por %p120, %p121
    %p123 = scmp.ne.s32.totalorder %s112, %s115
    %p124 = scmp.eq.s32.totalorder %s15, 1
    %p125 = por %p123, %p124
    %p126 = scmp.ne.s32.totalorder %s115, %s116
    %p127 = scmp.eq.s32.totalorder %s15, 0
    %p128 = por %p126, %p127
    %p129 = scmp.ne.s32.totalorder %s115, %s116
    %p130 = scmp.eq.s32.totalorder %s16, 1
    %p131 = por %p129, %p130
    %p133 = scmp.ne.s32.totalorder %s116, %s132
    %p134 = scmp.eq.s32.totalorder %s16, 0
    %p135 = por %p133, %p134
    %s136 = ssub.s32 %s18, %s25
    %s137 = ssub.s32 %s17, %s29
    %s138 = sor.u32 %s136, %s137
    %p139 = scmp.eq.s32.totalorder %s138, 0
    %s141 = sadd.s32 %s140, 1
    %s142 = scalar_select %p139, %s140, %s141
    %p145 = pneg %p139
    %p146 = scmp.eq.s32.totalorder %s10, 1
    %p147 = por %p145, %p146
    %p148 = scmp.ne.s32.totalorder %s140, %s143
    %p149 = scmp.eq.s32.totalorder %s10, 0
    %p150 = por %p148, %p149
    %p151 = scmp.ne.s32.totalorder %s140, %s143
    %p152 = scmp.eq.s32.totalorder %s15, 1
    %p153 = por %p151, %p152
    %p154 = scmp.ne.s32.totalorder %s143, %s144
    %p155 = scmp.eq.s32.totalorder %s15, 0
    %p156 = por %p154, %p155
    %p157 = scmp.ne.s32.totalorder %s143, %s144
    %p158 = scmp.eq.s32.totalorder %s16, 1
    %p159 = por %p157, %p158
    %p161 = scmp.ne.s32.totalorder %s144, %s160
    %p162 = scmp.eq.s32.totalorder %s16, 0
    %p163 = por %p161, %p162
    %p164 = scmp.le.s32.totalorder 1, %s10
    %p165 = scmp.lt.s32.totalorder %s10, 3
    %p166 = pnand %p164, %p165
    %p167 = pneg %p166
    // Predicated region
    $region9: #{clip_vision_forward.19} parent=5 // pred_check
      _
    $region10: #{clip_vision_forward.19} parent=5 // pred_check_branch
      %169 = sbr.rel (%p166) target = $region12
    $region11: #{clip_vision_forward.19} parent=5 // pred_region
      %s170 = ssub.s32 %s10, 1
      // Predicated region
      $region13: #{clip_vision_forward.19} parent=11 // pred_check
        %p171 = pneg %p74
      $region14: #{clip_vision_forward.19} parent=11 // pred_check_branch
        %173 = sbr.rel (%p171) target = $region16
      $region15: #{clip_vision_forward.19} parent=11 // pred_region
        %p174 = scmp.lt.s32.totalorder %s19, 0
        %s175 = scalar_select %p174, %s19, 0
        %s176 = smul.addr %s175, 4
        %s177 = scalar_lea.vmem %s1, %s176
      $region16: #{clip_vision_forward.19} parent=11 // pred_fallthru
        _
      // Predicated region
      $region17: #{clip_vision_forward.19} parent=11 // pred_check
        %p178 = pneg %p100
      $region18: #{clip_vision_forward.19} parent=11 // pred_check_branch
        %180 = sbr.rel (%p178) target = $region20
      $region19: #{clip_vision_forward.19} parent=11 // pred_region
        %p181 = scmp.lt.s32.totalorder %s19, 0
        %s182 = scalar_select %p181, %s19, 0
        %s183 = scalar_lea.vmem %s2, %s182
      $region20: #{clip_vision_forward.19} parent=11 // pred_fallthru
        _
    $region12: #{clip_vision_forward.19} parent=5 // pred_fallthru
      _
    %p184 = scmp.lt.s32.totalorder %s10, 2
    // Predicated region
    $region21: #{clip_vision_forward.19} parent=5 // pred_check
      %p185 = pneg %p184
    $region22: #{clip_vision_forward.19} parent=5 // pred_check_branch
      %187 = sbr.rel (%p185) target = $region24
    $region23: #{clip_vision_forward.19} parent=5 // pred_region
      // Predicated region
      $region25: #{clip_vision_forward.19} parent=23 // pred_check
        %p188 = pneg %p42
      $region26: #{clip_vision_forward.19} parent=23 // pred_check_branch
        %190 = sbr.rel (%p188) target = $region28
      $region27: #{clip_vision_forward.19} parent=23 // pred_region
        %s191 = smul.u32 3, %s18
        %p192 = scmp.lt.s32.totalorder %s191, 5
        %s193 = scalar_select %p192, %s191, 5
        %s194 = smul.addr %s193, 4
        %s195 = scalar_lea.vmem %s0, %s194
        %s196 = smul.u32 3, %s18
      $region28: #{clip_vision_forward.19} parent=23 // pred_fallthru
        _
      // Predicated region
      $region29: #{clip_vision_forward.19} parent=23 // pred_check
        %p197 = pneg %p122
      $region30: #{clip_vision_forward.19} parent=23 // pred_check_branch
        %199 = sbr.rel (%p197) target = $region32
      $region31: #{clip_vision_forward.19} parent=23 // pred_region
        %s200 = smul.u32 3, %s18
        %p201 = scmp.lt.s32.totalorder %s200, 5
        %s202 = scalar_select %p201, %s200, 5
        %p203 = scmp.lt.s32.totalorder %s17, 0
        %s204 = scalar_select %p203, %s17, 0
        %s205 = sadd.s32 %s204, %s202
        %s206 = smul.addr %s205, 4
        %s207 = scalar_lea.vmem %s3, %s206
        %s208 = smul.u32 3, %s18
      $region32: #{clip_vision_forward.19} parent=23 // pred_fallthru
        _
    $region24: #{clip_vision_forward.19} parent=5 // pred_fallthru
      _
    %p209 = scmp.le.s32.totalorder 1, %s10
    %p210 = scmp.lt.s32.totalorder %s10, 3
    %p211 = pnand %p209, %p210
    %p212 = pneg %p211
    // Predicated region
    $region33: #{clip_vision_forward.19} parent=5 // pred_check
      _
    $region34: #{clip_vision_forward.19} parent=5 // pred_check_branch
      %214 = sbr.rel (%p211) target = $region36
    $region35: #{clip_vision_forward.19} parent=5 // pred_region
      %s215 = ssub.s32 %s10, 1
      %s216 = smul.u32 3, %s20
      %p217 = scmp.lt.s32.totalorder %s216, 5
      %s218 = scalar_select %p217, %s216, 5
      %s219 = smul.addr %s218, 4
      %s220 = scalar_lea.vmem %s0, %s219
      %p221 = pneg %p48
      %p222 = pneg %p45
      %p223 = scmp.lt.s32.totalorder %s19, 0
      %s224 = scalar_select %p223, %s19, 0
      %s225 = smul.addr %s224, 4
      %s226 = scalar_lea.vmem %s1, %s225
      %p227 = pneg %p74
      %p228 = pneg %p71
      %p229 = scmp.lt.s32.totalorder %s19, 0
      %s230 = scalar_select %p229, %s19, 0
      %s231 = scalar_lea.vmem %s2, %s230
      %p232 = pneg %p100
      %p233 = pneg %p97
      %s234 = smul.u32 3, %s20
      %p235 = scmp.lt.s32.totalorder %s234, 5
      %s236 = scalar_select %p235, %s234, 5
      %p237 = scmp.lt.s32.totalorder %s19, 0
      %s238 = scalar_select %p237, %s19, 0
      %s239 = sadd.s32 %s238, %s236
      %s240 = smul.addr %s239, 4
      %s241 = scalar_lea.vmem %s3, %s240
      %p242 = pneg %p128
      %p243 = pneg %p125
      %p244 = pneg %p156
      %p245 = pneg %p153
      %s246 = smul.u32 3, %s20
      %p247 = scmp.lt.s32.totalorder %s246, 5
      %s248 = scalar_select %p247, %s246, 5
      %p249 = scmp.lt.s32.totalorder %s19, 0
      %s250 = scalar_select %p249, %s19, 0
      %s251 = sadd.s32 %s250, %s248
      %s252 = smul.addr %s251, 4
      %s253 = scalar_lea.vmem %s4, %s252
      %s254 = smul.u32 3, %s20
      %p255 = scmp.lt.s32.totalorder %s254, 5
      %s256 = scalar_select %p255, %s254, 5
      %s257 = smul.addr %s256, 4
      %s258 = scalar_lea.vmem %s0, %s257
      %s259 = smul.u32 3, %s20
      %p260 = scmp.lt.s32.totalorder %s19, 0
      %s261 = scalar_select %p260, %s19, 0
      %s262 = smul.addr %s261, 4
      %s263 = scalar_lea.vmem %s1, %s262
      %p264 = scmp.lt.s32.totalorder %s19, 0
      %s265 = scalar_select %p264, %s19, 0
      %s266 = scalar_lea.vmem %s2, %s265
      %s267 = smul.u32 3, %s20
      %p268 = scmp.lt.s32.totalorder %s267, 5
      %s269 = scalar_select %p268, %s267, 5
      %p270 = scmp.lt.s32.totalorder %s19, 0
      %s271 = scalar_select %p270, %s19, 0
      %s272 = sadd.s32 %s271, %s269
      %s273 = smul.addr %s272, 4
      %s274 = scalar_lea.vmem %s3, %s273
      %s275 = smul.u32 3, %s20
      %s276 = smul.u32 3, %s20
      %p277 = scmp.lt.s32.totalorder %s276, 5
      %s278 = scalar_select %p277, %s276, 5
      %p279 = scmp.lt.s32.totalorder %s19, 0
      %s280 = scalar_select %p279, %s19, 0
      %s281 = sadd.s32 %s280, %s278
      %s282 = smul.addr %s281, 4
      %s283 = scalar_lea.vmem %s4, %s282
      %s284 = smul.u32 3, %s20
      %v286 = vld [vmem:[%s258] sm:$0xf]
      %v287 = vld [vmem:[%s258 + $0x4] sm:$0xf]
      %v288 = vld [vmem:[%s258 + $0x8] sm:$0xf]
      %v289 = vld [vmem:[%s263] sm:$0xf]
      %v290 = vld [vmem:[%s263 + $0x4] sm:$0xf]
      %v291 = vld [vmem:[%s263 + $0x8] sm:$0xf]
      %v292 = vld [vmem:[%s263 + $0xc] sm:$0xf]
      %v293 = vld [vmem:[%s263 + $0x10] sm:$0xf]
      %v294 = vld [vmem:[%s263 + $0x14] sm:$0xf]
      %v295 = vld [vmem:[%s263 + $0x18] sm:$0xf]
      %v296 = vld [vmem:[%s263 + $0x1c] sm:$0xf]
      %v297 = vld [vmem:[%s266] sm:$0x1]
      %v299 = vperm.slane %v297, 0
      %v304 = vunpack.c.l.b16 %v286
      %v305 = vunpack.c.l.b16 %v287
      %v306 = vunpack.c.l.b16 %v288
      %v307 = vpack.c.b16 %v305, %v304
      %v308 = vpack.c.b16 %v306, %v306
      %v317 = vunpack.c.l.b16 %v289
      %v318 = vunpack.c.l.b16 %v290
      %v319 = vunpack.c.l.b16 %v291
      %v320 = vunpack.c.l.b16 %v292
      %v321 = vunpack.c.l.b16 %v293
      %v322 = vunpack.c.l.b16 %v294
      %v323 = vunpack.c.l.b16 %v295
      %v324 = vunpack.c.l.b16 %v296
      %v325 = vpack.c.b16 %v318, %v317
      %v326 = vpack.c.b16 %v320, %v319
      %v327 = vpack.c.b16 %v322, %v321
      %v328 = vpack.c.b16 %v324, %v323
      %vm333 = vcmask 523264
      %v335 = vsel %vm333, %v307, 0
      %v338 = vsel %vm333, %v308, 0
      %340 = vmatpush.bf16.msra.mxu0 0
      %341 = vmatpush.bf16.msra.mxu0 0
      %342 = vmatpush.bf16.msra.mxu0 0
      %343 = vmatpush.bf16.msra.mxu0 0
      %344 = vmatpush.bf16.msra.mxu0 %v328
      %345 = vmatpush.bf16.msra.mxu0 %v327
      %346 = vmatpush.bf16.msra.mxu0 %v326
      %347 = vmatpush.bf16.msra.mxu0 %v325
      %348 = vmatmul.bf16.gmra.mxu0 %v335
      %v349 = vpop.f32.mrf.mxu0
      %v350 = vadd.f32 %v299, %v349
      %v351 = vpop.f32.mrf.mxu0
      %v352 = vadd.f32 %v299, %v351
      %353 = vmatmul.bf16.gmra.mxu0 %v338
      %v354 = vpop.f32.mrf.mxu0
      %v355 = vadd.f32 %v299, %v354
      %v356 = vpop.f32.mrf.mxu0
      %357 = vdwg.mxu0
      %v358 = vld [vmem:[%s274] sm:$0xf]
      %v359 = vld [vmem:[%s274 + $0x4] sm:$0xf]
      %v360 = vld [vmem:[%s274 + $0x8] sm:$0xf]
      %v361 = vunpack.c.l.bf16 %v358
      %v362 = vunpack.c.l.bf16 %v359
      %v363 = vunpack.c.l.bf16 %v360
      %v364 = vadd.f32 %v350, %v361
      %v365 = vadd.f32 %v352, %v362
      %v366 = vadd.f32 %v355, %v363
      %v367 = vpack.c.bf16 %v364, %v364
      %v368 = vpack.c.bf16 %v365, %v365
      %v369 = vpack.c.bf16 %v366, %v366
      %vm370 = vcmask 257024
      %371 = vst.msk [vmem:[%s283] sm:$0xf] %vm370, %v367
      %372 = vst.msk [vmem:[%s283 + $0x4] sm:$0xf] %vm370, %v368
      %373 = vst.msk [vmem:[%s283 + $0x8] sm:$0xf] %vm370, %v369
      %s374 = smul.u32 3, %s20
      %p375 = scmp.lt.s32.totalorder %s374, 5
      %s376 = scalar_select %p375, %s374, 5
      %p377 = scmp.lt.s32.totalorder %s19, 0
      %s378 = scalar_select %p377, %s19, 0
      %s379 = sadd.s32 %s378, %s376
      %s380 = smul.addr %s379, 4
      %s381 = scalar_lea.vmem %s4, %s380
      // Predicated region
      $region37: #{clip_vision_forward.19} parent=35 // pred_check
        %p382 = pneg %p153
      $region38: #{clip_vision_forward.19} parent=35 // pred_check_branch
        %384 = sbr.rel (%p382) target = $region40
      $region39: #{clip_vision_forward.19} parent=35 // pred_region
        %s385 = smul.u32 3, %s20
      $region40: #{clip_vision_forward.19} parent=35 // pred_fallthru
        _
    $region36: #{clip_vision_forward.19} parent=5 // pred_fallthru
      _
    %p386 = scmp.le.s32.totalorder 2, %s10
    // Predicated region
    $region41: #{clip_vision_forward.19} parent=5 // pred_check
      %p387 = pneg %p386
    $region42: #{clip_vision_forward.19} parent=5 // pred_check_branch
      %389 = sbr.rel (%p387) target = $region44
    $region43: #{clip_vision_forward.19} parent=5 // pred_region
      %s390 = ssub.s32 %s10, 2
      // Predicated region
      $region45: #{clip_vision_forward.19} parent=43 // pred_check
        %p391 = pneg %p159
      $region46: #{clip_vision_forward.19} parent=43 // pred_check_branch
        %393 = sbr.rel (%p391) target = $region48
      $region47: #{clip_vision_forward.19} parent=43 // pred_region
        %s394 = smul.u32 3, %s22
        %p395 = scmp.lt.s32.totalorder %s394, 5
        %s396 = scalar_select %p395, %s394, 5
        %p397 = scmp.lt.s32.totalorder %s21, 0
        %s398 = scalar_select %p397, %s21, 0
        %s399 = sadd.s32 %s398, %s396
        %s400 = smul.addr %s399, 4
        %s401 = scalar_lea.vmem %s4, %s400
      $region48: #{clip_vision_forward.19} parent=43 // pred_fallthru
        _
    $region44: #{clip_vision_forward.19} parent=5 // pred_fallthru
      _
  $region6: #{clip_vision_forward.19} parent=0 // loop_footer
    %s14 = sadd.s32 1, %s10
  $region7: #{clip_vision_forward.19} parent=0 // loop_footer_branch
    %9 = sbr.rel target = $region3
  $region8: #{clip_vision_forward.19} parent=0 // loop_exit
    _

// kernel: clip_vision_forward.16
$region0: #{clip_vision_forward.16}
  #allocation0 [shape = 'u32[]', space=smem, size = 0x4, offset = 0x4, fixed_abs, tag = 'smem constant byte address 0x4 - core index']
  #allocation1 [shape = 'u32[72,128]{1,0:T(1,128)}', space=vmem, size = 0x9000, scoped, tag = 'internal scratch']
  %s0 = inlined_call_operand.vmem [shape: bf16[2,24,4,8], index: 0, kind: input, shape index: {}]
  %s1 = inlined_call_operand.vmem [shape: bf16[2,24,4,8], index: 1, kind: input, shape index: {}]
  %s2 = inlined_call_operand.vmem [shape: bf16[2,24,4,8], index: 2, kind: input, shape index: {}]
  %s3 = inlined_call_operand.vmem [shape: bf16[2,24,32], index: 3, kind: output, shape index: {}]
  %s4 = sld [smem:[#allocation0]]
  $region45: #{clip_vision_forward.16} parent=0
    _
  %s6 = ssub.s32 1, %s4
  %s7 = scalar_select 0, %s6, %s4
  loop: start=0, step=1, limit=4
  $region2: #{clip_vision_forward.16} parent=0 // loop_pre_header
    _
  $region3: #{clip_vision_forward.16} parent=0 // loop_header
    %s9 = sphi 0, %s13
    %p10 = scmp.ge.s32.totalorder %s9, 4
    %s16 = sphi 0, %s28
    %s17 = sphi 0, %s24
    %s18 = sphi 0, %s16
    %s19 = sphi 0, %s17
    %s20 = sphi 0, %s18
    %s21 = sphi 0, %s19
    %s33 = sphi 0, %s35
    %s36 = sphi 0, %s33
    %s37 = sphi 0, %s36
    %s53 = sphi 0, %s37
    %s59 = sphi 0, %s61
    %s62 = sphi 0, %s59
    %s63 = sphi 0, %s62
    %s79 = sphi 0, %s63
    %s85 = sphi 0, %s87
    %s88 = sphi 0, %s85
    %s89 = sphi 0, %s88
    %s105 = sphi 0, %s89
    %s113 = sphi 0, %s115
    %s116 = sphi 0, %s113
    %s117 = sphi 0, %s116
    %s133 = sphi 0, %s117
  $region4: #{clip_vision_forward.16} parent=0 // loop_header_branch
    %12 = sbr.rel (%p10) target = $region8
  $region5: #{clip_vision_forward.16} parent=0 // loop_body
    %s14 = ssub.s32 %s9, 1
    %s15 = ssub.s32 %s9, 2
    %s22 = sadd.s32 1, %s17
    %p23 = scmp.ge.s32.totalorder %s22, 1
    %s24 = scalar_select %p23, 0, %s22
    %s25 = sadd.s32 1, %s16
    %s26 = scalar_select %p23, %s25, %s16
    %p27 = scmp.ge.s32.totalorder %s26, 2
    %s28 = scalar_select %p27, 0, %s26
    %s29 = ssub.s32 %s16, %s28
    %s30 = ssub.s32 %s17, %s24
    %s31 = sor.u32 %s29, %s30
    %p32 = scmp.eq.s32.totalorder %s31, 0
    %s34 = sadd.s32 %s33, 1
    %s35 = scalar_select %p32, %s33, %s34
    %p38 = pneg %p32
    %p39 = scmp.eq.s32.totalorder %s9, 1
    %p40 = por %p38, %p39
    %p41 = scmp.ne.s32.totalorder %s33, %s36
    %p42 = scmp.eq.s32.totalorder %s9, 0
    %p43 = por %p41, %p42
    %p44 = scmp.ne.s32.totalorder %s33, %s36
    %p45 = scmp.eq.s32.totalorder %s14, 1
    %p46 = por %p44, %p45
    %p47 = scmp.ne.s32.totalorder %s36, %s37
    %p48 = scmp.eq.s32.totalorder %s14, 0
    %p49 = por %p47, %p48
    %p50 = scmp.ne.s32.totalorder %s36, %s37
    %p51 = scmp.eq.s32.totalorder %s15, 1
    %p52 = por %p50, %p51
    %p54 = scmp.ne.s32.totalorder %s37, %s53
    %p55 = scmp.eq.s32.totalorder %s15, 0
    %p56 = por %p54, %p55
    %s57 = ssub.s32 %s16, %s28
    %p58 = scmp.eq.s32.totalorder %s57, 0
    %s60 = sadd.s32 %s59, 1
    %s61 = scalar_select %p58, %s59, %s60
    %p64 = pneg %p58
    %p65 = scmp.eq.s32.totalorder %s9, 1
    %p66 = por %p64, %p65
    %p67 = scmp.ne.s32.totalorder %s59, %s62
    %p68 = scmp.eq.s32.totalorder %s9, 0
    %p69 = por %p67, %p68
    %p70 = scmp.ne.s32.totalorder %s59, %s62
    %p71 = scmp.eq.s32.totalorder %s14, 1
    %p72 = por %p70, %p71
    %p73 = scmp.ne.s32.totalorder %s62, %s63
    %p74 = scmp.eq.s32.totalorder %s14, 0
    %p75 = por %p73, %p74
    %p76 = scmp.ne.s32.totalorder %s62, %s63
    %p77 = scmp.eq.s32.totalorder %s15, 1
    %p78 = por %p76, %p77
    %p80 = scmp.ne.s32.totalorder %s63, %s79
    %p81 = scmp.eq.s32.totalorder %s15, 0
    %p82 = por %p80, %p81
    %s83 = ssub.s32 %s16, %s28
    %p84 = scmp.eq.s32.totalorder %s83, 0
    %s86 = sadd.s32 %s85, 1
    %s87 = scalar_select %p84, %s85, %s86
    %p90 = pneg %p84
    %p91 = scmp.eq.s32.totalorder %s9, 1
    %p92 = por %p90, %p91
    %p93 = scmp.ne.s32.totalorder %s85, %s88
    %p94 = scmp.eq.s32.totalorder %s9, 0
    %p95 = por %p93, %p94
    %p96 = scmp.ne.s32.totalorder %s85, %s88
    %p97 = scmp.eq.s32.totalorder %s14, 1
    %p98 = por %p96, %p97
    %p99 = scmp.ne.s32.totalorder %s88, %s89
    %p100 = scmp.eq.s32.totalorder %s14, 0
    %p101 = por %p99, %p100
    %p102 = scmp.ne.s32.totalorder %s88, %s89
    %p103 = scmp.eq.s32.totalorder %s15, 1
    %p104 = por %p102, %p103
    %p106 = scmp.ne.s32.totalorder %s89, %s105
    %p107 = scmp.eq.s32.totalorder %s15, 0
    %p108 = por %p106, %p107
    %s109 = ssub.s32 %s16, %s28
    %s110 = ssub.s32 %s17, %s24
    %s111 = sor.u32 %s109, %s110
    %p112 = scmp.eq.s32.totalorder %s111, 0
    %s114 = sadd.s32 %s113, 1
    %s115 = scalar_select %p112, %s113, %s114
    %p118 = pneg %p112
    %p119 = scmp.eq.s32.totalorder %s9, 1
    %p120 = por %p118, %p119
    %p121 = scmp.ne.s32.totalorder %s113, %s116
    %p122 = scmp.eq.s32.totalorder %s9, 0
    %p123 = por %p121, %p122
    %p124 = scmp.ne.s32.totalorder %s113, %s116
    %p125 = scmp.eq.s32.totalorder %s14, 1
    %p126 = por %p124, %p125
    %p127 = scmp.ne.s32.totalorder %s116, %s117
    %p128 = scmp.eq.s32.totalorder %s14, 0
    %p129 = por %p127, %p128
    %p130 = scmp.ne.s32.totalorder %s116, %s117
    %p131 = scmp.eq.s32.totalorder %s15, 1
    %p132 = por %p130, %p131
    %p134 = scmp.ne.s32.totalorder %s117, %s133
    %p135 = scmp.eq.s32.totalorder %s15, 0
    %p136 = por %p134, %p135
    %p137 = scmp.le.s32.totalorder 1, %s9
    %p138 = scmp.lt.s32.totalorder %s9, 3
    %p139 = pnand %p137, %p138
    %p140 = pneg %p139
    // Predicated region
    $region9: #{clip_vision_forward.16} parent=5 // pred_check
      _
    $region10: #{clip_vision_forward.16} parent=5 // pred_check_branch
      %142 = sbr.rel (%p139) target = $region12
    $region11: #{clip_vision_forward.16} parent=5 // pred_region
      %s143 = ssub.s32 %s9, 1
    $region12: #{clip_vision_forward.16} parent=5 // pred_fallthru
      _
    %p144 = scmp.lt.s32.totalorder %s9, 2
    // Predicated region
    $region13: #{clip_vision_forward.16} parent=5 // pred_check
      %p145 = pneg %p144
    $region14: #{clip_vision_forward.16} parent=5 // pred_check_branch
      %147 = sbr.rel (%p145) target = $region16
    $region15: #{clip_vision_forward.16} parent=5 // pred_region
      // Predicated region
      $region17: #{clip_vision_forward.16} parent=15 // pred_check
        %p148 = pneg %p43
      $region18: #{clip_vision_forward.16} parent=15 // pred_check_branch
        %150 = sbr.rel (%p148) target = $region20
      $region19: #{clip_vision_forward.16} parent=15 // pred_region
        %s151 = smul.u32 24, %s17
        %p152 = scmp.lt.s32.totalorder %s16, 1
        %s153 = scalar_select %p152, %s16, 1
        %p154 = scmp.lt.s32.totalorder %s151, 23
        %s155 = scalar_select %p154, %s151, 23
        %s156 = smul.addr %s153, 24
        %s157 = sadd.s32 %s155, %s156
        %s158 = smul.addr %s157, 2
        %s159 = scalar_lea.vmem %s0, %s158
        %s160 = smul.u32 24, %s17
      $region20: #{clip_vision_forward.16} parent=15 // pred_fallthru
        _
      // Predicated region
      $region21: #{clip_vision_forward.16} parent=15 // pred_check
        %p161 = pneg %p69
      $region22: #{clip_vision_forward.16} parent=15 // pred_check_branch
        %163 = sbr.rel (%p161) target = $region24
      $region23: #{clip_vision_forward.16} parent=15 // pred_region
        %p164 = scmp.lt.s32.totalorder %s16, 1
        %s165 = scalar_select %p164, %s16, 1
        %s166 = smul.addr %s165, 24
        %s167 = smul.addr %s166, 2
        %s168 = scalar_lea.vmem %s1, %s167
      $region24: #{clip_vision_forward.16} parent=15 // pred_fallthru
        _
      // Predicated region
      $region25: #{clip_vision_forward.16} parent=15 // pred_check
        %p169 = pneg %p95
      $region26: #{clip_vision_forward.16} parent=15 // pred_check_branch
        %171 = sbr.rel (%p169) target = $region28
      $region27: #{clip_vision_forward.16} parent=15 // pred_region
        %p172 = scmp.lt.s32.totalorder %s16, 1
        %s173 = scalar_select %p172, %s16, 1
        %s174 = smul.addr %s173, 24
        %s175 = smul.addr %s174, 2
        %s176 = scalar_lea.vmem %s2, %s175
      $region28: #{clip_vision_forward.16} parent=15 // pred_fallthru
        _
    $region16: #{clip_vision_forward.16} parent=5 // pred_fallthru
      _
    %p177 = scmp.le.s32.totalorder 1, %s9
    %p178 = scmp.lt.s32.totalorder %s9, 3
    %p179 = pnand %p177, %p178
    %p180 = pneg %p179
    // Predicated region
    $region29: #{clip_vision_forward.16} parent=5 // pred_check
      _
    $region30: #{clip_vision_forward.16} parent=5 // pred_check_branch
      %182 = sbr.rel (%p179) target = $region32
    $region31: #{clip_vision_forward.16} parent=5 // pred_region
      %s183 = ssub.s32 %s9, 1
      %s184 = smul.u32 24, %s19
      %p185 = scmp.lt.s32.totalorder %s18, 1
      %s186 = scalar_select %p185, %s18, 1
      %p187 = scmp.lt.s32.totalorder %s184, 23
      %s188 = scalar_select %p187, %s184, 23
      %s189 = smul.addr %s186, 24
      %s190 = sadd.s32 %s188, %s189
      %s191 = smul.addr %s190, 2
      %s192 = scalar_lea.vmem %s0, %s191
      %p193 = pneg %p49
      %p194 = pneg %p46
      %p195 = scmp.lt.s32.totalorder %s18, 1
      %s196 = scalar_select %p195, %s18, 1
      %s197 = smul.addr %s196, 24
      %s198 = smul.addr %s197, 2
      %s199 = scalar_lea.vmem %s1, %s198
      %p200 = pneg %p75
      %p201 = pneg %p72
      %p202 = scmp.lt.s32.totalorder %s18, 1
      %s203 = scalar_select %p202, %s18, 1
      %s204 = smul.addr %s203, 24
      %s205 = smul.addr %s204, 2
      %s206 = scalar_lea.vmem %s2, %s205
      %p207 = pneg %p101
      %p208 = pneg %p98
      %p209 = pneg %p129
      %p210 = pneg %p126
      %s211 = smul.u32 3, %s19
      %p212 = scmp.lt.s32.totalorder %s18, 1
      %s213 = scalar_select %p212, %s18, 1
      %p214 = scmp.lt.s32.totalorder %s211, 2
      %s215 = scalar_select %p214, %s211, 2
      %s216 = smul.addr %s213, 3
      %s217 = sadd.s32 %s215, %s216
      %s218 = smul.addr %s217, 4
      %s219 = scalar_lea.vmem %s3, %s218
      %s220 = smul.u32 24, %s19
      %p221 = scmp.lt.s32.totalorder %s18, 1
      %s222 = scalar_select %p221, %s18, 1
      %p223 = scmp.lt.s32.totalorder %s220, 23
      %s224 = scalar_select %p223, %s220, 23
      %s225 = smul.addr %s222, 24
      %s226 = sadd.s32 %s224, %s225
      %s227 = smul.addr %s226, 2
      %s228 = scalar_lea.vmem %s0, %s227
      %s229 = smul.u32 24, %s19
      %p230 = scmp.lt.s32.totalorder %s18, 1
      %s231 = scalar_select %p230, %s18, 1
      %s232 = smul.addr %s231, 24
      %s233 = smul.addr %s232, 2
      %s234 = scalar_lea.vmem %s1, %s233
      %p235 = scmp.lt.s32.totalorder %s18, 1
      %s236 = scalar_select %p235, %s18, 1
      %s237 = smul.addr %s236, 24
      %s238 = smul.addr %s237, 2
      %s239 = scalar_lea.vmem %s2, %s238
      %s240 = smul.u32 3, %s19
      %p241 = scmp.lt.s32.totalorder %s18, 1
      %s242 = scalar_select %p241, %s18, 1
      %p243 = scmp.lt.s32.totalorder %s240, 2
      %s244 = scalar_select %p243, %s240, 2
      %s245 = smul.addr %s242, 3
      %s246 = sadd.s32 %s244, %s245
      %s247 = smul.addr %s246, 4
      %s248 = scalar_lea.vmem %s3, %s247
      %s249 = smul.u32 3, %s19
      %v251 = vld [vmem:[%s228] sm:$0x3]
      %v252 = vld [vmem:[%s228 + $0x2] sm:$0x3]
      %v253 = vld [vmem:[%s228 + $0x4] sm:$0x3]
      %v254 = vld [vmem:[%s228 + $0x6] sm:$0x3]
      %v255 = vld [vmem:[%s228 + $0x8] sm:$0x3]
      %v256 = vld [vmem:[%s228 + $0xa] sm:$0x3]
      %v257 = vld [vmem:[%s228 + $0xc] sm:$0x3]
      %v258 = vld [vmem:[%s228 + $0xe] sm:$0x3]
      %v259 = vld [vmem:[%s228 + $0x10] sm:$0x3]
      %v260 = vld [vmem:[%s228 + $0x12] sm:$0x3]
      %v261 = vld [vmem:[%s228 + $0x14] sm:$0x3]
      %v262 = vld [vmem:[%s228 + $0x16] sm:$0x3]
      %v263 = vld [vmem:[%s228 + $0x18] sm:$0x3]
      %v264 = vld [vmem:[%s228 + $0x1a] sm:$0x3]
      %v265 = vld [vmem:[%s228 + $0x1c] sm:$0x3]
      %v266 = vld [vmem:[%s228 + $0x1e] sm:$0x3]
      %v267 = vld [vmem:[%s228 + $0x20] sm:$0x3]
      %v268 = vld [vmem:[%s228 + $0x22] sm:$0x3]
      %v269 = vld [vmem:[%s228 + $0x24] sm:$0x3]
      %v270 = vld [vmem:[%s228 + $0x26] sm:$0x3]
      %v271 = vld [vmem:[%s228 + $0x28] sm:$0x3]
      %v272 = vld [vmem:[%s228 + $0x2a] sm:$0x3]
      %v273 = vld [vmem:[%s228 + $0x2c] sm:$0x3]
      %v274 = vld [vmem:[%s228 + $0x2e] sm:$0x3]
      %v275 = vld [vmem:[%s234] sm:$0x3]
      %v276 = vld [vmem:[%s234 + $0x2] sm:$0x3]
      %v277 = vld [vmem:[%s234 + $0x4] sm:$0x3]
      %v278 = vld [vmem:[%s234 + $0x6] sm:$0x3]
      %v279 = vld [vmem:[%s234 + $0x8] sm:$0x3]
      %v280 = vld [vmem:[%s234 + $0xa] sm:$0x3]
      %v281 = vld [vmem:[%s234 + $0xc] sm:$0x3]
      %v282 = vld [vmem:[%s234 + $0xe] sm:$0x3]
      %v283 = vld [vmem:[%s234 + $0x10] sm:$0x3]
      %v284 = vld [vmem:[%s234 + $0x12] sm:$0x3]
      %v285 = vld [vmem:[%s234 + $0x14] sm:$0x3]
      %v286 = vld [vmem:[%s234 + $0x16] sm:$0x3]
      %v287 = vld [vmem:[%s234 + $0x18] sm:$0x3]
      %v288 = vld [vmem:[%s234 + $0x1a] sm:$0x3]
      %v289 = vld [vmem:[%s234 + $0x1c] sm:$0x3]
      %v290 = vld [vmem:[%s234 + $0x1e] sm:$0x3]
      %v291 = vld [vmem:[%s234 + $0x20] sm:$0x3]
      %v292 = vld [vmem:[%s234 + $0x22] sm:$0x3]
      %v293 = vld [vmem:[%s234 + $0x24] sm:$0x3]
      %v294 = vld [vmem:[%s234 + $0x26] sm:$0x3]
      %v295 = vld [vmem:[%s234 + $0x28] sm:$0x3]
      %v296 = vld [vmem:[%s234 + $0x2a] sm:$0x3]
      %v297 = vld [vmem:[%s234 + $0x2c] sm:$0x3]
      %v298 = vld [vmem:[%s234 + $0x2e] sm:$0x3]
      %v299 = vld [vmem:[%s239] sm:$0x3]
      %v300 = vld [vmem:[%s239 + $0x2] sm:$0x3]
      %v301 = vld [vmem:[%s239 + $0x4] sm:$0x3]
      %v302 = vld [vmem:[%s239 + $0x6] sm:$0x3]
      %v303 = vld [vmem:[%s239 + $0x8] sm:$0x3]
      %v304 = vld [vmem:[%s239 + $0xa] sm:$0x3]
      %v305 = vld [vmem:[%s239 + $0xc] sm:$0x3]
      %v306 = vld [vmem:[%s239 + $0xe] sm:$0x3]
      %v307 = vld [vmem:[%s239 + $0x10] sm:$0x3]
      %v308 = vld [vmem:[%s239 + $0x12] sm:$0x3]
      %v309 = vld [vmem:[%s239 + $0x14] sm:$0x3]
      %v310 = vld [vmem:[%s239 + $0x16] sm:$0x3]
      %v311 = vld [vmem:[%s239 + $0x18] sm:$0x3]
      %v312 = vld [vmem:[%s239 + $0x1a] sm:$0x3]
      %v313 = vld [vmem:[%s239 + $0x1c] sm:$0x3]
      %v314 = vld [vmem:[%s239 + $0x1e] sm:$0x3]
      %v315 = vld [vmem:[%s239 + $0x20] sm:$0x3]
      %v316 = vld [vmem:[%s239 + $0x22] sm:$0x3]
      %v317 = vld [vmem:[%s239 + $0x24] sm:$0x3]
      %v318 = vld [vmem:[%s239 + $0x26] sm:$0x3]
      %v319 = vld [vmem:[%s239 + $0x28] sm:$0x3]
      %v320 = vld [vmem:[%s239 + $0x2a] sm:$0x3]
      %v321 = vld [vmem:[%s239 + $0x2c] sm:$0x3]
      %v322 = vld [vmem:[%s239 + $0x2e] sm:$0x3]
      %v323 = vrot.slane %v253, 4
      %vm324 = vcmask 1047556
      %v325 = vsel %vm324, %v323, %v251
      %v327 = vunpack.c.l.s4 1934713408
      %v328 = vunpack.c.0.s8 %v327
      %v329 = vperm.slane %v325, %v328
      %v330 = vrot.slane %v329, 4
      %v331 = vsel %vm324, 0, %v330
      %v332 = vrot.slane %v254, 4
      %v333 = vsel %vm324, %v332, %v252
      %v335 = vunpack.c.l.s4 1934713408
      %v336 = vunpack.c.0.s8 %v335
      %v337 = vperm.slane %v333, %v336
      %v338 = vrot.slane %v337, 4
      %v339 = vsel %vm324, 0, %v338
      %v340 = vrot.slane %v257, 4
      %v341 = vsel %vm324, %v340, %v255
      %v343 = vunpack.c.l.s4 1934713408
      %v344 = vunpack.c.0.s8 %v343
      %v345 = vperm.slane %v341, %v344
      %v346 = vrot.slane %v345, 4
      %v347 = vsel %vm324, 0, %v346
      %v348 = vrot.slane %v258, 4
      %v349 = vsel %vm324, %v348, %v256
      %v351 = vunpack.c.l.s4 1934713408
      %v352 = vunpack.c.0.s8 %v351
      %v353 = vperm.slane %v349, %v352
      %v354 = vrot.slane %v353, 4
      %v355 = vsel %vm324, 0, %v354
      %v356 = vrot.slane %v261, 4
      %v357 = vsel %vm324, %v356, %v259
      %v359 = vunpack.c.l.s4 1934713408
      %v360 = vunpack.c.0.s8 %v359
      %v361 = vperm.slane %v357, %v360
      %v362 = vrot.slane %v361, 4
      %v363 = vsel %vm324, 0, %v362
      %v364 = vrot.slane %v262, 4
      %v365 = vsel %vm324, %v364, %v260
      %v367 = vunpack.c.l.s4 1934713408
      %v368 = vunpack.c.0.s8 %v367
      %v369 = vperm.slane %v365, %v368
      %v370 = vrot.slane %v369, 4
      %v371 = vsel %vm324, 0, %v370
      %v372 = vrot.slane %v265, 4
      %v373 = vsel %vm324, %v372, %v263
      %v375 = vunpack.c.l.s4 1934713408
      %v376 = vunpack.c.0.s8 %v375
      %v377 = vperm.slane %v373, %v376
      %v378 = vrot.slane %v377, 4
      %v379 = vsel %vm324, 0, %v378
      %v380 = vrot.slane %v266, 4
      %v381 = vsel %vm324, %v380, %v264
      %v383 = vunpack.c.l.s4 1934713408
      %v384 = vunpack.c.0.s8 %v383
      %v385 = vperm.slane %v381, %v384
      %v386 = vrot.slane %v385, 4
      %v387 = vsel %vm324, 0, %v386
      %v388 = vrot.slane %v269, 4
      %v389 = vsel %vm324, %v388, %v267
      %v391 = vunpack.c.l.s4 1934713408
      %v392 = vunpack.c.0.s8 %v391
      %v393 = vperm.slane %v389, %v392
      %v394 = vrot.slane %v393, 4
      %v395 = vsel %vm324, 0, %v394
      %v396 = vrot.slane %v270, 4
      %v397 = vsel %vm324, %v396, %v268
      %v399 = vunpack.c.l.s4 1934713408
      %v400 = vunpack.c.0.s8 %v399
      %v401 = vperm.slane %v397, %v400
      %v402 = vrot.slane %v401, 4
      %v403 = vsel %vm324, 0, %v402
      %v404 = vrot.slane %v273, 4
      %v405 = vsel %vm324, %v404, %v271
      %v407 = vunpack.c.l.s4 1934713408
      %v408 = vunpack.c.0.s8 %v407
      %v409 = vperm.slane %v405, %v408
      %v410 = vrot.slane %v409, 4
      %v411 = vsel %vm324, 0, %v410
      %v412 = vrot.slane %v274, 4
      %v413 = vsel %vm324, %v412, %v272
      %v415 = vunpack.c.l.s4 1934713408
      %v416 = vunpack.c.0.s8 %v415
      %v417 = vperm.slane %v413, %v416
      %v418 = vrot.slane %v417, 4
      %v419 = vsel %vm324, 0, %v418
      %v422 = vpack.i.b16 %v337, %v329
      %v423 = vshrl.u32 %v329, 16
      %v424 = vshrl.u32 %v337, 16
      %v425 = vpack.i.b16 %v424, %v423
      %v428 = vpack.i.b16 %v339, %v331
      %v429 = vshrl.u32 %v331, 16
      %v430 = vshrl.u32 %v339, 16
      %v431 = vpack.i.b16 %v430, %v429
      %v434 = vpack.i.b16 %v353, %v345
      %v435 = vshrl.u32 %v345, 16
      %v436 = vshrl.u32 %v353, 16
      %v437 = vpack.i.b16 %v436, %v435
      %v440 = vpack.i.b16 %v355, %v347
      %v441 = vshrl.u32 %v347, 16
      %v442 = vshrl.u32 %v355, 16
      %v443 = vpack.i.b16 %v442, %v441
      %v446 = vpack.i.b16 %v369, %v361
      %v447 = vshrl.u32 %v361, 16
      %v448 = vshrl.u32 %v369, 16
      %v449 = vpack.i.b16 %v448, %v447
      %v452 = vpack.i.b16 %v371, %v363
      %v453 = vshrl.u32 %v363, 16
      %v454 = vshrl.u32 %v371, 16
      %v455 = vpack.i.b16 %v454, %v453
      %v458 = vpack.i.b16 %v385, %v377
      %v459 = vshrl.u32 %v377, 16
      %v460 = vshrl.u32 %v385, 16
      %v461 = vpack.i.b16 %v460, %v459
      %v464 = vpack.i.b16 %v387, %v379
      %v465 = vshrl.u32 %v379, 16
      %v466 = vshrl.u32 %v387, 16
      %v467 = vpack.i.b16 %v466, %v465
      %v470 = vpack.i.b16 %v401, %v393
      %v471 = vshrl.u32 %v393, 16
      %v472 = vshrl.u32 %v401, 16
      %v473 = vpack.i.b16 %v472, %v471
      %v476 = vpack.i.b16 %v403, %v395
      %v477 = vshrl.u32 %v395, 16
      %v478 = vshrl.u32 %v403, 16
      %v479 = vpack.i.b16 %v478, %v477
      %v482 = vpack.i.b16 %v417, %v409
      %v483 = vshrl.u32 %v409, 16
      %v484 = vshrl.u32 %v417, 16
      %v485 = vpack.i.b16 %v484, %v483
      %v488 = vpack.i.b16 %v419, %v411
      %v489 = vshrl.u32 %v411, 16
      %v490 = vshrl.u32 %v419, 16
      %v491 = vpack.i.b16 %v490, %v489
      %492 = vxpose.xlu0.c.b16.start [1/8] %v275, 128
      %493 = vxpose.xlu0.c.b16.cont [2/8] 0, 128
      %494 = vxpose.xlu0.c.b16.cont [3/8] 0, 128
      %495 = vxpose.xlu0.c.b16.cont [4/8] 0, 128
      %496 = vxpose.xlu0.c.b16.cont [5/8] 0, 128
      %497 = vxpose.xlu0.c.b16.cont [6/8] 0, 128
      %498 = vxpose.xlu0.c.b16.cont [7/8] 0, 128
      %499 = vxpose.xlu0.c.b16.end [8/8] 0, 128
      %v500 = vpop.trf.xlu0
      %v501 = vpop.trf.xlu0
      %v502 = vpop.trf.xlu0
      %v503 = vpop.trf.xlu0
      %v504 = vpop.trf.xlu0
      %v505 = vpop.trf.xlu0
      %v506 = vpop.trf.xlu0
      %v507 = vpop.trf.xlu0
      %508 = vxpose.xlu0.c.b16.start [1/8] %v276, 128
      %509 = vxpose.xlu0.c.b16.cont [2/8] 0, 128
      %510 = vxpose.xlu0.c.b16.cont [3/8] 0, 128
      %511 = vxpose.xlu0.c.b16.cont [4/8] 0, 128
      %512 = vxpose.xlu0.c.b16.cont [5/8] 0, 128
      %513 = vxpose.xlu0.c.b16.cont [6/8] 0, 128
      %514 = vxpose.xlu0.c.b16.cont [7/8] 0, 128
      %515 = vxpose.xlu0.c.b16.end [8/8] 0, 128
      %v516 = vpop.trf.xlu0
      %v517 = vpop.trf.xlu0
      %v518 = vpop.trf.xlu0
      %v519 = vpop.trf.xlu0
      %v520 = vpop.trf.xlu0
      %v521 = vpop.trf.xlu0
      %v522 = vpop.trf.xlu0
      %v523 = vpop.trf.xlu0
      %524 = vxpose.xlu0.c.b16.start [1/8] %v277, 128
      %525 = vxpose.xlu0.c.b16.cont [2/8] 0, 128
      %526 = vxpose.xlu0.c.b16.cont [3/8] 0, 128
      %527 = vxpose.xlu0.c.b16.cont [4/8] 0, 128
      %528 = vxpose.xlu0.c.b16.cont [5/8] 0, 128
      %529 = vxpose.xlu0.c.b16.cont [6/8] 0, 128
      %530 = vxpose.xlu0.c.b16.cont [7/8] 0, 128
      %531 = vxpose.xlu0.c.b16.end [8/8] 0, 128
      %v532 = vpop.trf.xlu0
      %v533 = vpop.trf.xlu0
      %v534 = vpop.trf.xlu0
      %v535 = vpop.trf.xlu0
      %v536 = vpop.trf.xlu0
      %v537 = vpop.trf.xlu0
      %v538 = vpop.trf.xlu0
      %v539 = vpop.trf.xlu0
      %540 = vxpose.xlu0.c.b16.start [1/8] %v278, 128
      %541 = vxpose.xlu0.c.b16.cont [2/8] 0, 128
      %542 = vxpose.xlu0.c.b16.cont [3/8] 0, 128
      %543 = vxpose.xlu0.c.b16.cont [4/8] 0, 128
      %544 = vxpose.xlu0.c.b16.cont [5/8] 0, 128
      %545 = vxpose.xlu0.c.b16.cont [6/8] 0, 128
      %546 = vxpose.xlu0.c.b16.cont [7/8] 0, 128
      %547 = vxpose.xlu0.c.b16.end [8/8] 0, 128
      %v548 = vpop.trf.xlu0
      %v549 = vpop.trf.xlu0
      %v550 = vpop.trf.xlu0
      %v551 = vpop.trf.xlu0
      %v552 = vpop.trf.xlu0
      %v553 = vpop.trf.xlu0
      %v554 = vpop.trf.xlu0
      %v555 = vpop.trf.xlu0
      %556 = vxpose.xlu0.c.b16.start [1/8] %v279, 128
      %557 = vxpose.xlu0.c.b16.cont [2/8] 0, 128
      %558 = vxpose.xlu0.c.b16.cont [3/8] 0, 128
      %559 = vxpose.xlu0.c.b16.cont [4/8] 0, 128
      %560 = vxpose.xlu0.c.b16.cont [5/8] 0, 128
      %561 = vxpose.xlu0.c.b16.cont [6/8] 0, 128
      %562 = vxpose.xlu0.c.b16.cont [7/8] 0, 128
      %563 = vxpose.xlu0.c.b16.end [8/8] 0, 128
      %v564 = vpop.trf.xlu0
      %v565 = vpop.trf.xlu0
      %v566 = vpop.trf.xlu0
      %v567 = vpop.trf.xlu0
      %v568 = vpop.trf.xlu0
      %v569 = vpop.trf.xlu0
      %v570 = vpop.trf.xlu0
      %v571 = vpop.trf.xlu0
      %572 = vxpose.xlu0.c.b16.start [1/8] %v280, 128
      %573 = vxpose.xlu0.c.b16.cont [2/8] 0, 128
      %574 = vxpose.xlu0.c.b16.cont [3/8] 0, 128
      %575 = vxpose.xlu0.c.b16.cont [4/8] 0, 128
      %576 = vxpose.xlu0.c.b16.cont [5/8] 0, 128
      %577 = vxpose.xlu0.c.b16.cont [6/8] 0, 128
      %578 = vxpose.xlu0.c.b16.cont [7/8] 0, 128
      %579 = vxpose.xlu0.c.b16.end [8/8] 0, 128
      %v580 = vpop.trf.xlu0
      %v581 = vpop.trf.xlu0
      %v582 = vpop.trf.xlu0
      %v583 = vpop.trf.xlu0
      %v584 = vpop.trf.xlu0
      %v585 = vpop.trf.xlu0
      %v586 = vpop.trf.xlu0
      %v587 = vpop.trf.xlu0
      %588 = vxpose.xlu0.c.b16.start [1/8] %v281, 128
      %589 = vxpose.xlu0.c.b16.cont [2/8] 0, 128
      %590 = vxpose.xlu0.c.b16.cont [3/8] 0, 128
      %591 = vxpose.xlu0.c.b16.cont [4/8] 0, 128
      %592 = vxpose.xlu0.c.b16.cont [5/8] 0, 128
      %593 = vxpose.xlu0.c.b16.cont [6/8] 0, 128
      %594 = vxpose.xlu0.c.b16.cont [7/8] 0, 128
      %595 = vxpose.xlu0.c.b16.end [8/8] 0, 128
      %v596 = vpop.trf.xlu0
      %v597 = vpop.trf.xlu0
      %v598 = vpop.trf.xlu0
      %v599 = vpop.trf.xlu0
      %v600 = vpop.trf.xlu0
      %v601 = vpop.trf.xlu0
      %v602 = vpop.trf.xlu0
      %v603 = vpop.trf.xlu0
      %604 = vxpose.xlu0.c.b16.start [1/8] %v282, 128
      %605 = vxpose.xlu0.c.b16.cont [2/8] 0, 128
      %606 = vxpose.xlu0.c.b16.cont [3/8] 0, 128
      %607 = vxpose.xlu0.c.b16.cont [4/8] 0, 128
      %608 = vxpose.xlu0.c.b16.cont [5/8] 0, 128
      %609 = vxpose.xlu0.c.b16.cont [6/8] 0, 128
      %610 = vxpose.xlu0.c.b16.cont [7/8] 0, 128
      %611 = vxpose.xlu0.c.b16.end [8/8] 0, 128
      %v612 = vpop.trf.xlu0
      %v613 = vpop.trf.xlu0
      %v614 = vpop.trf.xlu0
      %v615 = vpop.trf.xlu0
      %v616 = vpop.trf.xlu0
      %v617 = vpop.trf.xlu0
      %v618 = vpop.trf.xlu0
      %v619 = vpop.trf.xlu0
      %620 = vxpose.xlu0.c.b16.start [1/8] %v283, 128
      %621 = vxpose.xlu0.c.b16.cont [2/8] 0, 128
      %622 = vxpose.xlu0.c.b16.cont [3/8] 0, 128
      %623 = vxpose.xlu0.c.b16.cont [4/8] 0, 128
      %624 = vxpose.xlu0.c.b16.cont [5/8] 0, 128
      %625 = vxpose.xlu0.c.b16.cont [6/8] 0, 128
      %626 = vxpose.xlu0.c.b16.cont [7/8] 0, 128
      %627 = vxpose.xlu0.c.b16.end [8/8] 0, 128
      %v628 = vpop.trf.xlu0
      %v629 = vpop.trf.xlu0
      %v630 = vpop.trf.xlu0
      %v631 = vpop.trf.xlu0
      %v632 = vpop.trf.xlu0
      %v633 = vpop.trf.xlu0
      %v634 = vpop.trf.xlu0
      %v635 = vpop.trf.xlu0
      %636 = vxpose.xlu0.c.b16.start [1/8] %v284, 128
      %637 = vxpose.xlu0.c.b16.cont [2/8] 0, 128
      %638 = vxpose.xlu0.c.b16.cont [3/8] 0, 128
      %639 = vxpose.xlu0.c.b16.cont [4/8] 0, 128
      %640 = vxpose.xlu0.c.b16.cont [5/8] 0, 128
      %641 = vxpose.xlu0.c.b16.cont [6/8] 0, 128
      %642 = vxpose.xlu0.c.b16.cont [7/8] 0, 128
      %643 = vxpose.xlu0.c.b16.end [8/8] 0, 128
      %v644 = vpop.trf.xlu0
      %v645 = vpop.trf.xlu0
      %v646 = vpop.trf.xlu0
      %v647 = vpop.trf.xlu0
      %v648 = vpop.trf.xlu0
      %v649 = vpop.trf.xlu0
      %v650 = vpop.trf.xlu0
      %v651 = vpop.trf.xlu0
      %652 = vxpose.xlu0.c.b16.start [1/8] %v285, 128
      %653 = vxpose.xlu0.c.b16.cont [2/8] 0, 128
      %654 = vxpose.xlu0.c.b16.cont [3/8] 0, 128
      %655 = vxpose.xlu0.c.b16.cont [4/8] 0, 128
      %656 = vxpose.xlu0.c.b16.cont [5/8] 0, 128
      %657 = vxpose.xlu0.c.b16.cont [6/8] 0, 128
      %658 = vxpose.xlu0.c.b16.cont [7/8] 0, 128
      %659 = vxpose.xlu0.c.b16.end [8/8] 0, 128
      %v660 = vpop.trf.xlu0
      %v661 = vpop.trf.xlu0
      %v662 = vpop.trf.xlu0
      %v663 = vpop.trf.xlu0
      %v664 = vpop.trf.xlu0
      %v665 = vpop.trf.xlu0
      %v666 = vpop.trf.xlu0
      %v667 = vpop.trf.xlu0
      %668 = vxpose.xlu0.c.b16.start [1/8] %v286, 128
      %669 = vxpose.xlu0.c.b16.cont [2/8] 0, 128
      %670 = vxpose.xlu0.c.b16.cont [3/8] 0, 128
      %671 = vxpose.xlu0.c.b16.cont [4/8] 0, 128
      %672 = vxpose.xlu0.c.b16.cont [5/8] 0, 128
      %673 = vxpose.xlu0.c.b16.cont [6/8] 0, 128
      %674 = vxpose.xlu0.c.b16.cont [7/8] 0, 128
      %675 = vxpose.xlu0.c.b16.end [8/8] 0, 128
      %v676 = vpop.trf.xlu0
      %v677 = vpop.trf.xlu0
      %v678 = vpop.trf.xlu0
      %v679 = vpop.trf.xlu0
      %v680 = vpop.trf.xlu0
      %v681 = vpop.trf.xlu0
      %v682 = vpop.trf.xlu0
      %v683 = vpop.trf.xlu0
      %684 = vxpose.xlu0.c.b16.start [1/8] %v287, 128
      %685 = vxpose.xlu0.c.b16.cont [2/8] 0, 128
      %686 = vxpose.xlu0.c.b16.cont [3/8] 0, 128
      %687 = vxpose.xlu0.c.b16.cont [4/8] 0, 128
      %688 = vxpose.xlu0.c.b16.cont [5/8] 0, 128
      %689 = vxpose.xlu0.c.b16.cont [6/8] 0, 128
      %690 = vxpose.xlu0.c.b16.cont [7/8] 0, 128
      %691 = vxpose.xlu0.c.b16.end [8/8] 0, 128
      %v692 = vpop.trf.xlu0
      %v693 = vpop.trf.xlu0
      %v694 = vpop.trf.xlu0
      %v695 = vpop.trf.xlu0
      %v696 = vpop.trf.xlu0
      %v697 = vpop.trf.xlu0
      %v698 = vpop.trf.xlu0
      %v699 = vpop.trf.xlu0
      %700 = vxpose.xlu0.c.b16.start [1/8] %v288, 128
      %701 = vxpose.xlu0.c.b16.cont [2/8] 0, 128
      %702 = vxpose.xlu0.c.b16.cont [3/8] 0, 128
      %703 = vxpose.xlu0.c.b16.cont [4/8] 0, 128
      %704 = vxpose.xlu0.c.b16.cont [5/8] 0, 128
      %705 = vxpose.xlu0.c.b16.cont [6/8] 0, 128
      %706 = vxpose.xlu0.c.b16.cont [7/8] 0, 128
      %707 = vxpose.xlu0.c.b16.end [8/8] 0, 128
      %v708 = vpop.trf.xlu0
      %v709 = vpop.trf.xlu0
      %v710 = vpop.trf.xlu0
      %v711 = vpop.trf.xlu0
      %v712 = vpop.trf.xlu0
      %v713 = vpop.trf.xlu0
      %v714 = vpop.trf.xlu0
      %v715 = vpop.trf.xlu0
      %716 = vxpose.xlu0.c.b16.start [1/8] %v289, 128
      %717 = vxpose.xlu0.c.b16.cont [2/8] 0, 128
      %718 = vxpose.xlu0.c.b16.cont [3/8] 0, 128
      %719 = vxpose.xlu0.c.b16.cont [4/8] 0, 128
      %720 = vxpose.xlu0.c.b16.cont [5/8] 0, 128
      %721 = vxpose.xlu0.c.b16.cont [6/8] 0, 128
      %722 = vxpose.xlu0.c.b16.cont [7/8] 0, 128
      %723 = vxpose.xlu0.c.b16.end [8/8] 0, 128
      %v724 = vpop.trf.xlu0
      %v725 = vpop.trf.xlu0
      %v726 = vpop.trf.xlu0
      %v727 = vpop.trf.xlu0
      %v728 = vpop.trf.xlu0
      %v729 = vpop.trf.xlu0
      %v730 = vpop.trf.xlu0
      %v731 = vpop.trf.xlu0
      %732 = vxpose.xlu0.c.b16.start [1/8] %v290, 128
      %733 = vxpose.xlu0.c.b16.cont [2/8] 0, 128
      %734 = vxpose.xlu0.c.b16.cont [3/8] 0, 128
      %735 = vxpose.xlu0.c.b16.cont [4/8] 0, 128
      %736 = vxpose.xlu0.c.b16.cont [5/8] 0, 128
      %737 = vxpose.xlu0.c.b16.cont [6/8] 0, 128
      %738 = vxpose.xlu0.c.b16.cont [7/8] 0, 128
      %739 = vxpose.xlu0.c.b16.end [8/8] 0, 128
      %v740 = vpop.trf.xlu0
      %v741 = vpop.trf.xlu0
      %v742 = vpop.trf.xlu0
      %v743 = vpop.trf.xlu0
      %v744 = vpop.trf.xlu0
      %v745 = vpop.trf.xlu0
      %v746 = vpop.trf.xlu0
      %v747 = vpop.trf.xlu0
      %748 = vxpose.xlu0.c.b16.start [1/8] %v291, 128
      %749 = vxpose.xlu0.c.b16.cont [2/8] 0, 128
      %750 = vxpose.xlu0.c.b16.cont [3/8] 0, 128
      %751 = vxpose.xlu0.c.b16.cont [4/8] 0, 128
      %752 = vxpose.xlu0.c.b16.cont [5/8] 0, 128
      %753 = vxpose.xlu0.c.b16.cont [6/8] 0, 128
      %754 = vxpose.xlu0.c.b16.cont [7/8] 0, 128
      %755 = vxpose.xlu0.c.b16.end [8/8] 0, 128
      %v756 = vpop.trf.xlu0
      %v757 = vpop.trf.xlu0
      %v758 = vpop.trf.xlu0
      %v759 = vpop.trf.xlu0
      %v760 = vpop.trf.xlu0
      %v761 = vpop.trf.xlu0
      %v762 = vpop.trf.xlu0
      %v763 = vpop.trf.xlu0
      %764 = vxpose.xlu0.c.b16.start [1/8] %v292, 128
      %765 = vxpose.xlu0.c.b16.cont [2/8] 0, 128
      %766 = vxpose.xlu0.c.b16.cont [3/8] 0, 128
      %767 = vxpose.xlu0.c.b16.cont [4/8] 0, 128
      %768 = vxpose.xlu0.c.b16.cont [5/8] 0, 128
      %769 = vxpose.xlu0.c.b16.cont [6/8] 0, 128
      %770 = vxpose.xlu0.c.b16.cont [7/8] 0, 128
      %771 = vxpose.xlu0.c.b16.end [8/8] 0, 128
      %v772 = vpop.trf.xlu0
      %v773 = vpop.trf.xlu0
      %v774 = vpop.trf.xlu0
      %v775 = vpop.trf.xlu0
      %v776 = vpop.trf.xlu0
      %v777 = vpop.trf.xlu0
      %v778 = vpop.trf.xlu0
      %v779 = vpop.trf.xlu0
      %780 = vxpose.xlu0.c.b16.start [1/8] %v293, 128
      %781 = vxpose.xlu0.c.b16.cont [2/8] 0, 128
      %782 = vxpose.xlu0.c.b16.cont [3/8] 0, 128
      %783 = vxpose.xlu0.c.b16.cont [4/8] 0, 128
      %784 = vxpose.xlu0.c.b16.cont [5/8] 0, 128
      %785 = vxpose.xlu0.c.b16.cont [6/8] 0, 128
      %786 = vxpose.xlu0.c.b16.cont [7/8] 0, 128
      %787 = vxpose.xlu0.c.b16.end [8/8] 0, 128
      %v788 = vpop.trf.xlu0
      %v789 = vpop.trf.xlu0
      %v790 = vpop.trf.xlu0
      %v791 = vpop.trf.xlu0
      %v792 = vpop.trf.xlu0
      %v793 = vpop.trf.xlu0
      %v794 = vpop.trf.xlu0
      %v795 = vpop.trf.xlu0
      %796 = vxpose.xlu0.c.b16.start [1/8] %v294, 128
      %797 = vxpose.xlu0.c.b16.cont [2/8] 0, 128
      %798 = vxpose.xlu0.c.b16.cont [3/8] 0, 128
      %799 = vxpose.xlu0.c.b16.cont [4/8] 0, 128
      %800 = vxpose.xlu0.c.b16.cont [5/8] 0, 128
      %801 = vxpose.xlu0.c.b16.cont [6/8] 0, 128
      %802 = vxpose.xlu0.c.b16.cont [7/8] 0, 128
      %803 = vxpose.xlu0.c.b16.end [8/8] 0, 128
      %v804 = vpop.trf.xlu0
      %v805 = vpop.trf.xlu0
      %v806 = vpop.trf.xlu0
      %v807 = vpop.trf.xlu0
      %v808 = vpop.trf.xlu0
      %v809 = vpop.trf.xlu0
      %v810 = vpop.trf.xlu0
      %v811 = vpop.trf.xlu0
      %812 = vxpose.xlu0.c.b16.start [1/8] %v295, 128
      %813 = vxpose.xlu0.c.b16.cont [2/8] 0, 128
      %814 = vxpose.xlu0.c.b16.cont [3/8] 0, 128
      %815 = vxpose.xlu0.c.b16.cont [4/8] 0, 128
      %816 = vxpose.xlu0.c.b16.cont [5/8] 0, 128
      %817 = vxpose.xlu0.c.b16.cont [6/8] 0, 128
      %818 = vxpose.xlu0.c.b16.cont [7/8] 0, 128
      %819 = vxpose.xlu0.c.b16.end [8/8] 0, 128
      %v820 = vpop.trf.xlu0
      %v821 = vpop.trf.xlu0
      %v822 = vpop.trf.xlu0
      %v823 = vpop.trf.xlu0
      %v824 = vpop.trf.xlu0
      %v825 = vpop.trf.xlu0
      %v826 = vpop.trf.xlu0
      %v827 = vpop.trf.xlu0
      %828 = vxpose.xlu0.c.b16.start [1/8] %v296, 128
      %829 = vxpose.xlu0.c.b16.cont [2/8] 0, 128
      %830 = vxpose.xlu0.c.b16.cont [3/8] 0, 128
      %831 = vxpose.xlu0.c.b16.cont [4/8] 0, 128
      %832 = vxpose.xlu0.c.b16.cont [5/8] 0, 128
      %833 = vxpose.xlu0.c.b16.cont [6/8] 0, 128
      %834 = vxpose.xlu0.c.b16.cont [7/8] 0, 128
      %835 = vxpose.xlu0.c.b16.end [8/8] 0, 128
      %v836 = vpop.trf.xlu0
      %v837 = vpop.trf.xlu0
      %v838 = vpop.trf.xlu0
      %v839 = vpop.trf.xlu0
      %v840 = vpop.trf.xlu0
      %v841 = vpop.trf.xlu0
      %v842 = vpop.trf.xlu0
      %v843 = vpop.trf.xlu0
      %844 = vxpose.xlu0.c.b16.start [1/8] %v297, 128
      %845 = vxpose.xlu0.c.b16.cont [2/8] 0, 128
      %846 = vxpose.xlu0.c.b16.cont [3/8] 0, 128
      %847 = vxpose.xlu0.c.b16.cont [4/8] 0, 128
      %848 = vxpose.xlu0.c.b16.cont [5/8] 0, 128
      %849 = vxpose.xlu0.c.b16.cont [6/8] 0, 128
      %850 = vxpose.xlu0.c.b16.cont [7/8] 0, 128
      %851 = vxpose.xlu0.c.b16.end [8/8] 0, 128
      %v852 = vpop.trf.xlu0
      %v853 = vpop.trf.xlu0
      %v854 = vpop.trf.xlu0
      %v855 = vpop.trf.xlu0
      %v856 = vpop.trf.xlu0
      %v857 = vpop.trf.xlu0
      %v858 = vpop.trf.xlu0
      %v859 = vpop.trf.xlu0
      %860 = vxpose.xlu0.c.b16.start [1/8] %v298, 128
      %861 = vxpose.xlu0.c.b16.cont [2/8] 0, 128
      %862 = vxpose.xlu0.c.b16.cont [3/8] 0, 128
      %863 = vxpose.xlu0.c.b16.cont [4/8] 0, 128
      %864 = vxpose.xlu0.c.b16.cont [5/8] 0, 128
      %865 = vxpose.xlu0.c.b16.cont [6/8] 0, 128
      %866 = vxpose.xlu0.c.b16.cont [7/8] 0, 128
      %867 = vxpose.xlu0.c.b16.end [8/8] 0, 128
      %v868 = vpop.trf.xlu0
      %v869 = vpop.trf.xlu0
      %v870 = vpop.trf.xlu0
      %v871 = vpop.trf.xlu0
      %v872 = vpop.trf.xlu0
      %v873 = vpop.trf.xlu0
      %v874 = vpop.trf.xlu0
      %v875 = vpop.trf.xlu0
      %v876 = vrot.slane %v564, 4
      %v877 = vsel %vm324, %v876, %v500
      %v879 = vunpack.c.l.s4 1983009808
      %v880 = vunpack.c.0.s8 %v879
      %v881 = vperm.slane %v877, %v880
      %v882 = vrot.slane %v596, 4
      %v883 = vsel %vm324, %v882, %v532
      %v885 = vunpack.c.l.s4 1983009808
      %v886 = vunpack.c.0.s8 %v885
      %v887 = vperm.slane %v883, %v886
      %v888 = vrot.slane %v692, 4
      %v889 = vsel %vm324, %v888, %v628
      %v891 = vunpack.c.l.s4 1983009808
      %v892 = vunpack.c.0.s8 %v891
      %v893 = vperm.slane %v889, %v892
      %v894 = vrot.slane %v724, 4
      %v895 = vsel %vm324, %v894, %v660
      %v897 = vunpack.c.l.s4 1983009808
      %v898 = vunpack.c.0.s8 %v897
      %v899 = vperm.slane %v895, %v898
      %v900 = vrot.slane %v887, 4
      %v901 = vsel %vm324, %v900, %v881
      %v902 = vrot.slane %v881, 4
      %v903 = vsel %vm324, %v887, %v902
      %v905 = vunpack.c.l.s4 1934713408
      %v906 = vunpack.c.0.s8 %v905
      %v907 = vperm.slane %v901, %v906
      %v909 = vunpack.c.l.s4 1934713408
      %v910 = vunpack.c.0.s8 %v909
      %v911 = vperm.slane %v903, %v910
      %v912 = vrot.slane %v899, 4
      %v913 = vsel %vm324, %v912, %v893
      %v914 = vrot.slane %v893, 4
      %v915 = vsel %vm324, %v899, %v914
      %v917 = vunpack.c.l.s4 1934713408
      %v918 = vunpack.c.0.s8 %v917
      %v919 = vperm.slane %v913, %v918
      %v921 = vunpack.c.l.s4 1934713408
      %v922 = vunpack.c.0.s8 %v921
      %v923 = vperm.slane %v915, %v922
      %v924 = vrot.slane %v919, 4
      %v925 = vsel %vm324, %v924, %v907
      %v926 = vrot.slane %v907, 4
      %v927 = vsel %vm324, %v919, %v926
      %v928 = vrot.slane %v923, 4
      %v929 = vsel %vm324, %v928, %v911
      %v930 = vrot.slane %v911, 4
      %v931 = vsel %vm324, %v923, %v930
      %v932 = vrot.slane %v580, 4
      %v933 = vsel %vm324, %v932, %v516
      %v935 = vunpack.c.l.s4 1983009808
      %v936 = vunpack.c.0.s8 %v935
      %v937 = vperm.slane %v933, %v936
      %v938 = vrot.slane %v612, 4
      %v939 = vsel %vm324, %v938, %v548
      %v941 = vunpack.c.l.s4 1983009808
      %v942 = vunpack.c.0.s8 %v941
      %v943 = vperm.slane %v939, %v942
      %v944 = vrot.slane %v708, 4
      %v945 = vsel %vm324, %v944, %v644
      %v947 = vunpack.c.l.s4 1983009808
      %v948 = vunpack.c.0.s8 %v947
      %v949 = vperm.slane %v945, %v948
      %v950 = vrot.slane %v740, 4
      %v951 = vsel %vm324, %v950, %v676
      %v953 = vunpack.c.l.s4 1983009808
      %v954 = vunpack.c.0.s8 %v953
      %v955 = vperm.slane %v951, %v954
      %v956 = vrot.slane %v943, 4
      %v957 = vsel %vm324, %v956, %v937
      %v958 = vrot.slane %v937, 4
      %v959 = vsel %vm324, %v943, %v958
      %v961 = vunpack.c.l.s4 1934713408
      %v962 = vunpack.c.0.s8 %v961
      %v963 = vperm.slane %v957, %v962
      %v965 = vunpack.c.l.s4 1934713408
      %v966 = vunpack.c.0.s8 %v965
      %v967 = vperm.slane %v959, %v966
      %v968 = vrot.slane %v955, 4
      %v969 = vsel %vm324, %v968, %v949
      %v970 = vrot.slane %v949, 4
      %v971 = vsel %vm324, %v955, %v970
      %v973 = vunpack.c.l.s4 1934713408
      %v974 = vunpack.c.0.s8 %v973
      %v975 = vperm.slane %v969, %v974
      %v977 = vunpack.c.l.s4 1934713408
      %v978 = vunpack.c.0.s8 %v977
      %v979 = vperm.slane %v971, %v978
      %v980 = vrot.slane %v975, 4
      %v981 = vsel %vm324, %v980, %v963
      %v982 = vrot.slane %v963, 4
      %v983 = vsel %vm324, %v975, %v982
      %v984 = vrot.slane %v979, 4
      %v985 = vsel %vm324, %v984, %v967
      %v986 = vrot.slane %v967, 4
      %v987 = vsel %vm324, %v979, %v986
      %v988 = vrot.slane %v820, 4
      %v989 = vsel %vm324, %v988, %v756
      %v991 = vunpack.c.l.s4 1983009808
      %v992 = vunpack.c.0.s8 %v991
      %v993 = vperm.slane %v989, %v992
      %v994 = vrot.slane %v852, 4
      %v995 = vsel %vm324, %v994, %v788
      %v997 = vunpack.c.l.s4 1983009808
      %v998 = vunpack.c.0.s8 %v997
      %v999 = vperm.slane %v995, %v998
      %v1000 = vrot.slane %v999, 4
      %v1001 = vsel %vm324, %v1000, %v993
      %v1002 = vrot.slane %v993, 4
      %v1003 = vsel %vm324, %v999, %v1002
      %v1005 = vunpack.c.l.s4 1934713408
      %v1006 = vunpack.c.0.s8 %v1005
      %v1007 = vperm.slane %v1001, %v1006
      %v1009 = vunpack.c.l.s4 1934713408
      %v1010 = vunpack.c.0.s8 %v1009
      %v1011 = vperm.slane %v1003, %v1010
      %v1012 = vrot.slane %v1007, 4
      %v1013 = vsel %vm324, 0, %v1012
      %v1014 = vrot.slane %v1011, 4
      %v1015 = vsel %vm324, 0, %v1014
      %v1016 = vrot.slane %v836, 4
      %v1017 = vsel %vm324, %v1016, %v772
      %v1019 = vunpack.c.l.s4 1983009808
      %v1020 = vunpack.c.0.s8 %v1019
      %v1021 = vperm.slane %v1017, %v1020
      %v1022 = vrot.slane %v868, 4
      %v1023 = vsel %vm324, %v1022, %v804
      %v1025 = vunpack.c.l.s4 1983009808
      %v1026 = vunpack.c.0.s8 %v1025
      %v1027 = vperm.slane %v1023, %v1026
      %v1028 = vrot.slane %v1027, 4
      %v1029 = vsel %vm324, %v1028, %v1021
      %v1030 = vrot.slane %v1021, 4
      %v1031 = vsel %vm324, %v1027, %v1030
      %v1033 = vunpack.c.l.s4 1934713408
      %v1034 = vunpack.c.0.s8 %v1033
      %v1035 = vperm.slane %v1029, %v1034
      %v1037 = vunpack.c.l.s4 1934713408
      %v1038 = vunpack.c.0.s8 %v1037
      %v1039 = vperm.slane %v1031, %v1038
      %v1040 = vrot.slane %v1035, 4
      %v1041 = vsel %vm324, 0, %v1040
      %v1042 = vrot.slane %v1039, 4
      %v1043 = vsel %vm324, 0, %v1042
      %v1046 = vpack.i.b16 %v981, %v925
      %v1048 = vshrl.u32 %v925, 16
      %v1049 = vshrl.u32 %v981, 16
      %v1050 = vpack.i.b16 %v1049, %v1048
      %v1054 = vpack.i.b16 %v983, %v927
      %v1056 = vshrl.u32 %v927, 16
      %v1057 = vshrl.u32 %v983, 16
      %v1058 = vpack.i.b16 %v1057, %v1056
      %v1062 = vpack.i.b16 %v985, %v929
      %v1064 = vshrl.u32 %v929, 16
      %v1065 = vshrl.u32 %v985, 16
      %v1066 = vpack.i.b16 %v1065, %v1064
      %v1070 = vpack.i.b16 %v987, %v931
      %v1072 = vshrl.u32 %v931, 16
      %v1073 = vshrl.u32 %v987, 16
      %v1074 = vpack.i.b16 %v1073, %v1072
      %v1078 = vpack.i.b16 %v1035, %v1007
      %v1080 = vshrl.u32 %v1007, 16
      %v1081 = vshrl.u32 %v1035, 16
      %v1082 = vpack.i.b16 %v1081, %v1080
      %v1086 = vpack.i.b16 %v1041, %v1013
      %v1088 = vshrl.u32 %v1013, 16
      %v1089 = vshrl.u32 %v1041, 16
      %v1090 = vpack.i.b16 %v1089, %v1088
      %v1094 = vpack.i.b16 %v1039, %v1011
      %v1096 = vshrl.u32 %v1011, 16
      %v1097 = vshrl.u32 %v1039, 16
      %v1098 = vpack.i.b16 %v1097, %v1096
      %v1102 = vpack.i.b16 %v1043, %v1015
      %v1104 = vshrl.u32 %v1015, 16
      %v1105 = vshrl.u32 %v1043, 16
      %v1106 = vpack.i.b16 %v1105, %v1104
      %1108 = vxpose.xlu0.c.b16.start [1/8] %v1046, 128
      %1109 = vxpose.xlu0.c.b16.cont [2/8] %v1078, 128
      %1110 = vxpose.xlu0.c.b16.cont [3/8] 0, 128
      %1111 = vxpose.xlu0.c.b16.cont [4/8] 0, 128
      %1112 = vxpose.xlu0.c.b16.cont [5/8] 0, 128
      %1113 = vxpose.xlu0.c.b16.cont [6/8] 0, 128
      %1114 = vxpose.xlu0.c.b16.cont [7/8] 0, 128
      %1115 = vxpose.xlu0.c.b16.end [8/8] 0, 128
      %v1116 = vpop.trf.xlu0
      %v1117 = vpop.trf.xlu0
      %v1118 = vpop.trf.xlu0
      %v1119 = vpop.trf.xlu0
      %v1120 = vpop.trf.xlu0
      %v1121 = vpop.trf.xlu0
      %v1122 = vpop.trf.xlu0
      %v1123 = vpop.trf.xlu0
      %1124 = vxpose.xlu0.c.b16.start [1/8] %v1050, 128
      %1125 = vxpose.xlu0.c.b16.cont [2/8] %v1082, 128
      %1126 = vxpose.xlu0.c.b16.cont [3/8] 0, 128
      %1127 = vxpose.xlu0.c.b16.cont [4/8] 0, 128
      %1128 = vxpose.xlu0.c.b16.cont [5/8] 0, 128
      %1129 = vxpose.xlu0.c.b16.cont [6/8] 0, 128
      %1130 = vxpose.xlu0.c.b16.cont [7/8] 0, 128
      %1131 = vxpose.xlu0.c.b16.end [8/8] 0, 128
      %v1132 = vpop.trf.xlu0
      %v1133 = vpop.trf.xlu0
      %v1134 = vpop.trf.xlu0
      %v1135 = vpop.trf.xlu0
      %v1136 = vpop.trf.xlu0
      %v1137 = vpop.trf.xlu0
      %v1138 = vpop.trf.xlu0
      %v1139 = vpop.trf.xlu0
      %1140 = vxpose.xlu0.c.b16.start [1/8] %v1054, 128
      %1141 = vxpose.xlu0.c.b16.cont [2/8] %v1086, 128
      %1142 = vxpose.xlu0.c.b16.cont [3/8] 0, 128
      %1143 = vxpose.xlu0.c.b16.cont [4/8] 0, 128
      %1144 = vxpose.xlu0.c.b16.cont [5/8] 0, 128
      %1145 = vxpose.xlu0.c.b16.cont [6/8] 0, 128
      %1146 = vxpose.xlu0.c.b16.cont [7/8] 0, 128
      %1147 = vxpose.xlu0.c.b16.end [8/8] 0, 128
      %v1148 = vpop.trf.xlu0
      %v1149 = vpop.trf.xlu0
      %v1150 = vpop.trf.xlu0
      %v1151 = vpop.trf.xlu0
      %v1152 = vpop.trf.xlu0
      %v1153 = vpop.trf.xlu0
      %v1154 = vpop.trf.xlu0
      %v1155 = vpop.trf.xlu0
      %1156 = vxpose.xlu0.c.b16.start [1/8] %v1058, 128
      %1157 = vxpose.xlu0.c.b16.cont [2/8] %v1090, 128
      %1158 = vxpose.xlu0.c.b16.cont [3/8] 0, 128
      %1159 = vxpose.xlu0.c.b16.cont [4/8] 0, 128
      %1160 = vxpose.xlu0.c.b16.cont [5/8] 0, 128
      %1161 = vxpose.xlu0.c.b16.cont [6/8] 0, 128
      %1162 = vxpose.xlu0.c.b16.cont [7/8] 0, 128
      %1163 = vxpose.xlu0.c.b16.end [8/8] 0, 128
      %v1164 = vpop.trf.xlu0
      %v1165 = vpop.trf.xlu0
      %v1166 = vpop.trf.xlu0
      %v1167 = vpop.trf.xlu0
      %v1168 = vpop.trf.xlu0
      %v1169 = vpop.trf.xlu0
      %v1170 = vpop.trf.xlu0
      %v1171 = vpop.trf.xlu0
      %1172 = vxpose.xlu0.c.b16.start [1/8] %v1062, 128
      %1173 = vxpose.xlu0.c.b16.cont [2/8] %v1094, 128
      %1174 = vxpose.xlu0.c.b16.cont [3/8] 0, 128
      %1175 = vxpose.xlu0.c.b16.cont [4/8] 0, 128
      %1176 = vxpose.xlu0.c.b16.cont [5/8] 0, 128
      %1177 = vxpose.xlu0.c.b16.cont [6/8] 0, 128
      %1178 = vxpose.xlu0.c.b16.cont [7/8] 0, 128
      %1179 = vxpose.xlu0.c.b16.end [8/8] 0, 128
      %v1180 = vpop.trf.xlu0
      %v1181 = vpop.trf.xlu0
      %v1182 = vpop.trf.xlu0
      %v1183 = vpop.trf.xlu0
      %v1184 = vpop.trf.xlu0
      %v1185 = vpop.trf.xlu0
      %v1186 = vpop.trf.xlu0
      %v1187 = vpop.trf.xlu0
      %1188 = vxpose.xlu0.c.b16.start [1/8] %v1066, 128
      %1189 = vxpose.xlu0.c.b16.cont [2/8] %v1098, 128
      %1190 = vxpose.xlu0.c.b16.cont [3/8] 0, 128
      %1191 = vxpose.xlu0.c.b16.cont [4/8] 0, 128
      %1192 = vxpose.xlu0.c.b16.cont [5/8] 0, 128
      %1193 = vxpose.xlu0.c.b16.cont [6/8] 0, 128
      %1194 = vxpose.xlu0.c.b16.cont [7/8] 0, 128
      %1195 = vxpose.xlu0.c.b16.end [8/8] 0, 128
      %v1196 = vpop.trf.xlu0
      %v1197 = vpop.trf.xlu0
      %v1198 = vpop.trf.xlu0
      %v1199 = vpop.trf.xlu0
      %v1200 = vpop.trf.xlu0
      %v1201 = vpop.trf.xlu0
      %v1202 = vpop.trf.xlu0
      %v1203 = vpop.trf.xlu0
      %1204 = vxpose.xlu0.c.b16.start [1/8] %v1070, 128
      %1205 = vxpose.xlu0.c.b16.cont [2/8] %v1102, 128
      %1206 = vxpose.xlu0.c.b16.cont [3/8] 0, 128
      %1207 = vxpose.xlu0.c.b16.cont [4/8] 0, 128
      %1208 = vxpose.xlu0.c.b16.cont [5/8] 0, 128
      %1209 = vxpose.xlu0.c.b16.cont [6/8] 0, 128
      %1210 = vxpose.xlu0.c.b16.cont [7/8] 0, 128
      %1211 = vxpose.xlu0.c.b16.end [8/8] 0, 128
      %v1212 = vpop.trf.xlu0
      %v1213 = vpop.trf.xlu0
      %v1214 = vpop.trf.xlu0
      %v1215 = vpop.trf.xlu0
      %v1216 = vpop.trf.xlu0
      %v1217 = vpop.trf.xlu0
      %v1218 = vpop.trf.xlu0
      %v1219 = vpop.trf.xlu0
      %1220 = vxpose.xlu0.c.b16.start [1/8] %v1074, 128
      %1221 = vxpose.xlu0.c.b16.cont [2/8] %v1106, 128
      %1222 = vxpose.xlu0.c.b16.cont [3/8] 0, 128
      %1223 = vxpose.xlu0.c.b16.cont [4/8] 0, 128
      %1224 = vxpose.xlu0.c.b16.cont [5/8] 0, 128
      %1225 = vxpose.xlu0.c.b16.cont [6/8] 0, 128
      %1226 = vxpose.xlu0.c.b16.cont [7/8] 0, 128
      %1227 = vxpose.xlu0.c.b16.end [8/8] 0, 128
      %v1228 = vpop.trf.xlu0
      %v1229 = vpop.trf.xlu0
      %v1230 = vpop.trf.xlu0
      %v1231 = vpop.trf.xlu0
      %v1232 = vpop.trf.xlu0
      %v1233 = vpop.trf.xlu0
      %v1234 = vpop.trf.xlu0
      %v1235 = vpop.trf.xlu0
      %v1236 = vrot.slane %v1180, 4
      %v1237 = vsel %vm324, %v1236, %v1116
      %v1239 = vunpack.c.l.s4 1983009808
      %v1240 = vunpack.c.0.s8 %v1239
      %v1241 = vperm.slane %v1237, %v1240
      %v1242 = vrot.slane %v1212, 4
      %v1243 = vsel %vm324, %v1242, %v1148
      %v1245 = vunpack.c.l.s4 1983009808
      %v1246 = vunpack.c.0.s8 %v1245
      %v1247 = vperm.slane %v1243, %v1246
      %v1248 = vrot.slane %v1247, 4
      %v1249 = vsel %vm324, %v1248, %v1241
      %v1251 = vunpack.c.l.s4 1934713408
      %v1252 = vunpack.c.0.s8 %v1251
      %v1253 = vperm.slane %v1249, %v1252
      %v1254 = vrot.slane %v1253, 4
      %v1255 = vsel %vm324, 0, %v1254
      %v1256 = vrot.slane %v1196, 4
      %v1257 = vsel %vm324, %v1256, %v1132
      %v1259 = vunpack.c.l.s4 1983009808
      %v1260 = vunpack.c.0.s8 %v1259
      %v1261 = vperm.slane %v1257, %v1260
      %v1262 = vrot.slane %v1228, 4
      %v1263 = vsel %vm324, %v1262, %v1164
      %v1265 = vunpack.c.l.s4 1983009808
      %v1266 = vunpack.c.0.s8 %v1265
      %v1267 = vperm.slane %v1263, %v1266
      %v1268 = vrot.slane %v1267, 4
      %v1269 = vsel %vm324, %v1268, %v1261
      %v1271 = vunpack.c.l.s4 1934713408
      %v1272 = vunpack.c.0.s8 %v1271
      %v1273 = vperm.slane %v1269, %v1272
      %v1274 = vrot.slane %v1273, 4
      %v1275 = vsel %vm324, 0, %v1274
      %v1278 = vpack.i.b16 %v1273, %v1253
      %v1279 = vshrl.u32 %v1253, 16
      %v1280 = vshrl.u32 %v1273, 16
      %v1281 = vpack.i.b16 %v1280, %v1279
      %v1284 = vpack.i.b16 %v1275, %v1255
      %v1285 = vshrl.u32 %v1255, 16
      %v1286 = vshrl.u32 %v1275, 16
      %v1287 = vpack.i.b16 %v1286, %v1285
      %1289 = vst [vmem:[#allocation1] ss:$4 sm:$0xff] %v422
      %s1291 = scalar_lea.vmem [#allocation1], 1
      %1292 = vst [vmem:[%s1291] ss:$4 sm:$0xff] %v434
      %s1294 = scalar_lea.vmem [#allocation1], 2
      %1295 = vst [vmem:[%s1294] ss:$4 sm:$0xff] %v446
      %s1297 = scalar_lea.vmem [#allocation1], 3
      %1298 = vst [vmem:[%s1297] ss:$4 sm:$0xff] %v458
      %s1300 = scalar_lea.vmem [#allocation1], 32
      %1301 = vst [vmem:[%s1300] ss:$4 sm:$0xff] %v470
      %s1303 = scalar_lea.vmem [#allocation1], 33
      %1304 = vst [vmem:[%s1303] ss:$4 sm:$0xff] %v482
      %v1305 = vld.sshfl [vmem:[#allocation1] sm:$0xff pattern:$0x73625140]
      %v1306 = vld.sshfl [vmem:[#allocation1 + $0x20] sm:$0xff pattern:$0x73625140]
      %vm1307 = vcmask 64512
      %v1308 = vsel %vm1307, %v1305, 0
      %v1310 = vsel %vm1307, %v1306, 0
      %vm1312 = vcmask 1043456
      %v1314 = vsel %vm1312, %v1278, 0
      %1316 = vmatpush.bf16.msra.mxu0 0
      %1317 = vmatpush.bf16.msra.mxu0 0
      %1318 = vmatpush.bf16.msra.mxu0 0
      %1319 = vmatpush.bf16.msra.mxu0 0
      %1320 = vmatpush.bf16.msra.mxu0 0
      %1321 = vmatpush.bf16.msra.mxu0 0
      %1322 = vmatpush.bf16.msra.mxu0 0
      %1323 = vmatpush.bf16.msra.mxu0 %v1314
      %1324 = vmatmul.bf16.gmra.mxu0 %v1308
      %v1325 = vpop.f32.mrf.mxu0
      %v1326 = vadd.f32 0.0, %v1325
      %v1327 = vpop.f32.mrf.mxu0
      %v1328 = vadd.f32 0.0, %v1327
      %1329 = vmatmul.bf16.gmra.mxu0 %v1310
      %v1330 = vpop.f32.mrf.mxu0
      %v1331 = vadd.f32 0.0, %v1330
      %v1332 = vpop.f32.mrf.mxu0
      %1333 = vdwg.mxu0
      %1335 = vst [vmem:[#allocation1] ss:$4 sm:$0xff] %v425
      %s1337 = scalar_lea.vmem [#allocation1], 1
      %1338 = vst [vmem:[%s1337] ss:$4 sm:$0xff] %v437
      %s1340 = scalar_lea.vmem [#allocation1], 2
      %1341 = vst [vmem:[%s1340] ss:$4 sm:$0xff] %v449
      %s1343 = scalar_lea.vmem [#allocation1], 3
      %1344 = vst [vmem:[%s1343] ss:$4 sm:$0xff] %v461
      %s1346 = scalar_lea.vmem [#allocation1], 32
      %1347 = vst [vmem:[%s1346] ss:$4 sm:$0xff] %v473
      %s1349 = scalar_lea.vmem [#allocation1], 33
      %1350 = vst [vmem:[%s1349] ss:$4 sm:$0xff] %v485
      %v1351 = vld.sshfl [vmem:[#allocation1] sm:$0xff pattern:$0x73625140]
      %v1352 = vld.sshfl [vmem:[#allocation1 + $0x20] sm:$0xff pattern:$0x73625140]
      %v1353 = vsel %vm1307, %v1351, 0
      %v1355 = vsel %vm1307, %v1352, 0
      %v1358 = vsel %vm1312, %v1281, 0
      %1360 = vmatpush.bf16.msra.mxu0 0
      %1361 = vmatpush.bf16.msra.mxu0 0
      %1362 = vmatpush.bf16.msra.mxu0 0
      %1363 = vmatpush.bf16.msra.mxu0 0
      %1364 = vmatpush.bf16.msra.mxu0 0
      %1365 = vmatpush.bf16.msra.mxu0 0
      %1366 = vmatpush.bf16.msra.mxu0 0
      %1367 = vmatpush.bf16.msra.mxu0 %v1358
      %1368 = vmatmul.bf16.gmra.mxu0 %v1353
      %v1369 = vpop.f32.mrf.mxu0
      %v1370 = vadd.f32 0.0, %v1369
      %v1371 = vpop.f32.mrf.mxu0
      %v1372 = vadd.f32 0.0, %v1371
      %1373 = vmatmul.bf16.gmra.mxu0 %v1355
      %v1374 = vpop.f32.mrf.mxu0
      %v1375 = vadd.f32 0.0, %v1374
      %v1376 = vpop.f32.mrf.mxu0
      %1377 = vdwg.mxu0
      %1379 = vst [vmem:[#allocation1] ss:$4 sm:$0xff] %v428
      %s1381 = scalar_lea.vmem [#allocation1], 1
      %1382 = vst [vmem:[%s1381] ss:$4 sm:$0xff] %v440
      %s1384 = scalar_lea.vmem [#allocation1], 2
      %1385 = vst [vmem:[%s1384] ss:$4 sm:$0xff] %v452
      %s1387 = scalar_lea.vmem [#allocation1], 3
      %1388 = vst [vmem:[%s1387] ss:$4 sm:$0xff] %v464
      %s1390 = scalar_lea.vmem [#allocation1], 32
      %1391 = vst [vmem:[%s1390] ss:$4 sm:$0xff] %v476
      %s1393 = scalar_lea.vmem [#allocation1], 33
      %1394 = vst [vmem:[%s1393] ss:$4 sm:$0xff] %v488
      %v1395 = vld.sshfl [vmem:[#allocation1] sm:$0xff pattern:$0x73625140]
      %v1396 = vld.sshfl [vmem:[#allocation1 + $0x20] sm:$0xff pattern:$0x73625140]
      %v1397 = vsel %vm1307, %v1395, 0
      %v1399 = vsel %vm1307, %v1396, 0
      %v1402 = vsel %vm1312, %v1284, 0
      %1404 = vmatpush.bf16.msra.mxu0 0
      %1405 = vmatpush.bf16.msra.mxu0 0
      %1406 = vmatpush.bf16.msra.mxu0 0
      %1407 = vmatpush.bf16.msra.mxu0 0
      %1408 = vmatpush.bf16.msra.mxu0 0
      %1409 = vmatpush.bf16.msra.mxu0 0
      %1410 = vmatpush.bf16.msra.mxu0 0
      %1411 = vmatpush.bf16.msra.mxu0 %v1402
      %1412 = vmatmul.bf16.gmra.mxu0 %v1397
      %v1413 = vpop.f32.mrf.mxu0
      %v1414 = vadd.f32 0.0, %v1413
      %v1415 = vpop.f32.mrf.mxu0
      %v1416 = vadd.f32 0.0, %v1415
      %1417 = vmatmul.bf16.gmra.mxu0 %v1399
      %v1418 = vpop.f32.mrf.mxu0
      %v1419 = vadd.f32 0.0, %v1418
      %v1420 = vpop.f32.mrf.mxu0
      %1421 = vdwg.mxu0
      %1423 = vst [vmem:[#allocation1] ss:$4 sm:$0xff] %v431
      %s1425 = scalar_lea.vmem [#allocation1], 1
      %1426 = vst [vmem:[%s1425] ss:$4 sm:$0xff] %v443
      %s1428 = scalar_lea.vmem [#allocation1], 2
      %1429 = vst [vmem:[%s1428] ss:$4 sm:$0xff] %v455
      %s1431 = scalar_lea.vmem [#allocation1], 3
      %1432 = vst [vmem:[%s1431] ss:$4 sm:$0xff] %v467
      %s1434 = scalar_lea.vmem [#allocation1], 32
      %1435 = vst [vmem:[%s1434] ss:$4 sm:$0xff] %v479
      %s1437 = scalar_lea.vmem [#allocation1], 33
      %1438 = vst [vmem:[%s1437] ss:$4 sm:$0xff] %v491
      %v1439 = vld.sshfl [vmem:[#allocation1] sm:$0xff pattern:$0x73625140]
      %v1440 = vld.sshfl [vmem:[#allocation1 + $0x20] sm:$0xff pattern:$0x73625140]
      %v1441 = vsel %vm1307, %v1439, 0
      %v1443 = vsel %vm1307, %v1440, 0
      %v1446 = vsel %vm1312, %v1287, 0
      %1448 = vmatpush.bf16.msra.mxu0 0
      %1449 = vmatpush.bf16.msra.mxu0 0
      %1450 = vmatpush.bf16.msra.mxu0 0
      %1451 = vmatpush.bf16.msra.mxu0 0
      %1452 = vmatpush.bf16.msra.mxu0 0
      %1453 = vmatpush.bf16.msra.mxu0 0
      %1454 = vmatpush.bf16.msra.mxu0 0
      %1455 = vmatpush.bf16.msra.mxu0 %v1446
      %1456 = vmatmul.bf16.gmra.mxu0 %v1441
      %v1457 = vpop.f32.mrf.mxu0
      %v1458 = vadd.f32 0.0, %v1457
      %v1459 = vpop.f32.mrf.mxu0
      %v1460 = vadd.f32 0.0, %v1459
      %1461 = vmatmul.bf16.gmra.mxu0 %v1443
      %v1462 = vpop.f32.mrf.mxu0
      %v1463 = vadd.f32 0.0, %v1462
      %v1464 = vpop.f32.mrf.mxu0
      %1465 = vdwg.mxu0
      %v1466 = vmul.f32 %v1326, 0.35355338
      %v1467 = vmul.f32 %v1328, 0.35355338
      %v1468 = vmul.f32 %v1331, 0.35355338
      %v1469 = vmul.f32 %v1370, 0.35355338
      %v1470 = vmul.f32 %v1372, 0.35355338
      %v1471 = vmul.f32 %v1375, 0.35355338
      %v1472 = vmul.f32 %v1414, 0.35355338
      %v1473 = vmul.f32 %v1416, 0.35355338
      %v1474 = vmul.f32 %v1419, 0.35355338
      %v1475 = vmul.f32 %v1458, 0.35355338
      %v1476 = vmul.f32 %v1460, 0.35355338
      %v1477 = vmul.f32 %v1463, 0.35355338
      %v1478 = vlaneseq
      %v1479 = vand.u32 %v1478, 127
      %vm1480 = vcmp.lt.s32.totalorder %v1479, 17
      %v1481 = vsel %vm1480, %v1466, -1e+30
      %v1482 = vsel %vm1480, %v1467, -1e+30
      %v1483 = vsel %vm1480, %v1468, -1e+30
      %v1484 = vsel %vm1480, %v1469, -1e+30
      %v1485 = vsel %vm1480, %v1470, -1e+30
      %v1486 = vsel %vm1480, %v1471, -1e+30
      %v1487 = vsel %vm1480, %v1472, -1e+30
      %v1488 = vsel %vm1480, %v1473, -1e+30
      %v1489 = vsel %vm1480, %v1474, -1e+30
      %v1490 = vsel %vm1480, %v1475, -1e+30
      %v1491 = vsel %vm1480, %v1476, -1e+30
      %v1492 = vsel %vm1480, %v1477, -1e+30
      %vm1493 = vcmask 195584
      %v1494 = vsel %vm1493, %v1481, -inf
      %1495 = vmax.xlane.f32.xlu0 %v1494
      %v1496 = vpop.xlane.xlu0 %1495
      %v1497 = vsel %vm1493, %v1482, -inf
      %1498 = vmax.xlane.f32.xlu0 %v1497
      %v1499 = vpop.xlane.xlu0 %1498
      %v1500 = vsel %vm1493, %v1483, -inf
      %1501 = vmax.xlane.f32.xlu0 %v1500
      %v1502 = vpop.xlane.xlu0 %1501
      %v1503 = vsel %vm1493, %v1484, -inf
      %1504 = vmax.xlane.f32.xlu0 %v1503
      %v1505 = vpop.xlane.xlu0 %1504
      %v1506 = vsel %vm1493, %v1485, -inf
      %1507 = vmax.xlane.f32.xlu0 %v1506
      %v1508 = vpop.xlane.xlu0 %1507
      %v1509 = vsel %vm1493, %v1486, -inf
      %1510 = vmax.xlane.f32.xlu0 %v1509
      %v1511 = vpop.xlane.xlu0 %1510
      %v1512 = vsel %vm1493, %v1487, -inf
      %1513 = vmax.xlane.f32.xlu0 %v1512
      %v1514 = vpop.xlane.xlu0 %1513
      %v1515 = vsel %vm1493, %v1488, -inf
      %1516 = vmax.xlane.f32.xlu0 %v1515
      %v1517 = vpop.xlane.xlu0 %1516
      %v1518 = vsel %vm1493, %v1489, -inf
      %1519 = vmax.xlane.f32.xlu0 %v1518
      %v1520 = vpop.xlane.xlu0 %1519
      %v1521 = vsel %vm1493, %v1490, -inf
      %1522 = vmax.xlane.f32.xlu0 %v1521
      %v1523 = vpop.xlane.xlu0 %1522
      %v1524 = vsel %vm1493, %v1491, -inf
      %1525 = vmax.xlane.f32.xlu0 %v1524
      %v1526 = vpop.xlane.xlu0 %1525
      %v1527 = vsel %vm1493, %v1492, -inf
      %1528 = vmax.xlane.f32.xlu0 %v1527
      %v1529 = vpop.xlane.xlu0 %1528
      %v1530 = vsub.f32 %v1481, %v1496
      %v1531 = vsub.f32 %v1482, %v1499
      %v1532 = vsub.f32 %v1483, %v1502
      %v1533 = vsub.f32 %v1484, %v1505
      %v1534 = vsub.f32 %v1485, %v1508
      %v1535 = vsub.f32 %v1486, %v1511
      %v1536 = vsub.f32 %v1487, %v1514
      %v1537 = vsub.f32 %v1488, %v1517
      %v1538 = vsub.f32 %v1489, %v1520
      %v1539 = vsub.f32 %v1490, %v1523
      %v1540 = vsub.f32 %v1491, %v1526
      %v1541 = vsub.f32 %v1492, %v1529
      %v1542 = vmul.f32 %v1530, 1.442695
      %v1543 = vpow.pop %v1542
      %v1544 = vmul.f32 %v1531, 1.442695
      %v1545 = vpow.pop %v1544
      %v1546 = vmul.f32 %v1532, 1.442695
      %v1547 = vpow.pop %v1546
      %v1548 = vmul.f32 %v1533, 1.442695
      %v1549 = vpow.pop %v1548
      %v1550 = vmul.f32 %v1534, 1.442695
      %v1551 = vpow.pop %v1550
      %v1552 = vmul.f32 %v1535, 1.442695
      %v1553 = vpow.pop %v1552
      %v1554 = vmul.f32 %v1536, 1.442695
      %v1555 = vpow.pop %v1554
      %v1556 = vmul.f32 %v1537, 1.442695
      %v1557 = vpow.pop %v1556
      %v1558 = vmul.f32 %v1538, 1.442695
      %v1559 = vpow.pop %v1558
      %v1560 = vmul.f32 %v1539, 1.442695
      %v1561 = vpow.pop %v1560
      %v1562 = vmul.f32 %v1540, 1.442695
      %v1563 = vpow.pop %v1562
      %v1564 = vmul.f32 %v1541, 1.442695
      %v1565 = vpow.pop %v1564
      %v1566 = vsel %vm1493, %v1543, 0.0
      %1567 = vadd.xlane.f32.xlu0 %v1566
      %v1568 = vpop.xlane.xlu0 %1567
      %v1569 = vsel %vm1493, %v1545, 0.0
      %1570 = vadd.xlane.f32.xlu0 %v1569
      %v1571 = vpop.xlane.xlu0 %1570
      %v1572 = vsel %vm1493, %v1547, 0.0
      %1573 = vadd.xlane.f32.xlu0 %v1572
      %v1574 = vpop.xlane.xlu0 %1573
      %v1575 = vsel %vm1493, %v1549, 0.0
      %1576 = vadd.xlane.f32.xlu0 %v1575
      %v1577 = vpop.xlane.xlu0 %1576
      %v1578 = vsel %vm1493, %v1551, 0.0
      %1579 = vadd.xlane.f32.xlu0 %v1578
      %v1580 = vpop.xlane.xlu0 %1579
      %v1581 = vsel %vm1493, %v1553, 0.0
      %1582 = vadd.xlane.f32.xlu0 %v1581
      %v1583 = vpop.xlane.xlu0 %1582
      %v1584 = vsel %vm1493, %v1555, 0.0
      %1585 = vadd.xlane.f32.xlu0 %v1584
      %v1586 = vpop.xlane.xlu0 %1585
      %v1587 = vsel %vm1493, %v1557, 0.0
      %1588 = vadd.xlane.f32.xlu0 %v1587
      %v1589 = vpop.xlane.xlu0 %1588
      %v1590 = vsel %vm1493, %v1559, 0.0
      %1591 = vadd.xlane.f32.xlu0 %v1590
      %v1592 = vpop.xlane.xlu0 %1591
      %v1593 = vsel %vm1493, %v1561, 0.0
      %1594 = vadd.xlane.f32.xlu0 %v1593
      %v1595 = vpop.xlane.xlu0 %1594
      %v1596 = vsel %vm1493, %v1563, 0.0
      %1597 = vadd.xlane.f32.xlu0 %v1596
      %v1598 = vpop.xlane.xlu0 %1597
      %v1599 = vsel %vm1493, %v1565, 0.0
      %1600 = vadd.xlane.f32.xlu0 %v1599
      %v1601 = vpop.xlane.xlu0 %1600
      %v1602 = vrcp.pop %v1568
      %v1603 = vrcp.pop %v1571
      %v1604 = vrcp.pop %v1574
      %v1605 = vrcp.pop %v1577
      %v1606 = vrcp.pop %v1580
      %v1607 = vrcp.pop %v1583
      %v1608 = vrcp.pop %v1586
      %v1609 = vrcp.pop %v1589
      %v1610 = vrcp.pop %v1592
      %v1611 = vrcp.pop %v1595
      %v1612 = vrcp.pop %v1598
      %v1613 = vrcp.pop %v1601
      %v1614 = vmul.f32 %v1543, %v1602
      %v1615 = vmul.f32 %v1545, %v1603
      %v1616 = vmul.f32 %v1547, %v1604
      %v1617 = vmul.f32 %v1549, %v1605
      %v1618 = vmul.f32 %v1551, %v1606
      %v1619 = vmul.f32 %v1553, %v1607
      %v1620 = vmul.f32 %v1555, %v1608
      %v1621 = vmul.f32 %v1557, %v1609
      %v1622 = vmul.f32 %v1559, %v1610
      %v1623 = vmul.f32 %v1561, %v1611
      %v1624 = vmul.f32 %v1563, %v1612
      %v1625 = vmul.f32 %v1565, %v1613
      %v1626 = vpack.c.bf16 %v1614, %v1614
      %v1627 = vpack.c.bf16 %v1615, %v1615
      %v1628 = vpack.c.bf16 %v1616, %v1616
      %v1629 = vpack.c.bf16 %v1617, %v1617
      %v1630 = vpack.c.bf16 %v1618, %v1618
      %v1631 = vpack.c.bf16 %v1619, %v1619
      %v1632 = vpack.c.bf16 %v1620, %v1620
      %v1633 = vpack.c.bf16 %v1621, %v1621
      %v1634 = vpack.c.bf16 %v1622, %v1622
      %v1635 = vpack.c.bf16 %v1623, %v1623
      %v1636 = vpack.c.bf16 %v1624, %v1624
      %v1637 = vpack.c.bf16 %v1625, %v1625
      %1638 = vxpose.xlu0.c.b16.start [1/8] %v299, 128
      %1639 = vxpose.xlu0.c.b16.cont [2/8] 0, 128
      %1640 = vxpose.xlu0.c.b16.cont [3/8] 0, 128
      %1641 = vxpose.xlu0.c.b16.cont [4/8] 0, 128
      %1642 = vxpose.xlu0.c.b16.cont [5/8] 0, 128
      %1643 = vxpose.xlu0.c.b16.cont [6/8] 0, 128
      %1644 = vxpose.xlu0.c.b16.cont [7/8] 0, 128
      %1645 = vxpose.xlu0.c.b16.end [8/8] 0, 128
      %v1646 = vpop.trf.xlu0
      %v1647 = vpop.trf.xlu0
      %v1648 = vpop.trf.xlu0
      %v1649 = vpop.trf.xlu0
      %v1650 = vpop.trf.xlu0
      %v1651 = vpop.trf.xlu0
      %v1652 = vpop.trf.xlu0
      %v1653 = vpop.trf.xlu0
      %1654 = vxpose.xlu0.c.b16.start [1/8] %v300, 128
      %1655 = vxpose.xlu0.c.b16.cont [2/8] 0, 128
      %1656 = vxpose.xlu0.c.b16.cont [3/8] 0, 128
      %1657 = vxpose.xlu0.c.b16.cont [4/8] 0, 128
      %1658 = vxpose.xlu0.c.b16.cont [5/8] 0, 128
      %1659 = vxpose.xlu0.c.b16.cont [6/8] 0, 128
      %1660 = vxpose.xlu0.c.b16.cont [7/8] 0, 128
      %1661 = vxpose.xlu0.c.b16.end [8/8] 0, 128
      %v1662 = vpop.trf.xlu0
      %v1663 = vpop.trf.xlu0
      %v1664 = vpop.trf.xlu0
      %v1665 = vpop.trf.xlu0
      %v1666 = vpop.trf.xlu0
      %v1667 = vpop.trf.xlu0
      %v1668 = vpop.trf.xlu0
      %v1669 = vpop.trf.xlu0
      %1670 = vxpose.xlu0.c.b16.start [1/8] %v301, 128
      %1671 = vxpose.xlu0.c.b16.cont [2/8] 0, 128
      %1672 = vxpose.xlu0.c.b16.cont [3/8] 0, 128
      %1673 = vxpose.xlu0.c.b16.cont [4/8] 0, 128
      %1674 = vxpose.xlu0.c.b16.cont [5/8] 0, 128
      %1675 = vxpose.xlu0.c.b16.cont [6/8] 0, 128
      %1676 = vxpose.xlu0.c.b16.cont [7/8] 0, 128
      %1677 = vxpose.xlu0.c.b16.end [8/8] 0, 128
      %v1678 = vpop.trf.xlu0
      %v1679 = vpop.trf.xlu0
      %v1680 = vpop.trf.xlu0
      %v1681 = vpop.trf.xlu0
      %v1682 = vpop.trf.xlu0
      %v1683 = vpop.trf.xlu0
      %v1684 = vpop.trf.xlu0
      %v1685 = vpop.trf.xlu0
      %1686 = vxpose.xlu0.c.b16.start [1/8] %v302, 128
      %1687 = vxpose.xlu0.c.b16.cont [2/8] 0, 128
      %1688 = vxpose.xlu0.c.b16.cont [3/8] 0, 128
      %1689 = vxpose.xlu0.c.b16.cont [4/8] 0, 128
      %1690 = vxpose.xlu0.c.b16.cont [5/8] 0, 128
      %1691 = vxpose.xlu0.c.b16.cont [6/8] 0, 128
      %1692 = vxpose.xlu0.c.b16.cont [7/8] 0, 128
      %1693 = vxpose.xlu0.c.b16.end [8/8] 0, 128
      %v1694 = vpop.trf.xlu0
      %v1695 = vpop.trf.xlu0
      %v1696 = vpop.trf.xlu0
      %v1697 = vpop.trf.xlu0
      %v1698 = vpop.trf.xlu0
      %v1699 = vpop.trf.xlu0
      %v1700 = vpop.trf.xlu0
      %v1701 = vpop.trf.xlu0
      %1702 = vxpose.xlu0.c.b16.start [1/8] %v303, 128
      %1703 = vxpose.xlu0.c.b16.cont [2/8] 0, 128
      %1704 = vxpose.xlu0.c.b16.cont [3/8] 0, 128
      %1705 = vxpose.xlu0.c.b16.cont [4/8] 0, 128
      %1706 = vxpose.xlu0.c.b16.cont [5/8] 0, 128
      %1707 = vxpose.xlu0.c.b16.cont [6/8] 0, 128
      %1708 = vxpose.xlu0.c.b16.cont [7/8] 0, 128
      %1709 = vxpose.xlu0.c.b16.end [8/8] 0, 128
      %v1710 = vpop.trf.xlu0
      %v1711 = vpop.trf.xlu0
      %v1712 = vpop.trf.xlu0
      %v1713 = vpop.trf.xlu0
      %v1714 = vpop.trf.xlu0
      %v1715 = vpop.trf.xlu0
      %v1716 = vpop.trf.xlu0
      %v1717 = vpop.trf.xlu0
      %1718 = vxpose.xlu0.c.b16.start [1/8] %v304, 128
      %1719 = vxpose.xlu0.c.b16.cont [2/8] 0, 128
      %1720 = vxpose.xlu0.c.b16.cont [3/8] 0, 128
      %1721 = vxpose.xlu0.c.b16.cont [4/8] 0, 128
      %1722 = vxpose.xlu0.c.b16.cont [5/8] 0, 128
      %1723 = vxpose.xlu0.c.b16.cont [6/8] 0, 128
      %1724 = vxpose.xlu0.c.b16.cont [7/8] 0, 128
      %1725 = vxpose.xlu0.c.b16.end [8/8] 0, 128
      %v1726 = vpop.trf.xlu0
      %v1727 = vpop.trf.xlu0
      %v1728 = vpop.trf.xlu0
      %v1729 = vpop.trf.xlu0
      %v1730 = vpop.trf.xlu0
      %v1731 = vpop.trf.xlu0
      %v1732 = vpop.trf.xlu0
      %v1733 = vpop.trf.xlu0
      %1734 = vxpose.xlu0.c.b16.start [1/8] %v305, 128
      %1735 = vxpose.xlu0.c.b16.cont [2/8] 0, 128
      %1736 = vxpose.xlu0.c.b16.cont [3/8] 0, 128
      %1737 = vxpose.xlu0.c.b16.cont [4/8] 0, 128
      %1738 = vxpose.xlu0.c.b16.cont [5/8] 0, 128
      %1739 = vxpose.xlu0.c.b16.cont [6/8] 0, 128
      %1740 = vxpose.xlu0.c.b16.cont [7/8] 0, 128
      %1741 = vxpose.xlu0.c.b16.end [8/8] 0, 128
      %v1742 = vpop.trf.xlu0
      %v1743 = vpop.trf.xlu0
      %v1744 = vpop.trf.xlu0
      %v1745 = vpop.trf.xlu0
      %v1746 = vpop.trf.xlu0
      %v1747 = vpop.trf.xlu0
      %v1748 = vpop.trf.xlu0
      %v1749 = vpop.trf.xlu0
      %1750 = vxpose.xlu0.c.b16.start [1/8] %v306, 128
      %1751 = vxpose.xlu0.c.b16.cont [2/8] 0, 128
      %1752 = vxpose.xlu0.c.b16.cont [3/8] 0, 128
      %1753 = vxpose.xlu0.c.b16.cont [4/8] 0, 128
      %1754 = vxpose.xlu0.c.b16.cont [5/8] 0, 128
      %1755 = vxpose.xlu0.c.b16.cont [6/8] 0, 128
      %1756 = vxpose.xlu0.c.b16.cont [7/8] 0, 128
      %1757 = vxpose.xlu0.c.b16.end [8/8] 0, 128
      %v1758 = vpop.trf.xlu0
      %v1759 = vpop.trf.xlu0
      %v1760 = vpop.trf.xlu0
      %v1761 = vpop.trf.xlu0
      %v1762 = vpop.trf.xlu0
      %v1763 = vpop.trf.xlu0
      %v1764 = vpop.trf.xlu0
      %v1765 = vpop.trf.xlu0
      %1766 = vxpose.xlu0.c.b16.start [1/8] %v307, 128
      %1767 = vxpose.xlu0.c.b16.cont [2/8] 0, 128
      %1768 = vxpose.xlu0.c.b16.cont [3/8] 0, 128
      %1769 = vxpose.xlu0.c.b16.cont [4/8] 0, 128
      %1770 = vxpose.xlu0.c.b16.cont [5/8] 0, 128
      %1771 = vxpose.xlu0.c.b16.cont [6/8] 0, 128
      %1772 = vxpose.xlu0.c.b16.cont [7/8] 0, 128
      %1773 = vxpose.xlu0.c.b16.end [8/8] 0, 128
      %v1774 = vpop.trf.xlu0
      %v1775 = vpop.trf.xlu0
      %v1776 = vpop.trf.xlu0
      %v1777 = vpop.trf.xlu0
      %v1778 = vpop.trf.xlu0
      %v1779 = vpop.trf.xlu0
      %v1780 = vpop.trf.xlu0
      %v1781 = vpop.trf.xlu0
      %1782 = vxpose.xlu0.c.b16.start [1/8] %v308, 128
      %1783 = vxpose.xlu0.c.b16.cont [2/8] 0, 128
      %1784 = vxpose.xlu0.c.b16.cont [3/8] 0, 128
      %1785 = vxpose.xlu0.c.b16.cont [4/8] 0, 128
      %1786 = vxpose.xlu0.c.b16.cont [5/8] 0, 128
      %1787 = vxpose.xlu0.c.b16.cont [6/8] 0, 128
      %1788 = vxpose.xlu0.c.b16.cont [7/8] 0, 128
      %1789 = vxpose.xlu0.c.b16.end [8/8] 0, 128
      %v1790 = vpop.trf.xlu0
      %v1791 = vpop.trf.xlu0
      %v1792 = vpop.trf.xlu0
      %v1793 = vpop.trf.xlu0
      %v1794 = vpop.trf.xlu0
      %v1795 = vpop.trf.xlu0
      %v1796 = vpop.trf.xlu0
      %v1797 = vpop.trf.xlu0
      %1798 = vxpose.xlu0.c.b16.start [1/8] %v309, 128
      %1799 = vxpose.xlu0.c.b16.cont [2/8] 0, 128
      %1800 = vxpose.xlu0.c.b16.cont [3/8] 0, 128
      %1801 = vxpose.xlu0.c.b16.cont [4/8] 0, 128
      %1802 = vxpose.xlu0.c.b16.cont [5/8] 0, 128
      %1803 = vxpose.xlu0.c.b16.cont [6/8] 0, 128
      %1804 = vxpose.xlu0.c.b16.cont [7/8] 0, 128
      %1805 = vxpose.xlu0.c.b16.end [8/8] 0, 128
      %v1806 = vpop.trf.xlu0
      %v1807 = vpop.trf.xlu0
      %v1808 = vpop.trf.xlu0
      %v1809 = vpop.trf.xlu0
      %v1810 = vpop.trf.xlu0
      %v1811 = vpop.trf.xlu0
      %v1812 = vpop.trf.xlu0
      %v1813 = vpop.trf.xlu0
      %1814 = vxpose.xlu0.c.b16.start [1/8] %v310, 128
      %1815 = vxpose.xlu0.c.b16.cont [2/8] 0, 128
      %1816 = vxpose.xlu0.c.b16.cont [3/8] 0, 128
      %1817 = vxpose.xlu0.c.b16.cont [4/8] 0, 128
      %1818 = vxpose.xlu0.c.b16.cont [5/8] 0, 128
      %1819 = vxpose.xlu0.c.b16.cont [6/8] 0, 128
      %1820 = vxpose.xlu0.c.b16.cont [7/8] 0, 128
      %1821 = vxpose.xlu0.c.b16.end [8/8] 0, 128
      %v1822 = vpop.trf.xlu0
      %v1823 = vpop.trf.xlu0
      %v1824 = vpop.trf.xlu0
      %v1825 = vpop.trf.xlu0
      %v1826 = vpop.trf.xlu0
      %v1827 = vpop.trf.xlu0
      %v1828 = vpop.trf.xlu0
      %v1829 = vpop.trf.xlu0
      %1830 = vxpose.xlu0.c.b16.start [1/8] %v311, 128
      %1831 = vxpose.xlu0.c.b16.cont [2/8] 0, 128
      %1832 = vxpose.xlu0.c.b16.cont [3/8] 0, 128
      %1833 = vxpose.xlu0.c.b16.cont [4/8] 0, 128
      %1834 = vxpose.xlu0.c.b16.cont [5/8] 0, 128
      %1835 = vxpose.xlu0.c.b16.cont [6/8] 0, 128
      %1836 = vxpose.xlu0.c.b16.cont [7/8] 0, 128
      %1837 = vxpose.xlu0.c.b16.end [8/8] 0, 128
      %v1838 = vpop.trf.xlu0
      %v1839 = vpop.trf.xlu0
      %v1840 = vpop.trf.xlu0
      %v1841 = vpop.trf.xlu0
      %v1842 = vpop.trf.xlu0
      %v1843 = vpop.trf.xlu0
      %v1844 = vpop.trf.xlu0
      %v1845 = vpop.trf.xlu0
      %1846 = vxpose.xlu0.c.b16.start [1/8] %v312, 128
      %1847 = vxpose.xlu0.c.b16.cont [2/8] 0, 128
      %1848 = vxpose.xlu0.c.b16.cont [3/8] 0, 128
      %1849 = vxpose.xlu0.c.b16.cont [4/8] 0, 128
      %1850 = vxpose.xlu0.c.b16.cont [5/8] 0, 128
      %1851 = vxpose.xlu0.c.b16.cont [6/8] 0, 128
      %1852 = vxpose.xlu0.c.b16.cont [7/8] 0, 128
      %1853 = vxpose.xlu0.c.b16.end [8/8] 0, 128
      %v1854 = vpop.trf.xlu0
      %v1855 = vpop.trf.xlu0
      %v1856 = vpop.trf.xlu0
      %v1857 = vpop.trf.xlu0
      %v1858 = vpop.trf.xlu0
      %v1859 = vpop.trf.xlu0
      %v1860 = vpop.trf.xlu0
      %v1861 = vpop.trf.xlu0
      %1862 = vxpose.xlu0.c.b16.start [1/8] %v313, 128
      %1863 = vxpose.xlu0.c.b16.cont [2/8] 0, 128
      %1864 = vxpose.xlu0.c.b16.cont [3/8] 0, 128
      %1865 = vxpose.xlu0.c.b16.cont [4/8] 0, 128
      %1866 = vxpose.xlu0.c.b16.cont [5/8] 0, 128
      %1867 = vxpose.xlu0.c.b16.cont [6/8] 0, 128
      %1868 = vxpose.xlu0.c.b16.cont [7/8] 0, 128
      %1869 = vxpose.xlu0.c.b16.end [8/8] 0, 128
      %v1870 = vpop.trf.xlu0
      %v1871 = vpop.trf.xlu0
      %v1872 = vpop.trf.xlu0
      %v1873 = vpop.trf.xlu0
      %v1874 = vpop.trf.xlu0
      %v1875 = vpop.trf.xlu0
      %v1876 = vpop.trf.xlu0
      %v1877 = vpop.trf.xlu0
      %1878 = vxpose.xlu0.c.b16.start [1/8] %v314, 128
      %1879 = vxpose.xlu0.c.b16.cont [2/8] 0, 128
      %1880 = vxpose.xlu0.c.b16.cont [3/8] 0, 128
      %1881 = vxpose.xlu0.c.b16.cont [4/8] 0, 128
      %1882 = vxpose.xlu0.c.b16.cont [5/8] 0, 128
      %1883 = vxpose.xlu0.c.b16.cont [6/8] 0, 128
      %1884 = vxpose.xlu0.c.b16.cont [7/8] 0, 128
      %1885 = vxpose.xlu0.c.b16.end [8/8] 0, 128
      %v1886 = vpop.trf.xlu0
      %v1887 = vpop.trf.xlu0
      %v1888 = vpop.trf.xlu0
      %v1889 = vpop.trf.xlu0
      %v1890 = vpop.trf.xlu0
      %v1891 = vpop.trf.xlu0
      %v1892 = vpop.trf.xlu0
      %v1893 = vpop.trf.xlu0
      %1894 = vxpose.xlu0.c.b16.start [1/8] %v315, 128
      %1895 = vxpose.xlu0.c.b16.cont [2/8] 0, 128
      %1896 = vxpose.xlu0.c.b16.cont [3/8] 0, 128
      %1897 = vxpose.xlu0.c.b16.cont [4/8] 0, 128
      %1898 = vxpose.xlu0.c.b16.cont [5/8] 0, 128
      %1899 = vxpose.xlu0.c.b16.cont [6/8] 0, 128
      %1900 = vxpose.xlu0.c.b16.cont [7/8] 0, 128
      %1901 = vxpose.xlu0.c.b16.end [8/8] 0, 128
      %v1902 = vpop.trf.xlu0
      %v1903 = vpop.trf.xlu0
      %v1904 = vpop.trf.xlu0
      %v1905 = vpop.trf.xlu0
      %v1906 = vpop.trf.xlu0
      %v1907 = vpop.trf.xlu0
      %v1908 = vpop.trf.xlu0
      %v1909 = vpop.trf.xlu0
      %1910 = vxpose.xlu0.c.b16.start [1/8] %v316, 128
      %1911 = vxpose.xlu0.c.b16.cont [2/8] 0, 128
      %1912 = vxpose.xlu0.c.b16.cont [3/8] 0, 128
      %1913 = vxpose.xlu0.c.b16.cont [4/8] 0, 128
      %1914 = vxpose.xlu0.c.b16.cont [5/8] 0, 128
      %1915 = vxpose.xlu0.c.b16.cont [6/8] 0, 128
      %1916 = vxpose.xlu0.c.b16.cont [7/8] 0, 128
      %1917 = vxpose.xlu0.c.b16.end [8/8] 0, 128
      %v1918 = vpop.trf.xlu0
      %v1919 = vpop.trf.xlu0
      %v1920 = vpop.trf.xlu0
      %v1921 = vpop.trf.xlu0
      %v1922 = vpop.trf.xlu0
      %v1923 = vpop.trf.xlu0
      %v1924 = vpop.trf.xlu0
      %v1925 = vpop.trf.xlu0
      %1926 = vxpose.xlu0.c.b16.start [1/8] %v317, 128
      %1927 = vxpose.xlu0.c.b16.cont [2/8] 0, 128
      %1928 = vxpose.xlu0.c.b16.cont [3/8] 0, 128
      %1929 = vxpose.xlu0.c.b16.cont [4/8] 0, 128
      %1930 = vxpose.xlu0.c.b16.cont [5/8] 0, 128
      %1931 = vxpose.xlu0.c.b16.cont [6/8] 0, 128
      %1932 = vxpose.xlu0.c.b16.cont [7/8] 0, 128
      %1933 = vxpose.xlu0.c.b16.end [8/8] 0, 128
      %v1934 = vpop.trf.xlu0
      %v1935 = vpop.trf.xlu0
      %v1936 = vpop.trf.xlu0
      %v1937 = vpop.trf.xlu0
      %v1938 = vpop.trf.xlu0
      %v1939 = vpop.trf.xlu0
      %v1940 = vpop.trf.xlu0
      %v1941 = vpop.trf.xlu0
      %1942 = vxpose.xlu0.c.b16.start [1/8] %v318, 128
      %1943 = vxpose.xlu0.c.b16.cont [2/8] 0, 128
      %1944 = vxpose.xlu0.c.b16.cont [3/8] 0, 128
      %1945 = vxpose.xlu0.c.b16.cont [4/8] 0, 128
      %1946 = vxpose.xlu0.c.b16.cont [5/8] 0, 128
      %1947 = vxpose.xlu0.c.b16.cont [6/8] 0, 128
      %1948 = vxpose.xlu0.c.b16.cont [7/8] 0, 128
      %1949 = vxpose.xlu0.c.b16.end [8/8] 0, 128
      %v1950 = vpop.trf.xlu0
      %v1951 = vpop.trf.xlu0
      %v1952 = vpop.trf.xlu0
      %v1953 = vpop.trf.xlu0
      %v1954 = vpop.trf.xlu0
      %v1955 = vpop.trf.xlu0
      %v1956 = vpop.trf.xlu0
      %v1957 = vpop.trf.xlu0
      %1958 = vxpose.xlu0.c.b16.start [1/8] %v319, 128
      %1959 = vxpose.xlu0.c.b16.cont [2/8] 0, 128
      %1960 = vxpose.xlu0.c.b16.cont [3/8] 0, 128
      %1961 = vxpose.xlu0.c.b16.cont [4/8] 0, 128
      %1962 = vxpose.xlu0.c.b16.cont [5/8] 0, 128
      %1963 = vxpose.xlu0.c.b16.cont [6/8] 0, 128
      %1964 = vxpose.xlu0.c.b16.cont [7/8] 0, 128
      %1965 = vxpose.xlu0.c.b16.end [8/8] 0, 128
      %v1966 = vpop.trf.xlu0
      %v1967 = vpop.trf.xlu0
      %v1968 = vpop.trf.xlu0
      %v1969 = vpop.trf.xlu0
      %v1970 = vpop.trf.xlu0
      %v1971 = vpop.trf.xlu0
      %v1972 = vpop.trf.xlu0
      %v1973 = vpop.trf.xlu0
      %1974 = vxpose.xlu0.c.b16.start [1/8] %v320, 128
      %1975 = vxpose.xlu0.c.b16.cont [2/8] 0, 128
      %1976 = vxpose.xlu0.c.b16.cont [3/8] 0, 128
      %1977 = vxpose.xlu0.c.b16.cont [4/8] 0, 128
      %1978 = vxpose.xlu0.c.b16.cont [5/8] 0, 128
      %1979 = vxpose.xlu0.c.b16.cont [6/8] 0, 128
      %1980 = vxpose.xlu0.c.b16.cont [7/8] 0, 128
      %1981 = vxpose.xlu0.c.b16.end [8/8] 0, 128
      %v1982 = vpop.trf.xlu0
      %v1983 = vpop.trf.xlu0
      %v1984 = vpop.trf.xlu0
      %v1985 = vpop.trf.xlu0
      %v1986 = vpop.trf.xlu0
      %v1987 = vpop.trf.xlu0
      %v1988 = vpop.trf.xlu0
      %v1989 = vpop.trf.xlu0
      %1990 = vxpose.xlu0.c.b16.start [1/8] %v321, 128
      %1991 = vxpose.xlu0.c.b16.cont [2/8] 0, 128
      %1992 = vxpose.xlu0.c.b16.cont [3/8] 0, 128
      %1993 = vxpose.xlu0.c.b16.cont [4/8] 0, 128
      %1994 = vxpose.xlu0.c.b16.cont [5/8] 0, 128
      %1995 = vxpose.xlu0.c.b16.cont [6/8] 0, 128
      %1996 = vxpose.xlu0.c.b16.cont [7/8] 0, 128
      %1997 = vxpose.xlu0.c.b16.end [8/8] 0, 128
      %v1998 = vpop.trf.xlu0
      %v1999 = vpop.trf.xlu0
      %v2000 = vpop.trf.xlu0
      %v2001 = vpop.trf.xlu0
      %v2002 = vpop.trf.xlu0
      %v2003 = vpop.trf.xlu0
      %v2004 = vpop.trf.xlu0
      %v2005 = vpop.trf.xlu0
      %2006 = vxpose.xlu0.c.b16.start [1/8] %v322, 128
      %2007 = vxpose.xlu0.c.b16.cont [2/8] 0, 128
      %2008 = vxpose.xlu0.c.b16.cont [3/8] 0, 128
      %2009 = vxpose.xlu0.c.b16.cont [4/8] 0, 128
      %2010 = vxpose.xlu0.c.b16.cont [5/8] 0, 128
      %2011 = vxpose.xlu0.c.b16.cont [6/8] 0, 128
      %2012 = vxpose.xlu0.c.b16.cont [7/8] 0, 128
      %2013 = vxpose.xlu0.c.b16.end [8/8] 0, 128
      %v2014 = vpop.trf.xlu0
      %v2015 = vpop.trf.xlu0
      %v2016 = vpop.trf.xlu0
      %v2017 = vpop.trf.xlu0
      %v2018 = vpop.trf.xlu0
      %v2019 = vpop.trf.xlu0
      %v2020 = vpop.trf.xlu0
      %v2021 = vpop.trf.xlu0
      %v2022 = vrot.slane %v1710, 4
      %v2023 = vsel %vm324, %v2022, %v1646
      %v2025 = vunpack.c.l.s4 1983009808
      %v2026 = vunpack.c.0.s8 %v2025
      %v2027 = vperm.slane %v2023, %v2026
      %v2028 = vrot.slane %v1742, 4
      %v2029 = vsel %vm324, %v2028, %v1678
      %v2031 = vunpack.c.l.s4 1983009808
      %v2032 = vunpack.c.0.s8 %v2031
      %v2033 = vperm.slane %v2029, %v2032
      %v2034 = vrot.slane %v1838, 4
      %v2035 = vsel %vm324, %v2034, %v1774
      %v2037 = vunpack.c.l.s4 1983009808
      %v2038 = vunpack.c.0.s8 %v2037
      %v2039 = vperm.slane %v2035, %v2038
      %v2040 = vrot.slane %v1870, 4
      %v2041 = vsel %vm324, %v2040, %v1806
      %v2043 = vunpack.c.l.s4 1983009808
      %v2044 = vunpack.c.0.s8 %v2043
      %v2045 = vperm.slane %v2041, %v2044
      %v2046 = vrot.slane %v2033, 4
      %v2047 = vsel %vm324, %v2046, %v2027
      %v2048 = vrot.slane %v2027, 4
      %v2049 = vsel %vm324, %v2033, %v2048
      %v2051 = vunpack.c.l.s4 1934713408
      %v2052 = vunpack.c.0.s8 %v2051
      %v2053 = vperm.slane %v2047, %v2052
      %v2055 = vunpack.c.l.s4 1934713408
      %v2056 = vunpack.c.0.s8 %v2055
      %v2057 = vperm.slane %v2049, %v2056
      %v2058 = vrot.slane %v2045, 4
      %v2059 = vsel %vm324, %v2058, %v2039
      %v2060 = vrot.slane %v2039, 4
      %v2061 = vsel %vm324, %v2045, %v2060
      %v2063 = vunpack.c.l.s4 1934713408
      %v2064 = vunpack.c.0.s8 %v2063
      %v2065 = vperm.slane %v2059, %v2064
      %v2067 = vunpack.c.l.s4 1934713408
      %v2068 = vunpack.c.0.s8 %v2067
      %v2069 = vperm.slane %v2061, %v2068
      %v2070 = vrot.slane %v2065, 4
      %v2071 = vsel %vm324, %v2070, %v2053
      %v2072 = vrot.slane %v2053, 4
      %v2073 = vsel %vm324, %v2065, %v2072
      %v2074 = vrot.slane %v2069, 4
      %v2075 = vsel %vm324, %v2074, %v2057
      %v2076 = vrot.slane %v2057, 4
      %v2077 = vsel %vm324, %v2069, %v2076
      %v2078 = vrot.slane %v1726, 4
      %v2079 = vsel %vm324, %v2078, %v1662
      %v2081 = vunpack.c.l.s4 1983009808
      %v2082 = vunpack.c.0.s8 %v2081
      %v2083 = vperm.slane %v2079, %v2082
      %v2084 = vrot.slane %v1758, 4
      %v2085 = vsel %vm324, %v2084, %v1694
      %v2087 = vunpack.c.l.s4 1983009808
      %v2088 = vunpack.c.0.s8 %v2087
      %v2089 = vperm.slane %v2085, %v2088
      %v2090 = vrot.slane %v1854, 4
      %v2091 = vsel %vm324, %v2090, %v1790
      %v2093 = vunpack.c.l.s4 1983009808
      %v2094 = vunpack.c.0.s8 %v2093
      %v2095 = vperm.slane %v2091, %v2094
      %v2096 = vrot.slane %v1886, 4
      %v2097 = vsel %vm324, %v2096, %v1822
      %v2099 = vunpack.c.l.s4 1983009808
      %v2100 = vunpack.c.0.s8 %v2099
      %v2101 = vperm.slane %v2097, %v2100
      %v2102 = vrot.slane %v2089, 4
      %v2103 = vsel %vm324, %v2102, %v2083
      %v2104 = vrot.slane %v2083, 4
      %v2105 = vsel %vm324, %v2089, %v2104
      %v2107 = vunpack.c.l.s4 1934713408
      %v2108 = vunpack.c.0.s8 %v2107
      %v2109 = vperm.slane %v2103, %v2108
      %v2111 = vunpack.c.l.s4 1934713408
      %v2112 = vunpack.c.0.s8 %v2111
      %v2113 = vperm.slane %v2105, %v2112
      %v2114 = vrot.slane %v2101, 4
      %v2115 = vsel %vm324, %v2114, %v2095
      %v2116 = vrot.slane %v2095, 4
      %v2117 = vsel %vm324, %v2101, %v2116
      %v2119 = vunpack.c.l.s4 1934713408
      %v2120 = vunpack.c.0.s8 %v2119
      %v2121 = vperm.slane %v2115, %v2120
      %v2123 = vunpack.c.l.s4 1934713408
      %v2124 = vunpack.c.0.s8 %v2123
      %v2125 = vperm.slane %v2117, %v2124
      %v2126 = vrot.slane %v2121, 4
      %v2127 = vsel %vm324, %v2126, %v2109
      %v2128 = vrot.slane %v2109, 4
      %v2129 = vsel %vm324, %v2121, %v2128
      %v2130 = vrot.slane %v2125, 4
      %v2131 = vsel %vm324, %v2130, %v2113
      %v2132 = vrot.slane %v2113, 4
      %v2133 = vsel %vm324, %v2125, %v2132
      %v2134 = vrot.slane %v1966, 4
      %v2135 = vsel %vm324, %v2134, %v1902
      %v2137 = vunpack.c.l.s4 1983009808
      %v2138 = vunpack.c.0.s8 %v2137
      %v2139 = vperm.slane %v2135, %v2138
      %v2140 = vrot.slane %v1998, 4
      %v2141 = vsel %vm324, %v2140, %v1934
      %v2143 = vunpack.c.l.s4 1983009808
      %v2144 = vunpack.c.0.s8 %v2143
      %v2145 = vperm.slane %v2141, %v2144
      %v2146 = vrot.slane %v2145, 4
      %v2147 = vsel %vm324, %v2146, %v2139
      %v2148 = vrot.slane %v2139, 4
      %v2149 = vsel %vm324, %v2145, %v2148
      %v2151 = vunpack.c.l.s4 1934713408
      %v2152 = vunpack.c.0.s8 %v2151
      %v2153 = vperm.slane %v2147, %v2152
      %v2155 = vunpack.c.l.s4 1934713408
      %v2156 = vunpack.c.0.s8 %v2155
      %v2157 = vperm.slane %v2149, %v2156
      %v2158 = vrot.slane %v2153, 4
      %v2159 = vsel %vm324, 0, %v2158
      %v2160 = vrot.slane %v2157, 4
      %v2161 = vsel %vm324, 0, %v2160
      %v2162 = vrot.slane %v1982, 4
      %v2163 = vsel %vm324, %v2162, %v1918
      %v2165 = vunpack.c.l.s4 1983009808
      %v2166 = vunpack.c.0.s8 %v2165
      %v2167 = vperm.slane %v2163, %v2166
      %v2168 = vrot.slane %v2014, 4
      %v2169 = vsel %vm324, %v2168, %v1950
      %v2171 = vunpack.c.l.s4 1983009808
      %v2172 = vunpack.c.0.s8 %v2171
      %v2173 = vperm.slane %v2169, %v2172
      %v2174 = vrot.slane %v2173, 4
      %v2175 = vsel %vm324, %v2174, %v2167
      %v2176 = vrot.slane %v2167, 4
      %v2177 = vsel %vm324, %v2173, %v2176
      %v2179 = vunpack.c.l.s4 1934713408
      %v2180 = vunpack.c.0.s8 %v2179
      %v2181 = vperm.slane %v2175, %v2180
      %v2183 = vunpack.c.l.s4 1934713408
      %v2184 = vunpack.c.0.s8 %v2183
      %v2185 = vperm.slane %v2177, %v2184
      %v2186 = vrot.slane %v2181, 4
      %v2187 = vsel %vm324, 0, %v2186
      %v2188 = vrot.slane %v2185, 4
      %v2189 = vsel %vm324, 0, %v2188
      %v2192 = vpack.i.b16 %v2127, %v2071
      %v2194 = vshrl.u32 %v2071, 16
      %v2195 = vshrl.u32 %v2127, 16
      %v2196 = vpack.i.b16 %v2195, %v2194
      %v2200 = vpack.i.b16 %v2129, %v2073
      %v2202 = vshrl.u32 %v2073, 16
      %v2203 = vshrl.u32 %v2129, 16
      %v2204 = vpack.i.b16 %v2203, %v2202
      %v2208 = vpack.i.b16 %v2131, %v2075
      %v2210 = vshrl.u32 %v2075, 16
      %v2211 = vshrl.u32 %v2131, 16
      %v2212 = vpack.i.b16 %v2211, %v2210
      %v2216 = vpack.i.b16 %v2133, %v2077
      %v2218 = vshrl.u32 %v2077, 16
      %v2219 = vshrl.u32 %v2133, 16
      %v2220 = vpack.i.b16 %v2219, %v2218
      %v2224 = vpack.i.b16 %v2181, %v2153
      %v2226 = vshrl.u32 %v2153, 16
      %v2227 = vshrl.u32 %v2181, 16
      %v2228 = vpack.i.b16 %v2227, %v2226
      %v2232 = vpack.i.b16 %v2187, %v2159
      %v2234 = vshrl.u32 %v2159, 16
      %v2235 = vshrl.u32 %v2187, 16
      %v2236 = vpack.i.b16 %v2235, %v2234
      %v2240 = vpack.i.b16 %v2185, %v2157
      %v2242 = vshrl.u32 %v2157, 16
      %v2243 = vshrl.u32 %v2185, 16
      %v2244 = vpack.i.b16 %v2243, %v2242
      %v2248 = vpack.i.b16 %v2189, %v2161
      %v2250 = vshrl.u32 %v2161, 16
      %v2251 = vshrl.u32 %v2189, 16
      %v2252 = vpack.i.b16 %v2251, %v2250
      %2254 = vxpose.xlu0.c.b16.start [1/8] %v2192, 128
      %2255 = vxpose.xlu0.c.b16.cont [2/8] %v2224, 128
      %2256 = vxpose.xlu0.c.b16.cont [3/8] 0, 128
      %2257 = vxpose.xlu0.c.b16.cont [4/8] 0, 128
      %2258 = vxpose.xlu0.c.b16.cont [5/8] 0, 128
      %2259 = vxpose.xlu0.c.b16.cont [6/8] 0, 128
      %2260 = vxpose.xlu0.c.b16.cont [7/8] 0, 128
      %2261 = vxpose.xlu0.c.b16.end [8/8] 0, 128
      %v2262 = vpop.trf.xlu0
      %v2263 = vpop.trf.xlu0
      %v2264 = vpop.trf.xlu0
      %v2265 = vpop.trf.xlu0
      %v2266 = vpop.trf.xlu0
      %v2267 = vpop.trf.xlu0
      %v2268 = vpop.trf.xlu0
      %v2269 = vpop.trf.xlu0
      %2270 = vxpose.xlu0.c.b16.start [1/8] %v2196, 128
      %2271 = vxpose.xlu0.c.b16.cont [2/8] %v2228, 128
      %2272 = vxpose.xlu0.c.b16.cont [3/8] 0, 128
      %2273 = vxpose.xlu0.c.b16.cont [4/8] 0, 128
      %2274 = vxpose.xlu0.c.b16.cont [5/8] 0, 128
      %2275 = vxpose.xlu0.c.b16.cont [6/8] 0, 128
      %2276 = vxpose.xlu0.c.b16.cont [7/8] 0, 128
      %2277 = vxpose.xlu0.c.b16.end [8/8] 0, 128
      %v2278 = vpop.trf.xlu0
      %v2279 = vpop.trf.xlu0
      %v2280 = vpop.trf.xlu0
      %v2281 = vpop.trf.xlu0
      %v2282 = vpop.trf.xlu0
      %v2283 = vpop.trf.xlu0
      %v2284 = vpop.trf.xlu0
      %v2285 = vpop.trf.xlu0
      %2286 = vxpose.xlu0.c.b16.start [1/8] %v2200, 128
      %2287 = vxpose.xlu0.c.b16.cont [2/8] %v2232, 128
      %2288 = vxpose.xlu0.c.b16.cont [3/8] 0, 128
      %2289 = vxpose.xlu0.c.b16.cont [4/8] 0, 128
      %2290 = vxpose.xlu0.c.b16.cont [5/8] 0, 128
      %2291 = vxpose.xlu0.c.b16.cont [6/8] 0, 128
      %2292 = vxpose.xlu0.c.b16.cont [7/8] 0, 128
      %2293 = vxpose.xlu0.c.b16.end [8/8] 0, 128
      %v2294 = vpop.trf.xlu0
      %v2295 = vpop.trf.xlu0
      %v2296 = vpop.trf.xlu0
      %v2297 = vpop.trf.xlu0
      %v2298 = vpop.trf.xlu0
      %v2299 = vpop.trf.xlu0
      %v2300 = vpop.trf.xlu0
      %v2301 = vpop.trf.xlu0
      %2302 = vxpose.xlu0.c.b16.start [1/8] %v2204, 128
      %2303 = vxpose.xlu0.c.b16.cont [2/8] %v2236, 128
      %2304 = vxpose.xlu0.c.b16.cont [3/8] 0, 128
      %2305 = vxpose.xlu0.c.b16.cont [4/8] 0, 128
      %2306 = vxpose.xlu0.c.b16.cont [5/8] 0, 128
      %2307 = vxpose.xlu0.c.b16.cont [6/8] 0, 128
      %2308 = vxpose.xlu0.c.b16.cont [7/8] 0, 128
      %2309 = vxpose.xlu0.c.b16.end [8/8] 0, 128
      %v2310 = vpop.trf.xlu0
      %v2311 = vpop.trf.xlu0
      %v2312 = vpop.trf.xlu0
      %v2313 = vpop.trf.xlu0
      %v2314 = vpop.trf.xlu0
      %v2315 = vpop.trf.xlu0
      %v2316 = vpop.trf.xlu0
      %v2317 = vpop.trf.xlu0
      %2318 = vxpose.xlu0.c.b16.start [1/8] %v2208, 128
      %2319 = vxpose.xlu0.c.b16.cont [2/8] %v2240, 128
      %2320 = vxpose.xlu0.c.b16.cont [3/8] 0, 128
      %2321 = vxpose.xlu0.c.b16.cont [4/8] 0, 128
      %2322 = vxpose.xlu0.c.b16.cont [5/8] 0, 128
      %2323 = vxpose.xlu0.c.b16.cont [6/8] 0, 128
      %2324 = vxpose.xlu0.c.b16.cont [7/8] 0, 128
      %2325 = vxpose.xlu0.c.b16.end [8/8] 0, 128
      %v2326 = vpop.trf.xlu0
      %v2327 = vpop.trf.xlu0
      %v2328 = vpop.trf.xlu0
      %v2329 = vpop.trf.xlu0
      %v2330 = vpop.trf.xlu0
      %v2331 = vpop.trf.xlu0
      %v2332 = vpop.trf.xlu0
      %v2333 = vpop.trf.xlu0
      %2334 = vxpose.xlu0.c.b16.start [1/8] %v2212, 128
      %2335 = vxpose.xlu0.c.b16.cont [2/8] %v2244, 128
      %2336 = vxpose.xlu0.c.b16.cont [3/8] 0, 128
      %2337 = vxpose.xlu0.c.b16.cont [4/8] 0, 128
      %2338 = vxpose.xlu0.c.b16.cont [5/8] 0, 128
      %2339 = vxpose.xlu0.c.b16.cont [6/8] 0, 128
      %2340 = vxpose.xlu0.c.b16.cont [7/8] 0, 128
      %2341 = vxpose.xlu0.c.b16.end [8/8] 0, 128
      %v2342 = vpop.trf.xlu0
      %v2343 = vpop.trf.xlu0
      %v2344 = vpop.trf.xlu0
      %v2345 = vpop.trf.xlu0
      %v2346 = vpop.trf.xlu0
      %v2347 = vpop.trf.xlu0
      %v2348 = vpop.trf.xlu0
      %v2349 = vpop.trf.xlu0
      %2350 = vxpose.xlu0.c.b16.start [1/8] %v2216, 128
      %2351 = vxpose.xlu0.c.b16.cont [2/8] %v2248, 128
      %2352 = vxpose.xlu0.c.b16.cont [3/8] 0, 128
      %2353 = vxpose.xlu0.c.b16.cont [4/8] 0, 128
      %2354 = vxpose.xlu0.c.b16.cont [5/8] 0, 128
      %2355 = vxpose.xlu0.c.b16.cont [6/8] 0, 128
      %2356 = vxpose.xlu0.c.b16.cont [7/8] 0, 128
      %2357 = vxpose.xlu0.c.b16.end [8/8] 0, 128
      %v2358 = vpop.trf.xlu0
      %v2359 = vpop.trf.xlu0
      %v2360 = vpop.trf.xlu0
      %v2361 = vpop.trf.xlu0
      %v2362 = vpop.trf.xlu0
      %v2363 = vpop.trf.xlu0
      %v2364 = vpop.trf.xlu0
      %v2365 = vpop.trf.xlu0
      %2366 = vxpose.xlu0.c.b16.start [1/8] %v2220, 128
      %2367 = vxpose.xlu0.c.b16.cont [2/8] %v2252, 128
      %2368 = vxpose.xlu0.c.b16.cont [3/8] 0, 128
      %2369 = vxpose.xlu0.c.b16.cont [4/8] 0, 128
      %2370 = vxpose.xlu0.c.b16.cont [5/8] 0, 128
      %2371 = vxpose.xlu0.c.b16.cont [6/8] 0, 128
      %2372 = vxpose.xlu0.c.b16.cont [7/8] 0, 128
      %2373 = vxpose.xlu0.c.b16.end [8/8] 0, 128
      %v2374 = vpop.trf.xlu0
      %v2375 = vpop.trf.xlu0
      %v2376 = vpop.trf.xlu0
      %v2377 = vpop.trf.xlu0
      %v2378 = vpop.trf.xlu0
      %v2379 = vpop.trf.xlu0
      %v2380 = vpop.trf.xlu0
      %v2381 = vpop.trf.xlu0
      %v2382 = vrot.slane %v2326, 4
      %v2383 = vsel %vm324, %v2382, %v2262
      %v2385 = vunpack.c.l.s4 1983009808
      %v2386 = vunpack.c.0.s8 %v2385
      %v2387 = vperm.slane %v2383, %v2386
      %v2388 = vrot.slane %v2358, 4
      %v2389 = vsel %vm324, %v2388, %v2294
      %v2391 = vunpack.c.l.s4 1983009808
      %v2392 = vunpack.c.0.s8 %v2391
      %v2393 = vperm.slane %v2389, %v2392
      %v2394 = vrot.slane %v2393, 4
      %v2395 = vsel %vm324, %v2394, %v2387
      %v2397 = vunpack.c.l.s4 1934713408
      %v2398 = vunpack.c.0.s8 %v2397
      %v2399 = vperm.slane %v2395, %v2398
      %v2400 = vrot.slane %v2399, 4
      %v2401 = vsel %vm324, 0, %v2400
      %v2402 = vrot.slane %v2342, 4
      %v2403 = vsel %vm324, %v2402, %v2278
      %v2405 = vunpack.c.l.s4 1983009808
      %v2406 = vunpack.c.0.s8 %v2405
      %v2407 = vperm.slane %v2403, %v2406
      %v2408 = vrot.slane %v2374, 4
      %v2409 = vsel %vm324, %v2408, %v2310
      %v2411 = vunpack.c.l.s4 1983009808
      %v2412 = vunpack.c.0.s8 %v2411
      %v2413 = vperm.slane %v2409, %v2412
      %v2414 = vrot.slane %v2413, 4
      %v2415 = vsel %vm324, %v2414, %v2407
      %v2417 = vunpack.c.l.s4 1934713408
      %v2418 = vunpack.c.0.s8 %v2417
      %v2419 = vperm.slane %v2415, %v2418
      %v2420 = vrot.slane %v2419, 4
      %v2421 = vsel %vm324, 0, %v2420
      %v2424 = vpack.i.b16 %v2419, %v2399
      %v2425 = vshrl.u32 %v2399, 16
      %v2426 = vshrl.u32 %v2419, 16
      %v2427 = vpack.i.b16 %v2426, %v2425
      %v2430 = vpack.i.b16 %v2421, %v2401
      %v2431 = vshrl.u32 %v2401, 16
      %v2432 = vshrl.u32 %v2421, 16
      %v2433 = vpack.i.b16 %v2432, %v2431
      %v2437 = vunpack.c.l.b16 %v1626
      %v2438 = vunpack.c.l.b16 %v1627
      %v2439 = vunpack.c.l.b16 %v1628
      %v2440 = vpack.c.b16 %v2438, %v2437
      %v2441 = vpack.c.b16 %v2439, %v2439
      %v2443 = vsel %vm1493, %v2424, 0
      %v2446 = vsel %vm1493, %v2440, 0
      %v2449 = vsel %vm1493, %v2441, 0
      %2451 = vmatpush.bf16.xpose.msra.mxu0 0
      %2452 = vmatpush.bf16.xpose.msra.mxu0 0
      %2453 = vmatpush.bf16.xpose.msra.mxu0 0
      %2454 = vmatpush.bf16.xpose.msra.mxu0 0
      %2455 = vmatpush.bf16.xpose.msra.mxu0 0
      %2456 = vmatpush.bf16.xpose.msra.mxu0 0
      %2457 = vmatpush.bf16.xpose.msra.mxu0 %v2449
      %2458 = vmatpush.bf16.xpose.msra.mxu0 %v2446
      %2459 = vmatmul.bf16.gmra.mxu0 %v2443
      %v2460 = vpop.f32.mrf.mxu0
      %v2461 = vadd.f32 0.0, %v2460
      %v2462 = vpop.f32.mrf.mxu0
      %2463 = vdwg.mxu0
      %v2467 = vunpack.c.l.b16 %v1629
      %v2468 = vunpack.c.l.b16 %v1630
      %v2469 = vunpack.c.l.b16 %v1631
      %v2470 = vpack.c.b16 %v2468, %v2467
      %v2471 = vpack.c.b16 %v2469, %v2469
      %v2473 = vsel %vm1493, %v2427, 0
      %v2476 = vsel %vm1493, %v2470, 0
      %v2479 = vsel %vm1493, %v2471, 0
      %2481 = vmatpush.bf16.xpose.msra.mxu0 0
      %2482 = vmatpush.bf16.xpose.msra.mxu0 0
      %2483 = vmatpush.bf16.xpose.msra.mxu0 0
      %2484 = vmatpush.bf16.xpose.msra.mxu0 0
      %2485 = vmatpush.bf16.xpose.msra.mxu0 0
      %2486 = vmatpush.bf16.xpose.msra.mxu0 0
      %2487 = vmatpush.bf16.xpose.msra.mxu0 %v2479
      %2488 = vmatpush.bf16.xpose.msra.mxu0 %v2476
      %2489 = vmatmul.bf16.gmra.mxu0 %v2473
      %v2490 = vpop.f32.mrf.mxu0
      %v2491 = vadd.f32 0.0, %v2490
      %v2492 = vpop.f32.mrf.mxu0
      %2493 = vdwg.mxu0
      %v2497 = vunpack.c.l.b16 %v1632
      %v2498 = vunpack.c.l.b16 %v1633
      %v2499 = vunpack.c.l.b16 %v1634
      %v2500 = vpack.c.b16 %v2498, %v2497
      %v2501 = vpack.c.b16 %v2499, %v2499
      %v2503 = vsel %vm1493, %v2430, 0
      %v2506 = vsel %vm1493, %v2500, 0
      %v2509 = vsel %vm1493, %v2501, 0
      %2511 = vmatpush.bf16.xpose.msra.mxu0 0
      %2512 = vmatpush.bf16.xpose.msra.mxu0 0
      %2513 = vmatpush.bf16.xpose.msra.mxu0 0
      %2514 = vmatpush.bf16.xpose.msra.mxu0 0
      %2515 = vmatpush.bf16.xpose.msra.mxu0 0
      %2516 = vmatpush.bf16.xpose.msra.mxu0 0
      %2517 = vmatpush.bf16.xpose.msra.mxu0 %v2509
      %2518 = vmatpush.bf16.xpose.msra.mxu0 %v2506
      %2519 = vmatmul.bf16.gmra.mxu0 %v2503
      %v2520 = vpop.f32.mrf.mxu0
      %v2521 = vadd.f32 0.0, %v2520
      %v2522 = vpop.f32.mrf.mxu0
      %2523 = vdwg.mxu0
      %v2527 = vunpack.c.l.b16 %v1635
      %v2528 = vunpack.c.l.b16 %v1636
      %v2529 = vunpack.c.l.b16 %v1637
      %v2530 = vpack.c.b16 %v2528, %v2527
      %v2531 = vpack.c.b16 %v2529, %v2529
      %v2533 = vsel %vm1493, %v2433, 0
      %v2536 = vsel %vm1493, %v2530, 0
      %v2539 = vsel %vm1493, %v2531, 0
      %2541 = vmatpush.bf16.xpose.msra.mxu0 0
      %2542 = vmatpush.bf16.xpose.msra.mxu0 0
      %2543 = vmatpush.bf16.xpose.msra.mxu0 0
      %2544 = vmatpush.bf16.xpose.msra.mxu0 0
      %2545 = vmatpush.bf16.xpose.msra.mxu0 0
      %2546 = vmatpush.bf16.xpose.msra.mxu0 0
      %2547 = vmatpush.bf16.xpose.msra.mxu0 %v2539
      %2548 = vmatpush.bf16.xpose.msra.mxu0 %v2536
      %2549 = vmatmul.bf16.gmra.mxu0 %v2533
      %v2550 = vpop.f32.mrf.mxu0
      %v2551 = vadd.f32 0.0, %v2550
      %v2552 = vpop.f32.mrf.mxu0
      %2553 = vdwg.mxu0
      %2554 = vxpose.xlu0.b32.start [1/16] %v2461, 128
      %2555 = vxpose.xlu0.b32.cont [2/16] 0.0, 128
      %2556 = vxpose.xlu0.b32.cont [3/16] 0.0, 128
      %2557 = vxpose.xlu0.b32.cont [4/16] 0.0, 128
      %2558 = vxpose.xlu0.b32.cont [5/16] 0.0, 128
      %2559 = vxpose.xlu0.b32.cont [6/16] 0.0, 128
      %2560 = vxpose.xlu0.b32.cont [7/16] 0.0, 128
      %2561 = vxpose.xlu0.b32.cont [8/16] 0.0, 128
      %2562 = vxpose.xlu0.b32.cont [9/16] 0.0, 128
      %2563 = vxpose.xlu0.b32.cont [10/16] 0.0, 128
      %2564 = vxpose.xlu0.b32.cont [11/16] 0.0, 128
      %2565 = vxpose.xlu0.b32.cont [12/16] 0.0, 128
      %2566 = vxpose.xlu0.b32.cont [13/16] 0.0, 128
      %2567 = vxpose.xlu0.b32.cont [14/16] 0.0, 128
      %2568 = vxpose.xlu0.b32.cont [15/16] 0.0, 128
      %2569 = vxpose.xlu0.b32.end [16/16] 0.0, 128
      %v2570 = vpop.trf.xlu0
      %v2571 = vpop.trf.xlu0
      %v2572 = vpop.trf.xlu0
      %v2573 = vpop.trf.xlu0
      %v2574 = vpop.trf.xlu0
      %v2575 = vpop.trf.xlu0
      %v2576 = vpop.trf.xlu0
      %v2577 = vpop.trf.xlu0
      %v2578 = vpop.trf.xlu0
      %v2579 = vpop.trf.xlu0
      %v2580 = vpop.trf.xlu0
      %v2581 = vpop.trf.xlu0
      %v2582 = vpop.trf.xlu0
      %v2583 = vpop.trf.xlu0
      %v2584 = vpop.trf.xlu0
      %v2585 = vpop.trf.xlu0
      %2586 = vxpose.xlu0.b32.start [1/16] %v2491, 128
      %2587 = vxpose.xlu0.b32.cont [2/16] 0.0, 128
      %2588 = vxpose.xlu0.b32.cont [3/16] 0.0, 128
      %2589 = vxpose.xlu0.b32.cont [4/16] 0.0, 128
      %2590 = vxpose.xlu0.b32.cont [5/16] 0.0, 128
      %2591 = vxpose.xlu0.b32.cont [6/16] 0.0, 128
      %2592 = vxpose.xlu0.b32.cont [7/16] 0.0, 128
      %2593 = vxpose.xlu0.b32.cont [8/16] 0.0, 128
      %2594 = vxpose.xlu0.b32.cont [9/16] 0.0, 128
      %2595 = vxpose.xlu0.b32.cont [10/16] 0.0, 128
      %2596 = vxpose.xlu0.b32.cont [11/16] 0.0, 128
      %2597 = vxpose.xlu0.b32.cont [12/16] 0.0, 128
      %2598 = vxpose.xlu0.b32.cont [13/16] 0.0, 128
      %2599 = vxpose.xlu0.b32.cont [14/16] 0.0, 128
      %2600 = vxpose.xlu0.b32.cont [15/16] 0.0, 128
      %2601 = vxpose.xlu0.b32.end [16/16] 0.0, 128
      %v2602 = vpop.trf.xlu0
      %v2603 = vpop.trf.xlu0
      %v2604 = vpop.trf.xlu0
      %v2605 = vpop.trf.xlu0
      %v2606 = vpop.trf.xlu0
      %v2607 = vpop.trf.xlu0
      %v2608 = vpop.trf.xlu0
      %v2609 = vpop.trf.xlu0
      %v2610 = vpop.trf.xlu0
      %v2611 = vpop.trf.xlu0
      %v2612 = vpop.trf.xlu0
      %v2613 = vpop.trf.xlu0
      %v2614 = vpop.trf.xlu0
      %v2615 = vpop.trf.xlu0
      %v2616 = vpop.trf.xlu0
      %v2617 = vpop.trf.xlu0
      %2618 = vxpose.xlu0.b32.start [1/16] %v2521, 128
      %2619 = vxpose.xlu0.b32.cont [2/16] 0.0, 128
      %2620 = vxpose.xlu0.b32.cont [3/16] 0.0, 128
      %2621 = vxpose.xlu0.b32.cont [4/16] 0.0, 128
      %2622 = vxpose.xlu0.b32.cont [5/16] 0.0, 128
      %2623 = vxpose.xlu0.b32.cont [6/16] 0.0, 128
      %2624 = vxpose.xlu0.b32.cont [7/16] 0.0, 128
      %2625 = vxpose.xlu0.b32.cont [8/16] 0.0, 128
      %2626 = vxpose.xlu0.b32.cont [9/16] 0.0, 128
      %2627 = vxpose.xlu0.b32.cont [10/16] 0.0, 128
      %2628 = vxpose.xlu0.b32.cont [11/16] 0.0, 128
      %2629 = vxpose.xlu0.b32.cont [12/16] 0.0, 128
      %2630 = vxpose.xlu0.b32.cont [13/16] 0.0, 128
      %2631 = vxpose.xlu0.b32.cont [14/16] 0.0, 128
      %2632 = vxpose.xlu0.b32.cont [15/16] 0.0, 128
      %2633 = vxpose.xlu0.b32.end [16/16] 0.0, 128
      %v2634 = vpop.trf.xlu0
      %v2635 = vpop.trf.xlu0
      %v2636 = vpop.trf.xlu0
      %v2637 = vpop.trf.xlu0
      %v2638 = vpop.trf.xlu0
      %v2639 = vpop.trf.xlu0
      %v2640 = vpop.trf.xlu0
      %v2641 = vpop.trf.xlu0
      %v2642 = vpop.trf.xlu0
      %v2643 = vpop.trf.xlu0
      %v2644 = vpop.trf.xlu0
      %v2645 = vpop.trf.xlu0
      %v2646 = vpop.trf.xlu0
      %v2647 = vpop.trf.xlu0
      %v2648 = vpop.trf.xlu0
      %v2649 = vpop.trf.xlu0
      %2650 = vxpose.xlu0.b32.start [1/16] %v2551, 128
      %2651 = vxpose.xlu0.b32.cont [2/16] 0.0, 128
      %2652 = vxpose.xlu0.b32.cont [3/16] 0.0, 128
      %2653 = vxpose.xlu0.b32.cont [4/16] 0.0, 128
      %2654 = vxpose.xlu0.b32.cont [5/16] 0.0, 128
      %2655 = vxpose.xlu0.b32.cont [6/16] 0.0, 128
      %2656 = vxpose.xlu0.b32.cont [7/16] 0.0, 128
      %2657 = vxpose.xlu0.b32.cont [8/16] 0.0, 128
      %2658 = vxpose.xlu0.b32.cont [9/16] 0.0, 128
      %2659 = vxpose.xlu0.b32.cont [10/16] 0.0, 128
      %2660 = vxpose.xlu0.b32.cont [11/16] 0.0, 128
      %2661 = vxpose.xlu0.b32.cont [12/16] 0.0, 128
      %2662 = vxpose.xlu0.b32.cont [13/16] 0.0, 128
      %2663 = vxpose.xlu0.b32.cont [14/16] 0.0, 128
      %2664 = vxpose.xlu0.b32.cont [15/16] 0.0, 128
      %2665 = vxpose.xlu0.b32.end [16/16] 0.0, 128
      %v2666 = vpop.trf.xlu0
      %v2667 = vpop.trf.xlu0
      %v2668 = vpop.trf.xlu0
      %v2669 = vpop.trf.xlu0
      %v2670 = vpop.trf.xlu0
      %v2671 = vpop.trf.xlu0
      %v2672 = vpop.trf.xlu0
      %v2673 = vpop.trf.xlu0
      %v2674 = vpop.trf.xlu0
      %v2675 = vpop.trf.xlu0
      %v2676 = vpop.trf.xlu0
      %v2677 = vpop.trf.xlu0
      %v2678 = vpop.trf.xlu0
      %v2679 = vpop.trf.xlu0
      %v2680 = vpop.trf.xlu0
      %v2681 = vpop.trf.xlu0
      %v2682 = vrot.slane %v2634, 4
      %vm2683 = vcmask 1047556
      %v2684 = vsel %vm2683, %v2682, %v2570
      %v2685 = vrot.slane %v2570, 4
      %v2686 = vsel %vm2683, %v2634, %v2685
      %v2688 = vunpack.c.l.s4 1983009808
      %v2689 = vunpack.c.0.s8 %v2688
      %v2690 = vperm.slane %v2684, %v2689
      %v2692 = vunpack.c.l.s4 1983009808
      %v2693 = vunpack.c.0.s8 %v2692
      %v2694 = vperm.slane %v2686, %v2693
      %v2695 = vrot.slane %v2666, 4
      %v2696 = vsel %vm2683, %v2695, %v2602
      %v2697 = vrot.slane %v2602, 4
      %v2698 = vsel %vm2683, %v2666, %v2697
      %v2700 = vunpack.c.l.s4 1983009808
      %v2701 = vunpack.c.0.s8 %v2700
      %v2702 = vperm.slane %v2696, %v2701
      %v2704 = vunpack.c.l.s4 1983009808
      %v2705 = vunpack.c.0.s8 %v2704
      %v2706 = vperm.slane %v2698, %v2705
      %v2707 = vrot.slane %v2702, 4
      %v2708 = vsel %vm2683, %v2707, %v2690
      %v2709 = vrot.slane %v2690, 4
      %v2710 = vsel %vm2683, %v2702, %v2709
      %v2712 = vunpack.c.l.s4 1934713408
      %v2713 = vunpack.c.0.s8 %v2712
      %v2714 = vperm.slane %v2708, %v2713
      %v2716 = vunpack.c.l.s4 1934713408
      %v2717 = vunpack.c.0.s8 %v2716
      %v2718 = vperm.slane %v2710, %v2717
      %v2719 = vrot.slane %v2706, 4
      %v2720 = vsel %vm2683, %v2719, %v2694
      %v2721 = vrot.slane %v2694, 4
      %v2722 = vsel %vm2683, %v2706, %v2721
      %v2724 = vunpack.c.l.s4 1934713408
      %v2725 = vunpack.c.0.s8 %v2724
      %v2726 = vperm.slane %v2720, %v2725
      %v2728 = vunpack.c.l.s4 1934713408
      %v2729 = vunpack.c.0.s8 %v2728
      %v2730 = vperm.slane %v2722, %v2729
      %v2731 = vrot.slane %v2714, 4
      %v2732 = vsel %vm2683, 0.0, %v2731
      %v2733 = vrot.slane %v2718, 4
      %v2734 = vsel %vm2683, 0.0, %v2733
      %v2735 = vrot.slane %v2726, 4
      %v2736 = vsel %vm2683, 0.0, %v2735
      %v2737 = vrot.slane %v2730, 4
      %v2738 = vsel %vm2683, 0.0, %v2737
      %v2739 = vrot.slane %v2635, 4
      %v2740 = vsel %vm2683, %v2739, %v2571
      %v2741 = vrot.slane %v2571, 4
      %v2742 = vsel %vm2683, %v2635, %v2741
      %v2744 = vunpack.c.l.s4 1983009808
      %v2745 = vunpack.c.0.s8 %v2744
      %v2746 = vperm.slane %v2740, %v2745
      %v2748 = vunpack.c.l.s4 1983009808
      %v2749 = vunpack.c.0.s8 %v2748
      %v2750 = vperm.slane %v2742, %v2749
      %v2751 = vrot.slane %v2667, 4
      %v2752 = vsel %vm2683, %v2751, %v2603
      %v2753 = vrot.slane %v2603, 4
      %v2754 = vsel %vm2683, %v2667, %v2753
      %v2756 = vunpack.c.l.s4 1983009808
      %v2757 = vunpack.c.0.s8 %v2756
      %v2758 = vperm.slane %v2752, %v2757
      %v2760 = vunpack.c.l.s4 1983009808
      %v2761 = vunpack.c.0.s8 %v2760
      %v2762 = vperm.slane %v2754, %v2761
      %v2763 = vrot.slane %v2758, 4
      %v2764 = vsel %vm2683, %v2763, %v2746
      %v2765 = vrot.slane %v2746, 4
      %v2766 = vsel %vm2683, %v2758, %v2765
      %v2768 = vunpack.c.l.s4 1934713408
      %v2769 = vunpack.c.0.s8 %v2768
      %v2770 = vperm.slane %v2764, %v2769
      %v2772 = vunpack.c.l.s4 1934713408
      %v2773 = vunpack.c.0.s8 %v2772
      %v2774 = vperm.slane %v2766, %v2773
      %v2775 = vrot.slane %v2762, 4
      %v2776 = vsel %vm2683, %v2775, %v2750
      %v2777 = vrot.slane %v2750, 4
      %v2778 = vsel %vm2683, %v2762, %v2777
      %v2780 = vunpack.c.l.s4 1934713408
      %v2781 = vunpack.c.0.s8 %v2780
      %v2782 = vperm.slane %v2776, %v2781
      %v2784 = vunpack.c.l.s4 1934713408
      %v2785 = vunpack.c.0.s8 %v2784
      %v2786 = vperm.slane %v2778, %v2785
      %v2787 = vrot.slane %v2770, 4
      %v2788 = vsel %vm2683, 0.0, %v2787
      %v2789 = vrot.slane %v2774, 4
      %v2790 = vsel %vm2683, 0.0, %v2789
      %v2791 = vrot.slane %v2782, 4
      %v2792 = vsel %vm2683, 0.0, %v2791
      %v2793 = vrot.slane %v2786, 4
      %v2794 = vsel %vm2683, 0.0, %v2793
      %v2795 = vrot.slane %v2636, 4
      %v2796 = vsel %vm2683, %v2795, %v2572
      %v2797 = vrot.slane %v2572, 4
      %v2798 = vsel %vm2683, %v2636, %v2797
      %v2800 = vunpack.c.l.s4 1983009808
      %v2801 = vunpack.c.0.s8 %v2800
      %v2802 = vperm.slane %v2796, %v2801
      %v2804 = vunpack.c.l.s4 1983009808
      %v2805 = vunpack.c.0.s8 %v2804
      %v2806 = vperm.slane %v2798, %v2805
      %v2807 = vrot.slane %v2668, 4
      %v2808 = vsel %vm2683, %v2807, %v2604
      %v2809 = vrot.slane %v2604, 4
      %v2810 = vsel %vm2683, %v2668, %v2809
      %v2812 = vunpack.c.l.s4 1983009808
      %v2813 = vunpack.c.0.s8 %v2812
      %v2814 = vperm.slane %v2808, %v2813
      %v2816 = vunpack.c.l.s4 1983009808
      %v2817 = vunpack.c.0.s8 %v2816
      %v2818 = vperm.slane %v2810, %v2817
      %v2819 = vrot.slane %v2814, 4
      %v2820 = vsel %vm2683, %v2819, %v2802
      %v2821 = vrot.slane %v2802, 4
      %v2822 = vsel %vm2683, %v2814, %v2821
      %v2824 = vunpack.c.l.s4 1934713408
      %v2825 = vunpack.c.0.s8 %v2824
      %v2826 = vperm.slane %v2820, %v2825
      %v2828 = vunpack.c.l.s4 1934713408
      %v2829 = vunpack.c.0.s8 %v2828
      %v2830 = vperm.slane %v2822, %v2829
      %v2831 = vrot.slane %v2818, 4
      %v2832 = vsel %vm2683, %v2831, %v2806
      %v2833 = vrot.slane %v2806, 4
      %v2834 = vsel %vm2683, %v2818, %v2833
      %v2836 = vunpack.c.l.s4 1934713408
      %v2837 = vunpack.c.0.s8 %v2836
      %v2838 = vperm.slane %v2832, %v2837
      %v2840 = vunpack.c.l.s4 1934713408
      %v2841 = vunpack.c.0.s8 %v2840
      %v2842 = vperm.slane %v2834, %v2841
      %v2843 = vrot.slane %v2826, 4
      %v2844 = vsel %vm2683, 0.0, %v2843
      %v2845 = vrot.slane %v2830, 4
      %v2846 = vsel %vm2683, 0.0, %v2845
      %v2847 = vrot.slane %v2838, 4
      %v2848 = vsel %vm2683, 0.0, %v2847
      %v2849 = vrot.slane %v2842, 4
      %v2850 = vsel %vm2683, 0.0, %v2849
      %v2851 = vsel %vm2683, %v2733, %v2714
      %v2853 = vunpack.c.l.s4 1983009808
      %v2854 = vunpack.c.0.s8 %v2853
      %v2855 = vperm.slane %v2851, %v2854
      %v2856 = vrot.slane %v2734, 4
      %v2857 = vsel %vm2683, %v2856, %v2732
      %v2859 = vunpack.c.l.s4 1983009808
      %v2860 = vunpack.c.0.s8 %v2859
      %v2861 = vperm.slane %v2857, %v2860
      %v2862 = vsel %vm2683, %v2737, %v2726
      %v2864 = vunpack.c.l.s4 1983009808
      %v2865 = vunpack.c.0.s8 %v2864
      %v2866 = vperm.slane %v2862, %v2865
      %v2867 = vrot.slane %v2738, 4
      %v2868 = vsel %vm2683, %v2867, %v2736
      %v2870 = vunpack.c.l.s4 1983009808
      %v2871 = vunpack.c.0.s8 %v2870
      %v2872 = vperm.slane %v2868, %v2871
      %v2873 = vrot.slane %v2861, 4
      %v2874 = vsel %vm2683, %v2873, %v2855
      %v2875 = vrot.slane %v2855, 4
      %v2876 = vsel %vm2683, %v2861, %v2875
      %v2878 = vunpack.c.l.s4 1934713408
      %v2879 = vunpack.c.0.s8 %v2878
      %v2880 = vperm.slane %v2874, %v2879
      %v2882 = vunpack.c.l.s4 1934713408
      %v2883 = vunpack.c.0.s8 %v2882
      %v2884 = vperm.slane %v2876, %v2883
      %v2885 = vrot.slane %v2872, 4
      %v2886 = vsel %vm2683, %v2885, %v2866
      %v2887 = vrot.slane %v2866, 4
      %v2888 = vsel %vm2683, %v2872, %v2887
      %v2890 = vunpack.c.l.s4 1934713408
      %v2891 = vunpack.c.0.s8 %v2890
      %v2892 = vperm.slane %v2886, %v2891
      %v2894 = vunpack.c.l.s4 1934713408
      %v2895 = vunpack.c.0.s8 %v2894
      %v2896 = vperm.slane %v2888, %v2895
      %v2897 = vrot.slane %v2892, 4
      %v2898 = vsel %vm2683, %v2897, %v2880
      %v2899 = vrot.slane %v2880, 4
      %v2900 = vsel %vm2683, %v2892, %v2899
      %v2901 = vrot.slane %v2896, 4
      %v2902 = vsel %vm2683, %v2901, %v2884
      %v2903 = vrot.slane %v2884, 4
      %v2904 = vsel %vm2683, %v2896, %v2903
      %v2905 = vsel %vm2683, %v2789, %v2770
      %v2907 = vunpack.c.l.s4 1983009808
      %v2908 = vunpack.c.0.s8 %v2907
      %v2909 = vperm.slane %v2905, %v2908
      %v2910 = vrot.slane %v2790, 4
      %v2911 = vsel %vm2683, %v2910, %v2788
      %v2913 = vunpack.c.l.s4 1983009808
      %v2914 = vunpack.c.0.s8 %v2913
      %v2915 = vperm.slane %v2911, %v2914
      %v2916 = vsel %vm2683, %v2793, %v2782
      %v2918 = vunpack.c.l.s4 1983009808
      %v2919 = vunpack.c.0.s8 %v2918
      %v2920 = vperm.slane %v2916, %v2919
      %v2921 = vrot.slane %v2794, 4
      %v2922 = vsel %vm2683, %v2921, %v2792
      %v2924 = vunpack.c.l.s4 1983009808
      %v2925 = vunpack.c.0.s8 %v2924
      %v2926 = vperm.slane %v2922, %v2925
      %v2927 = vrot.slane %v2915, 4
      %v2928 = vsel %vm2683, %v2927, %v2909
      %v2929 = vrot.slane %v2909, 4
      %v2930 = vsel %vm2683, %v2915, %v2929
      %v2932 = vunpack.c.l.s4 1934713408
      %v2933 = vunpack.c.0.s8 %v2932
      %v2934 = vperm.slane %v2928, %v2933
      %v2936 = vunpack.c.l.s4 1934713408
      %v2937 = vunpack.c.0.s8 %v2936
      %v2938 = vperm.slane %v2930, %v2937
      %v2939 = vrot.slane %v2926, 4
      %v2940 = vsel %vm2683, %v2939, %v2920
      %v2941 = vrot.slane %v2920, 4
      %v2942 = vsel %vm2683, %v2926, %v2941
      %v2944 = vunpack.c.l.s4 1934713408
      %v2945 = vunpack.c.0.s8 %v2944
      %v2946 = vperm.slane %v2940, %v2945
      %v2948 = vunpack.c.l.s4 1934713408
      %v2949 = vunpack.c.0.s8 %v2948
      %v2950 = vperm.slane %v2942, %v2949
      %v2951 = vrot.slane %v2946, 4
      %v2952 = vsel %vm2683, %v2951, %v2934
      %v2953 = vrot.slane %v2934, 4
      %v2954 = vsel %vm2683, %v2946, %v2953
      %v2955 = vrot.slane %v2950, 4
      %v2956 = vsel %vm2683, %v2955, %v2938
      %v2957 = vrot.slane %v2938, 4
      %v2958 = vsel %vm2683, %v2950, %v2957
      %v2959 = vsel %vm2683, %v2845, %v2826
      %v2961 = vunpack.c.l.s4 1983009808
      %v2962 = vunpack.c.0.s8 %v2961
      %v2963 = vperm.slane %v2959, %v2962
      %v2964 = vrot.slane %v2846, 4
      %v2965 = vsel %vm2683, %v2964, %v2844
      %v2967 = vunpack.c.l.s4 1983009808
      %v2968 = vunpack.c.0.s8 %v2967
      %v2969 = vperm.slane %v2965, %v2968
      %v2970 = vsel %vm2683, %v2849, %v2838
      %v2972 = vunpack.c.l.s4 1983009808
      %v2973 = vunpack.c.0.s8 %v2972
      %v2974 = vperm.slane %v2970, %v2973
      %v2975 = vrot.slane %v2850, 4
      %v2976 = vsel %vm2683, %v2975, %v2848
      %v2978 = vunpack.c.l.s4 1983009808
      %v2979 = vunpack.c.0.s8 %v2978
      %v2980 = vperm.slane %v2976, %v2979
      %v2981 = vrot.slane %v2969, 4
      %v2982 = vsel %vm2683, %v2981, %v2963
      %v2983 = vrot.slane %v2963, 4
      %v2984 = vsel %vm2683, %v2969, %v2983
      %v2986 = vunpack.c.l.s4 1934713408
      %v2987 = vunpack.c.0.s8 %v2986
      %v2988 = vperm.slane %v2982, %v2987
      %v2990 = vunpack.c.l.s4 1934713408
      %v2991 = vunpack.c.0.s8 %v2990
      %v2992 = vperm.slane %v2984, %v2991
      %v2993 = vrot.slane %v2980, 4
      %v2994 = vsel %vm2683, %v2993, %v2974
      %v2995 = vrot.slane %v2974, 4
      %v2996 = vsel %vm2683, %v2980, %v2995
      %v2998 = vunpack.c.l.s4 1934713408
      %v2999 = vunpack.c.0.s8 %v2998
      %v3000 = vperm.slane %v2994, %v2999
      %v3002 = vunpack.c.l.s4 1934713408
      %v3003 = vunpack.c.0.s8 %v3002
      %v3004 = vperm.slane %v2996, %v3003
      %v3005 = vrot.slane %v3000, 4
      %v3006 = vsel %vm2683, %v3005, %v2988
      %v3007 = vrot.slane %v2988, 4
      %v3008 = vsel %vm2683, %v3000, %v3007
      %v3009 = vrot.slane %v3004, 4
      %v3010 = vsel %vm2683, %v3009, %v2992
      %v3011 = vrot.slane %v2992, 4
      %v3012 = vsel %vm2683, %v3004, %v3011
      %3016 = vrot.lane.b32.xlu0 %v2900, 8
      %v3017 = vpop.permute.xlu0 %3016
      %3018 = vrot.lane.b32.xlu0 %v2954, 8
      %v3019 = vpop.permute.xlu0 %3018
      %3020 = vrot.lane.b32.xlu0 %v3008, 8
      %v3021 = vpop.permute.xlu0 %3020
      %3028 = vrot.lane.b32.xlu0 %v2902, 16
      %v3029 = vpop.permute.xlu0 %3028
      %3030 = vrot.lane.b32.xlu0 %v2956, 16
      %v3031 = vpop.permute.xlu0 %3030
      %3032 = vrot.lane.b32.xlu0 %v3010, 16
      %v3033 = vpop.permute.xlu0 %3032
      %3040 = vrot.lane.b32.xlu0 %v2904, 24
      %v3041 = vpop.permute.xlu0 %3040
      %3042 = vrot.lane.b32.xlu0 %v2958, 24
      %v3043 = vpop.permute.xlu0 %3042
      %3044 = vrot.lane.b32.xlu0 %v3012, 24
      %v3045 = vpop.permute.xlu0 %3044
      %v3049 = vsel %vm1307, %v2898, %v3017
      %v3050 = vsel %vm1307, %v2952, %v3019
      %v3051 = vsel %vm1307, %v3006, %v3021
      %vm3052 = vcmask 130048
      %v3053 = vsel %vm3052, %v3049, %v3029
      %v3054 = vsel %vm3052, %v3050, %v3031
      %v3055 = vsel %vm3052, %v3051, %v3033
      %v3056 = vsel %vm1493, %v3053, %v3041
      %v3057 = vsel %vm1493, %v3054, %v3043
      %v3058 = vsel %vm1493, %v3055, %v3045
      %v3059 = vpack.c.bf16 %v3056, %v3056
      %v3060 = vpack.c.bf16 %v3057, %v3057
      %v3061 = vpack.c.bf16 %v3058, %v3058
      %vm3062 = vcmask 257024
      %3063 = vst.msk [vmem:[%s248] sm:$0xf] %vm3062, %v3059
      %3064 = vst.msk [vmem:[%s248 + $0x4] sm:$0xf] %vm3062, %v3060
      %3065 = vst.msk [vmem:[%s248 + $0x8] sm:$0xf] %vm3062, %v3061
      %s3066 = smul.u32 3, %s19
      %p3067 = scmp.lt.s32.totalorder %s18, 1
      %s3068 = scalar_select %p3067, %s18, 1
      %p3069 = scmp.lt.s32.totalorder %s3066, 2
      %s3070 = scalar_select %p3069, %s3066, 2
      %s3071 = smul.addr %s3068, 3
      %s3072 = sadd.s32 %s3070, %s3071
      %s3073 = smul.addr %s3072, 4
      %s3074 = scalar_lea.vmem %s3, %s3073
      // Predicated region
      $region33: #{clip_vision_forward.16} parent=31 // pred_check
        %p3075 = pneg %p126
      $region34: #{clip_vision_forward.16} parent=31 // pred_check_branch
        %3077 = sbr.rel (%p3075) target = $region36
      $region35: #{clip_vision_forward.16} parent=31 // pred_region
        %s3078 = smul.u32 3, %s19
      $region36: #{clip_vision_forward.16} parent=31 // pred_fallthru
        _
    $region32: #{clip_vision_forward.16} parent=5 // pred_fallthru
      _
    %p3079 = scmp.le.s32.totalorder 2, %s9
    // Predicated region
    $region37: #{clip_vision_forward.16} parent=5 // pred_check
      %p3080 = pneg %p3079
    $region38: #{clip_vision_forward.16} parent=5 // pred_check_branch
      %3082 = sbr.rel (%p3080) target = $region40
    $region39: #{clip_vision_forward.16} parent=5 // pred_region
      %s3083 = ssub.s32 %s9, 2
      // Predicated region
      $region41: #{clip_vision_forward.16} parent=39 // pred_check
        %p3084 = pneg %p132
      $region42: #{clip_vision_forward.16} parent=39 // pred_check_branch
        %3086 = sbr.rel (%p3084) target = $region44
      $region43: #{clip_vision_forward.16} parent=39 // pred_region
        %s3087 = smul.u32 3, %s21
        %p3088 = scmp.lt.s32.totalorder %s20, 1
        %s3089 = scalar_select %p3088, %s20, 1
        %p3090 = scmp.lt.s32.totalorder %s3087, 2
        %s3091 = scalar_select %p3090, %s3087, 2
        %s3092 = smul.addr %s3089, 3
        %s3093 = sadd.s32 %s3091, %s3092
        %s3094 = smul.addr %s3093, 4
        %s3095 = scalar_lea.vmem %s3, %s3094
      $region44: #{clip_vision_forward.16} parent=39 // pred_fallthru
        _
    $region40: #{clip_vision_forward.16} parent=5 // pred_fallthru
      _
  $region6: #{clip_vision_forward.16} parent=0 // loop_footer
    %s13 = sadd.s32 1, %s9
  $region7: #{clip_vision_forward.16} parent=0 // loop_footer_branch
    %8 = sbr.rel target = $region3
  $region8: #{clip_vision_forward.16} parent=0 // loop_exit
    _

// kernel: clip_vision_forward.25
$region0: #{clip_vision_forward.25}
  #allocation0 [shape = 'u32[]', space=smem, size = 0x4, offset = 0x4, fixed_abs, tag = 'smem constant byte address 0x4 - core index']
  #allocation1 [shape = 'u32[72,128]{1,0:T(1,128)}', space=vmem, size = 0x9000, scoped, tag = 'internal scratch']
  %s0 = inlined_call_operand.vmem [shape: f32[2,32], index: 0, kind: input, shape index: {}]
  %s1 = inlined_call_operand.vmem [shape: f32[1,32], index: 1, kind: input, shape index: {}]
  %s2 = inlined_call_operand.vmem [shape: f32[1,32], index: 2, kind: input, shape index: {}]
  %s3 = inlined_call_operand.hbm [shape: f32[2,32], index: 3, kind: output, shape index: {}]
  %s4 = sld [smem:[#allocation0]]
  $region22: #{clip_vision_forward.25} parent=0
    _
  %s6 = ssub.s32 1, %s4
  %s7 = scalar_select 0, %s6, %s4
  $region1: #{clip_vision_forward.25} parent=0
    #allocation2 [shape = 'u8[1024]{0}', space=vmem, size = 0x400, scoped, tag = 'output window, operand 0, single buffered']
    #allocation3 [shape = 's32[1]{0}', space=sflag, size = 0x4, scoped, tag = 'scoped memory for clip_vision_forward.25']
    %8 = vsyncpa [#allocation3], 0
    // Predicated region
    $region2: #{clip_vision_forward.25} parent=1 // pred_check
      _
    $region3: #{clip_vision_forward.25} parent=1 // pred_check_branch
      %10 = sbr.rel (0) target = $region5
    $region4: #{clip_vision_forward.25} parent=1 // pred_region
      _
    $region5: #{clip_vision_forward.25} parent=1 // pred_fallthru
      _
    // Predicated region
    $region6: #{clip_vision_forward.25} parent=1 // pred_check
      _
    $region7: #{clip_vision_forward.25} parent=1 // pred_check_branch
      %12 = sbr.rel (0) target = $region9
    $region8: #{clip_vision_forward.25} parent=1 // pred_region
      _
    $region9: #{clip_vision_forward.25} parent=1 // pred_fallthru
      _
    // Predicated region
    $region10: #{clip_vision_forward.25} parent=1 // pred_check
      _
    $region11: #{clip_vision_forward.25} parent=1 // pred_check_branch
      %14 = sbr.rel (0) target = $region13
    $region12: #{clip_vision_forward.25} parent=1 // pred_region
      _
    $region13: #{clip_vision_forward.25} parent=1 // pred_fallthru
      _
    %v15 = vld [vmem:[%s0] sm:$0x3]
    %vm16 = vcmask 254976
    %v17 = vsel %vm16, %v15, 0.0
    %18 = vadd.xlane.f32.xlu0 %v17
    %v19 = vpop.xlane.xlu0 %18
    %v20 = vrcp.pop 32.0
    %v21 = vmul.f32 32.0, %v20
    %v22 = vsub.f32 1.0, %v21
    %v23 = vmul.f32 %v20, %v22
    %v24 = vadd.f32 %v20, %v23
    %vm25 = vweird.f32 %v20
    %v26 = vsel %vm25, %v20, %v24
    %v27 = vmul.f32 %v19, %v26
    %v28 = vsub.f32 %v15, %v27
    %v29 = vmul.f32 %v28, %v28
    %v30 = vsel %vm16, %v29, 0.0
    %31 = vadd.xlane.f32.xlu0 %v30
    %v32 = vpop.xlane.xlu0 %31
    %v33 = vmul.f32 %v32, %v26
    %v34 = vadd.f32 %v33, 1e-05
    %v35 = vrsqrt.pop %v34
    %v36 = vmul.f32 %v35, %v34
    %v37 = vmul.f32 %v36, %v35
    %v38 = vmul.f32 0.5, %v37
    %v39 = vsub.f32 1.5, %v38
    %v40 = vmul.f32 %v35, %v39
    %vm41 = vweird.f32 %v34
    %vm42 = vweird.f32 %v35
    %vm43 = vmor %vm41, %vm42
    %v44 = vsel %vm43, %v35, %v40
    %v45 = vmul.f32 %v28, %v44
    %v46 = vld [vmem:[%s1] sm:$0x1]
    %v48 = vperm.slane %v46, 0
    %v50 = vmul.f32 %v45, %v48
    %v51 = vld [vmem:[%s2] sm:$0x1]
    %v53 = vperm.slane %v51, 0
    %v55 = vadd.f32 %v50, %v53
    %56 = vst.msk [vmem:[#allocation2] sm:$0x3] %vm16, %v55
    // Predicated region
    $region14: #{clip_vision_forward.25} parent=1 // pred_check
      _
    $region15: #{clip_vision_forward.25} parent=1 // pred_check_branch
      %58 = sbr.rel (0) target = $region17
    $region16: #{clip_vision_forward.25} parent=1 // pred_region
      %60 = vsyncadd [#allocation3], 0
      %s62 = sshll.u32 [#allocation2], 4
      %s63 = int_to_ptr.vmem [resolvable:$true] %s62
      %s64 = sshll.u32 %s3, 4
      %s65 = int_to_ptr.hbm [resolvable:$true] %s64
      %67 = dma.vmem_to_hbm [thread:$0]  %s63, 32, %s65, [#allocation3]
    $region17: #{clip_vision_forward.25} parent=1 // pred_fallthru
      _
    // Predicated region
    $region18: #{clip_vision_forward.25} parent=1 // pred_check
      _
    $region19: #{clip_vision_forward.25} parent=1 // pred_check_branch
      %69 = sbr.rel (0) target = $region21
    $region20: #{clip_vision_forward.25} parent=1 // pred_region
      %71 = dma.done [#allocation3], 32
    $region21: #{clip_vision_forward.25} parent=1 // pred_fallthru
      _
    %72 = vsyncpa [#allocation3], 1

</llo_original>
